<compile_context>
chip_gen: v7x
topology: tpu7x:2x2x1
jax: 0.10.0
libtpu: 0.0.40
codegen_flags: <defaults>
</compile_context>

<pallas_src>
import jax
import jax.numpy as jnp
from jax import lax
from jax.experimental import pallas as pl
from jax.experimental.pallas import tpu as pltpu

LANE = 128


def _round_up(v, m):
    return ((v + m - 1) // m) * m


def _bn_fold(gamma, beta, mean, var, eps=1e-5):
    scale = gamma / jnp.sqrt(var + eps)
    shift = beta - mean * scale
    return scale.reshape(1, -1).astype(jnp.float32), shift.reshape(1, -1).astype(jnp.float32)


# --------------------------- fused Pallas forward --------------------------- #

def bottleneck_forward_nhwc(x, params, stride=1, dilation=1):
    """Fused Bottleneck forward. x: (N, H, W, Cin) float; returns (N, H, W, cout) bf16."""
    w1, bn1, w2_hwio, bn2, w3, bn3 = params
    N, H, W, Cin = x.shape
    planes = w1.shape[1]
    cout = w3.shape[1]
    d = int(dilation)
    assert stride == 1 and Cin == cout, "downsample=None requires stride=1 and Cin==cout"

    Cp = _round_up(Cin, LANE)      # padded identity / output channels (Cin == cout)
    Pp = _round_up(planes, LANE)   # padded bottleneck width

    s1, b1 = _bn_fold(*bn1)
    s2, b2 = _bn_fold(*bn2)
    s3, b3 = _bn_fold(*bn3)

    # ---- channel-pad + bf16 cast (weights & activations); scale/shift stay f32 ----
    xq = jnp.pad(x.astype(jnp.bfloat16), ((0, 0), (0, 0), (0, 0), (0, Cp - Cin)))
    w1q = jnp.pad(w1.astype(jnp.bfloat16), ((0, Cp - Cin), (0, Pp - planes)))
    w2q = jnp.pad(w2_hwio.astype(jnp.bfloat16).reshape(9, planes, planes),
                  ((0, 0), (0, Pp - planes), (0, Pp - planes)))
    w3q = jnp.pad(w3.astype(jnp.bfloat16), ((0, Pp - planes), (0, Cp - cout)))
    s1p = jnp.pad(s1, ((0, 0), (0, Pp - planes)))
    b1p = jnp.pad(b1, ((0, 0), (0, Pp - planes)))
    s2p = jnp.pad(s2, ((0, 0), (0, Pp - planes)))
    b2p = jnp.pad(b2, ((0, 0), (0, Pp - planes)))
    s3p = jnp.pad(s3, ((0, 0), (0, Cp - cout)))
    b3p = jnp.pad(b3, ((0, 0), (0, Cp - cout)))

    P = H * W  # rows per image (the matmul M dimension)

    def kernel(x_ref, w1_ref, s1_ref, b1_ref, w2_ref, s2_ref, b2_ref,
               w3_ref, s3_ref, b3_ref, o_ref, h1pad_ref):
        xb = x_ref[0]                              # (H, W, Cp) bf16
        x2d = xb.reshape(P, Cp)

        # ---- conv1 (1x1 as matmul) + bn1 + relu -> bf16 ----
        h1 = jnp.dot(x2d, w1_ref[...], preferred_element_type=jnp.float32)
        h1 = jnp.maximum(h1 * s1_ref[...] + b1_ref[...], 0.0).astype(jnp.bfloat16)

        # ---- zero-padded spatial halo for the 3x3 conv (VMEM scratch) ----
        h1pad_ref[...] = jnp.zeros_like(h1pad_ref)
        h1pad_ref[pl.ds(d, H), pl.ds(d, W), :] = h1.reshape(H, W, Pp)

        # ---- conv2 (3x3, dilation d, padding d) as 9 shifted matmuls + bn2 + relu ----
        acc = jnp.zeros((P, Pp), jnp.float32)
        for t in range(9):                         # static unroll (LLO visibility)
            ky, kx = t // 3, t % 3
            tap = h1pad_ref[pl.ds(ky * d, H), pl.ds(kx * d, W), :]
            acc = acc + jnp.dot(tap.reshape(P, Pp), w2_ref[t],
                                preferred_element_type=jnp.float32)
        h2 = jnp.maximum(acc * s2_ref[...] + b2_ref[...], 0.0).astype(jnp.bfloat16)

        # ---- conv3 (1x1) + bn3 + residual add + relu ----
        h3 = jnp.dot(h2, w3_ref[...], preferred_element_type=jnp.float32)
        h3 = h3 * s3_ref[...] + b3_ref[...] + x2d.astype(jnp.float32)
        o_ref[0] = jnp.maximum(h3, 0.0).astype(o_ref.dtype).reshape(H, W, Cp)

    # advisory cost estimate (helps XLA schedule surrounding ops)
    flops = 2 * N * P * (Cp * Pp + 9 * Pp * Pp + Pp * Cp)
    bytes_accessed = int(
        xq.size * 2 + N * P * Cp * 2
        + w1q.size * 2 + w2q.size * 2 + w3q.size * 2
        + (s1p.size + b1p.size + s2p.size + b2p.size + s3p.size + b3p.size) * 4)

    out_p = pl.pallas_call(
        kernel,
        out_shape=jax.ShapeDtypeStruct((N, H, W, Cp), jnp.bfloat16),
        grid_spec=pltpu.PrefetchScalarGridSpec(
            num_scalar_prefetch=0,
            grid=(N,),
            in_specs=[
                pl.BlockSpec((1, H, W, Cp), lambda n: (n, 0, 0, 0)),   # x (one image)
                pl.BlockSpec((Cp, Pp), lambda n: (0, 0)),              # w1
                pl.BlockSpec((1, Pp), lambda n: (0, 0)),               # s1
                pl.BlockSpec((1, Pp), lambda n: (0, 0)),               # b1
                pl.BlockSpec((9, Pp, Pp), lambda n: (0, 0, 0)),        # w2 (9 taps)
                pl.BlockSpec((1, Pp), lambda n: (0, 0)),               # s2
                pl.BlockSpec((1, Pp), lambda n: (0, 0)),               # b2
                pl.BlockSpec((Pp, Cp), lambda n: (0, 0)),              # w3
                pl.BlockSpec((1, Cp), lambda n: (0, 0)),               # s3
                pl.BlockSpec((1, Cp), lambda n: (0, 0)),               # b3
            ],
            out_specs=pl.BlockSpec((1, H, W, Cp), lambda n: (n, 0, 0, 0)),
            scratch_shapes=[pltpu.VMEM((H + 2 * d, W + 2 * d, Pp), jnp.bfloat16)],
        ),
        compiler_params=pltpu.CompilerParams(dimension_semantics=("parallel",)),
        cost_estimate=pl.CostEstimate(flops=flops, transcendentals=0,
                                      bytes_accessed=bytes_accessed),
    )(xq, w1q, s1p, b1p, w2q, s2p, b2p, w3q, s3p, b3p)

    return out_p[..., :cout]   # strip channel padding (still NHWC, bf16)


# ----------------------------- pure-JAX reference --------------------------- #

def bottleneck_reference_nhwc(x, params, stride=1, dilation=1):
    """lax.conv reference with the same bf16 quantization points as the kernel."""
    w1, bn1, w2_hwio, bn2, w3, bn3 = params
    d = int(dilation)
    dn = ("NHWC", "HWIO", "NHWC")
    Cin, planes = w1.shape
    cout = w3.shape[1]
    s1, b1 = _bn_fold(*bn1)
    s2, b2 = _bn_fold(*bn2)
    s3, b3 = _bn_fold(*bn3)

    xq = x.astype(jnp.bfloat16)
    h = lax.conv_general_dilated(xq, w1.astype(jnp.bfloat16).reshape(1, 1, Cin, planes),
                                 (1, 1), "VALID", dimension_numbers=dn,
                                 preferred_element_type=jnp.float32)
    h = jnp.maximum(h * s1 + b1, 0.0).astype(jnp.bfloat16)
    h = lax.conv_general_dilated(h, w2_hwio.astype(jnp.bfloat16), (stride, stride),
                                 [(d, d), (d, d)], rhs_dilation=(d, d),
                                 dimension_numbers=dn,
                                 preferred_element_type=jnp.float32)
    h = jnp.maximum(h * s2 + b2, 0.0).astype(jnp.bfloat16)
    h = lax.conv_general_dilated(h, w3.astype(jnp.bfloat16).reshape(1, 1, planes, cout),
                                 (1, 1), "VALID", dimension_numbers=dn,
                                 preferred_element_type=jnp.float32)
    h = h * s3 + b3 + xq.astype(jnp.float32)
    return jnp.maximum(h, 0.0).astype(jnp.bfloat16)


# ----------------------------------- main ----------------------------------- #

if __name__ == "__main__":
    key = jax.random.PRNGKey(0)
    ks = jax.random.split(key, 8)

    inplanes, planes = 16, 4          # expansion=4 -> cout = 16 = inplanes
    N, H, W = 2, 16, 16

    # PyTorch-style NCHW input; converted to NHWC ONCE at the boundary
    # (the Pallas path itself is NHWC end-to-end, no transposes inside).
    x_nchw = jax.random.normal(ks[0], (N, inplanes, H, W), jnp.float32)
    x = jnp.transpose(x_nchw, (0, 2, 3, 1))

    # Deterministic synthetic parameters (conv weights in matmul / HWIO layout)
    w1 = 0.1 * jax.random.normal(ks[1], (inplanes, planes), jnp.float32)
    w2 = 0.1 * jax.random.normal(ks[2], (3, 3, planes, planes), jnp.float32)   # HWIO
    w3 = 0.1 * jax.random.normal(ks[3], (planes, 4 * planes), jnp.float32)

    def bn_params(k, c):
        k1, k2, k3, k4 = jax.random.split(k, 4)
        gamma = jax.random.uniform(k1, (c,), minval=0.5, maxval=1.5)
        beta = 0.1 * jax.random.normal(k2, (c,))
        mean = 0.1 * jax.random.normal(k3, (c,))
        var = jax.random.uniform(k4, (c,), minval=0.5, maxval=1.5)
        return gamma, beta, mean, var

    bn1 = bn_params(ks[4], planes)
    bn2 = bn_params(ks[5], planes)
    bn3 = bn_params(ks[6], 4 * planes)
    params = (w1, bn1, w2, bn2, w3, bn3)

    fwd = jax.jit(bottleneck_forward_nhwc, static_argnames=("stride", "dilation"))

    for dil in (1, 2):   # exercise the in-kernel halo logic at two dilations
        out = jax.block_until_ready(fwd(x, params, stride=1, dilation=dil))
        ref = bottleneck_reference_nhwc(x, params, stride=1, dilation=dil)
        assert out.shape == (N, H, W, 4 * planes), out.shape
        err = float(jnp.max(jnp.abs(out.astype(jnp.float32) - ref.astype(jnp.float32))))
        assert err < 5e-2, err   # bf16 activations -> loosened tolerance

    print("KERNEL_OK")
</pallas_src>

<mosaic_0001>
module attributes {stable_mosaic.version = 11 : i64} {
  func.func @kernel(%arg0: i32, %arg1: memref<1x16x16x128xbf16, #tpu.memory_space<vmem>>, %arg2: memref<128x128xbf16, #tpu.memory_space<vmem>>, %arg3: memref<1x128xf32, #tpu.memory_space<vmem>>, %arg4: memref<1x128xf32, #tpu.memory_space<vmem>>, %arg5: memref<9x128x128xbf16, #tpu.memory_space<vmem>>, %arg6: memref<1x128xf32, #tpu.memory_space<vmem>>, %arg7: memref<1x128xf32, #tpu.memory_space<vmem>>, %arg8: memref<128x128xbf16, #tpu.memory_space<vmem>>, %arg9: memref<1x128xf32, #tpu.memory_space<vmem>>, %arg10: memref<1x128xf32, #tpu.memory_space<vmem>>, %arg11: memref<1x16x16x128xbf16, #tpu.memory_space<vmem>>, %arg12: memref<18x18x128xbf16, #tpu.memory_space<vmem>>) attributes {dimension_semantics = [#tpu.dimension_semantics<parallel>], iteration_bounds = array<i64: 2>, scalar_prefetch = 0 : i64, scratch_operands = 1 : i64, tpu.core_type = #tpu.core_type<tc>, window_params = [{transform_indices = @transform_0, window_bounds = array<i64: 1, 16, 16, 128>}, {pipeline_mode = #tpu.pipeline_mode<synchronous>, transform_indices = @transform_1, window_bounds = array<i64: 128, 128>}, {pipeline_mode = #tpu.pipeline_mode<synchronous>, transform_indices = @transform_2, window_bounds = array<i64: 1, 128>}, {pipeline_mode = #tpu.pipeline_mode<synchronous>, transform_indices = @transform_3, window_bounds = array<i64: 1, 128>}, {pipeline_mode = #tpu.pipeline_mode<synchronous>, transform_indices = @transform_4, window_bounds = array<i64: 9, 128, 128>}, {pipeline_mode = #tpu.pipeline_mode<synchronous>, transform_indices = @transform_5, window_bounds = array<i64: 1, 128>}, {pipeline_mode = #tpu.pipeline_mode<synchronous>, transform_indices = @transform_6, window_bounds = array<i64: 1, 128>}, {pipeline_mode = #tpu.pipeline_mode<synchronous>, transform_indices = @transform_7, window_bounds = array<i64: 128, 128>}, {pipeline_mode = #tpu.pipeline_mode<synchronous>, transform_indices = @transform_8, window_bounds = array<i64: 1, 128>}, {pipeline_mode = #tpu.pipeline_mode<synchronous>, transform_indices = @transform_9, window_bounds = array<i64: 1, 128>}, {transform_indices = @transform_10, window_bounds = array<i64: 1, 16, 16, 128>}]} {
    %c0 = arith.constant 0 : index
    %c0_0 = arith.constant 0 : index
    %c0_1 = arith.constant 0 : index
    %c0_2 = arith.constant 0 : index
    %0 = vector.load %arg1[%c0, %c0_0, %c0_1, %c0_2] : memref<1x16x16x128xbf16, #tpu.memory_space<vmem>>, vector<1x16x16x128xbf16>
    %1 = vector.shape_cast %0 : vector<1x16x16x128xbf16> to vector<16x16x128xbf16>
    %2 = vector.shape_cast %1 : vector<16x16x128xbf16> to vector<256x128xbf16>
    %c0_3 = arith.constant 0 : index
    %c0_4 = arith.constant 0 : index
    %3 = vector.load %arg2[%c0_3, %c0_4] : memref<128x128xbf16, #tpu.memory_space<vmem>>, vector<128x128xbf16>
    %cst = arith.constant dense<0.000000e+00> : vector<256x128xf32>
    %4 = tpu.matmul %2, %3, %cst {dimension_numbers = #tpu.dot_dimension_numbers<[1], [0], [0], [1], [0, 0, 1, 1], [], []>} : vector<256x128xbf16>, vector<128x128xbf16>, vector<256x128xf32> -> vector<256x128xf32>
    %c0_5 = arith.constant 0 : index
    %c0_6 = arith.constant 0 : index
    %5 = vector.load %arg3[%c0_5, %c0_6] : memref<1x128xf32, #tpu.memory_space<vmem>>, vector<1x128xf32>
    %6 = vector.broadcast %5 : vector<1x128xf32> to vector<256x128xf32>
    %7 = arith.mulf %4, %6 : vector<256x128xf32>
    %c0_7 = arith.constant 0 : index
    %c0_8 = arith.constant 0 : index
    %8 = vector.load %arg4[%c0_7, %c0_8] : memref<1x128xf32, #tpu.memory_space<vmem>>, vector<1x128xf32>
    %9 = vector.broadcast %8 : vector<1x128xf32> to vector<256x128xf32>
    %10 = arith.addf %7, %9 : vector<256x128xf32>
    %cst_9 = arith.constant 0.000000e+00 : f32
    %11 = vector.broadcast %cst_9 : f32 to vector<256x128xf32>
    %12 = arith.maximumf %10, %11 : vector<256x128xf32>
    %13 = arith.truncf %12 : vector<256x128xf32> to vector<256x128xbf16>
    %cst_10 = arith.constant 0.000000e+00 : bf16
    %14 = vector.broadcast %cst_10 : bf16 to vector<18x18x128xbf16>
    %c0_11 = arith.constant 0 : index
    %c0_12 = arith.constant 0 : index
    %c0_13 = arith.constant 0 : index
    %15 = vector.load %arg12[%c0_11, %c0_12, %c0_13] : memref<18x18x128xbf16, #tpu.memory_space<vmem>>, vector<18x18x128xbf16>
    tpu.vector_store %arg12[%c0_11, %c0_12, %c0_13], %14 {strides = array<i32>} : memref<18x18x128xbf16, #tpu.memory_space<vmem>>, vector<18x18x128xbf16>,
    %16 = vector.shape_cast %13 : vector<256x128xbf16> to vector<16x16x128xbf16>
    %c1 = arith.constant 1 : index
    %c1_14 = arith.constant 1 : index
    %c0_15 = arith.constant 0 : index
    %17 = vector.load %arg12[%c1, %c1_14, %c0_15] : memref<18x18x128xbf16, #tpu.memory_space<vmem>>, vector<16x16x128xbf16>
    tpu.vector_store %arg12[%c1, %c1_14, %c0_15], %16 {strides = array<i32>} : memref<18x18x128xbf16, #tpu.memory_space<vmem>>, vector<16x16x128xbf16>,
    %cst_16 = arith.constant 0.000000e+00 : f32
    %18 = vector.broadcast %cst_16 : f32 to vector<256x128xf32>
    %c0_17 = arith.constant 0 : index
    %c0_18 = arith.constant 0 : index
    %c0_19 = arith.constant 0 : index
    %19 = vector.load %arg12[%c0_17, %c0_18, %c0_19] : memref<18x18x128xbf16, #tpu.memory_space<vmem>>, vector<16x16x128xbf16>
    %20 = vector.shape_cast %19 : vector<16x16x128xbf16> to vector<256x128xbf16>
    %c0_20 = arith.constant 0 : index
    %c0_21 = arith.constant 0 : index
    %c0_22 = arith.constant 0 : index
    %21 = vector.load %arg5[%c0_20, %c0_21, %c0_22] : memref<9x128x128xbf16, #tpu.memory_space<vmem>>, vector<1x128x128xbf16>
    %22 = vector.shape_cast %21 : vector<1x128x128xbf16> to vector<128x128xbf16>
    %cst_23 = arith.constant dense<0.000000e+00> : vector<256x128xf32>
    %23 = tpu.matmul %20, %22, %cst_23 {dimension_numbers = #tpu.dot_dimension_numbers<[1], [0], [0], [1], [0, 0, 1, 1], [], []>} : vector<256x128xbf16>, vector<128x128xbf16>, vector<256x128xf32> -> vector<256x128xf32>
    %24 = arith.addf %18, %23 : vector<256x128xf32>
    %c0_24 = arith.constant 0 : index
    %c1_25 = arith.constant 1 : index
    %c0_26 = arith.constant 0 : index
    %25 = vector.load %arg12[%c0_24, %c1_25, %c0_26] : memref<18x18x128xbf16, #tpu.memory_space<vmem>>, vector<16x16x128xbf16>
    %26 = vector.shape_cast %25 : vector<16x16x128xbf16> to vector<256x128xbf16>
    %c1_27 = arith.constant 1 : index
    %c0_28 = arith.constant 0 : index
    %c0_29 = arith.constant 0 : index
    %27 = vector.load %arg5[%c1_27, %c0_28, %c0_29] : memref<9x128x128xbf16, #tpu.memory_space<vmem>>, vector<1x128x128xbf16>
    %28 = vector.shape_cast %27 : vector<1x128x128xbf16> to vector<128x128xbf16>
    %cst_30 = arith.constant dense<0.000000e+00> : vector<256x128xf32>
    %29 = tpu.matmul %26, %28, %cst_30 {dimension_numbers = #tpu.dot_dimension_numbers<[1], [0], [0], [1], [0, 0, 1, 1], [], []>} : vector<256x128xbf16>, vector<128x128xbf16>, vector<256x128xf32> -> vector<256x128xf32>
    %30 = arith.addf %24, %29 : vector<256x128xf32>
    %c0_31 = arith.constant 0 : index
    %c2 = arith.constant 2 : index
    %c0_32 = arith.constant 0 : index
    %31 = vector.load %arg12[%c0_31, %c2, %c0_32] : memref<18x18x128xbf16, #tpu.memory_space<vmem>>, vector<16x16x128xbf16>
    %32 = vector.shape_cast %31 : vector<16x16x128xbf16> to vector<256x128xbf16>
    %c2_33 = arith.constant 2 : index
    %c0_34 = arith.constant 0 : index
    %c0_35 = arith.constant 0 : index
    %33 = vector.load %arg5[%c2_33, %c0_34, %c0_35] : memref<9x128x128xbf16, #tpu.memory_space<vmem>>, vector<1x128x128xbf16>
    %34 = vector.shape_cast %33 : vector<1x128x128xbf16> to vector<128x128xbf16>
    %cst_36 = arith.constant dense<0.000000e+00> : vector<256x128xf32>
    %35 = tpu.matmul %32, %34, %cst_36 {dimension_numbers = #tpu.dot_dimension_numbers<[1], [0], [0], [1], [0, 0, 1, 1], [], []>} : vector<256x128xbf16>, vector<128x128xbf16>, vector<256x128xf32> -> vector<256x128xf32>
    %36 = arith.addf %30, %35 : vector<256x128xf32>
    %c1_37 = arith.constant 1 : index
    %c0_38 = arith.constant 0 : index
    %c0_39 = arith.constant 0 : index
    %37 = vector.load %arg12[%c1_37, %c0_38, %c0_39] : memref<18x18x128xbf16, #tpu.memory_space<vmem>>, vector<16x16x128xbf16>
    %38 = vector.shape_cast %37 : vector<16x16x128xbf16> to vector<256x128xbf16>
    %c3 = arith.constant 3 : index
    %c0_40 = arith.constant 0 : index
    %c0_41 = arith.constant 0 : index
    %39 = vector.load %arg5[%c3, %c0_40, %c0_41] : memref<9x128x128xbf16, #tpu.memory_space<vmem>>, vector<1x128x128xbf16>
    %40 = vector.shape_cast %39 : vector<1x128x128xbf16> to vector<128x128xbf16>
    %cst_42 = arith.constant dense<0.000000e+00> : vector<256x128xf32>
    %41 = tpu.matmul %38, %40, %cst_42 {dimension_numbers = #tpu.dot_dimension_numbers<[1], [0], [0], [1], [0, 0, 1, 1], [], []>} : vector<256x128xbf16>, vector<128x128xbf16>, vector<256x128xf32> -> vector<256x128xf32>
    %42 = arith.addf %36, %41 : vector<256x128xf32>
    %c1_43 = arith.constant 1 : index
    %c1_44 = arith.constant 1 : index
    %c0_45 = arith.constant 0 : index
    %43 = vector.load %arg12[%c1_43, %c1_44, %c0_45] : memref<18x18x128xbf16, #tpu.memory_space<vmem>>, vector<16x16x128xbf16>
    %44 = vector.shape_cast %43 : vector<16x16x128xbf16> to vector<256x128xbf16>
    %c4 = arith.constant 4 : index
    %c0_46 = arith.constant 0 : index
    %c0_47 = arith.constant 0 : index
    %45 = vector.load %arg5[%c4, %c0_46, %c0_47] : memref<9x128x128xbf16, #tpu.memory_space<vmem>>, vector<1x128x128xbf16>
    %46 = vector.shape_cast %45 : vector<1x128x128xbf16> to vector<128x128xbf16>
    %cst_48 = arith.constant dense<0.000000e+00> : vector<256x128xf32>
    %47 = tpu.matmul %44, %46, %cst_48 {dimension_numbers = #tpu.dot_dimension_numbers<[1], [0], [0], [1], [0, 0, 1, 1], [], []>} : vector<256x128xbf16>, vector<128x128xbf16>, vector<256x128xf32> -> vector<256x128xf32>
    %48 = arith.addf %42, %47 : vector<256x128xf32>
    %c1_49 = arith.constant 1 : index
    %c2_50 = arith.constant 2 : index
    %c0_51 = arith.constant 0 : index
    %49 = vector.load %arg12[%c1_49, %c2_50, %c0_51] : memref<18x18x128xbf16, #tpu.memory_space<vmem>>, vector<16x16x128xbf16>
    %50 = vector.shape_cast %49 : vector<16x16x128xbf16> to vector<256x128xbf16>
    %c5 = arith.constant 5 : index
    %c0_52 = arith.constant 0 : index
    %c0_53 = arith.constant 0 : index
    %51 = vector.load %arg5[%c5, %c0_52, %c0_53] : memref<9x128x128xbf16, #tpu.memory_space<vmem>>, vector<1x128x128xbf16>
    %52 = vector.shape_cast %51 : vector<1x128x128xbf16> to vector<128x128xbf16>
    %cst_54 = arith.constant dense<0.000000e+00> : vector<256x128xf32>
    %53 = tpu.matmul %50, %52, %cst_54 {dimension_numbers = #tpu.dot_dimension_numbers<[1], [0], [0], [1], [0, 0, 1, 1], [], []>} : vector<256x128xbf16>, vector<128x128xbf16>, vector<256x128xf32> -> vector<256x128xf32>
    %54 = arith.addf %48, %53 : vector<256x128xf32>
    %c2_55 = arith.constant 2 : index
    %c0_56 = arith.constant 0 : index
    %c0_57 = arith.constant 0 : index
    %55 = vector.load %arg12[%c2_55, %c0_56, %c0_57] : memref<18x18x128xbf16, #tpu.memory_space<vmem>>, vector<16x16x128xbf16>
    %56 = vector.shape_cast %55 : vector<16x16x128xbf16> to vector<256x128xbf16>
    %c6 = arith.constant 6 : index
    %c0_58 = arith.constant 0 : index
    %c0_59 = arith.constant 0 : index
    %57 = vector.load %arg5[%c6, %c0_58, %c0_59] : memref<9x128x128xbf16, #tpu.memory_space<vmem>>, vector<1x128x128xbf16>
    %58 = vector.shape_cast %57 : vector<1x128x128xbf16> to vector<128x128xbf16>
    %cst_60 = arith.constant dense<0.000000e+00> : vector<256x128xf32>
    %59 = tpu.matmul %56, %58, %cst_60 {dimension_numbers = #tpu.dot_dimension_numbers<[1], [0], [0], [1], [0, 0, 1, 1], [], []>} : vector<256x128xbf16>, vector<128x128xbf16>, vector<256x128xf32> -> vector<256x128xf32>
    %60 = arith.addf %54, %59 : vector<256x128xf32>
    %c2_61 = arith.constant 2 : index
    %c1_62 = arith.constant 1 : index
    %c0_63 = arith.constant 0 : index
    %61 = vector.load %arg12[%c2_61, %c1_62, %c0_63] : memref<18x18x128xbf16, #tpu.memory_space<vmem>>, vector<16x16x128xbf16>
    %62 = vector.shape_cast %61 : vector<16x16x128xbf16> to vector<256x128xbf16>
    %c7 = arith.constant 7 : index
    %c0_64 = arith.constant 0 : index
    %c0_65 = arith.constant 0 : index
    %63 = vector.load %arg5[%c7, %c0_64, %c0_65] : memref<9x128x128xbf16, #tpu.memory_space<vmem>>, vector<1x128x128xbf16>
    %64 = vector.shape_cast %63 : vector<1x128x128xbf16> to vector<128x128xbf16>
    %cst_66 = arith.constant dense<0.000000e+00> : vector<256x128xf32>
    %65 = tpu.matmul %62, %64, %cst_66 {dimension_numbers = #tpu.dot_dimension_numbers<[1], [0], [0], [1], [0, 0, 1, 1], [], []>} : vector<256x128xbf16>, vector<128x128xbf16>, vector<256x128xf32> -> vector<256x128xf32>
    %66 = arith.addf %60, %65 : vector<256x128xf32>
    %c2_67 = arith.constant 2 : index
    %c2_68 = arith.constant 2 : index
    %c0_69 = arith.constant 0 : index
    %67 = vector.load %arg12[%c2_67, %c2_68, %c0_69] : memref<18x18x128xbf16, #tpu.memory_space<vmem>>, vector<16x16x128xbf16>
    %68 = vector.shape_cast %67 : vector<16x16x128xbf16> to vector<256x128xbf16>
    %c8 = arith.constant 8 : index
    %c0_70 = arith.constant 0 : index
    %c0_71 = arith.constant 0 : index
    %69 = vector.load %arg5[%c8, %c0_70, %c0_71] : memref<9x128x128xbf16, #tpu.memory_space<vmem>>, vector<1x128x128xbf16>
    %70 = vector.shape_cast %69 : vector<1x128x128xbf16> to vector<128x128xbf16>
    %cst_72 = arith.constant dense<0.000000e+00> : vector<256x128xf32>
    %71 = tpu.matmul %68, %70, %cst_72 {dimension_numbers = #tpu.dot_dimension_numbers<[1], [0], [0], [1], [0, 0, 1, 1], [], []>} : vector<256x128xbf16>, vector<128x128xbf16>, vector<256x128xf32> -> vector<256x128xf32>
    %72 = arith.addf %66, %71 : vector<256x128xf32>
    %c0_73 = arith.constant 0 : index
    %c0_74 = arith.constant 0 : index
    %73 = vector.load %arg6[%c0_73, %c0_74] : memref<1x128xf32, #tpu.memory_space<vmem>>, vector<1x128xf32>
    %74 = vector.broadcast %73 : vector<1x128xf32> to vector<256x128xf32>
    %75 = arith.mulf %72, %74 : vector<256x128xf32>
    %c0_75 = arith.constant 0 : index
    %c0_76 = arith.constant 0 : index
    %76 = vector.load %arg7[%c0_75, %c0_76] : memref<1x128xf32, #tpu.memory_space<vmem>>, vector<1x128xf32>
    %77 = vector.broadcast %76 : vector<1x128xf32> to vector<256x128xf32>
    %78 = arith.addf %75, %77 : vector<256x128xf32>
    %cst_77 = arith.constant 0.000000e+00 : f32
    %79 = vector.broadcast %cst_77 : f32 to vector<256x128xf32>
    %80 = arith.maximumf %78, %79 : vector<256x128xf32>
    %81 = arith.truncf %80 : vector<256x128xf32> to vector<256x128xbf16>
    %c0_78 = arith.constant 0 : index
    %c0_79 = arith.constant 0 : index
    %82 = vector.load %arg8[%c0_78, %c0_79] : memref<128x128xbf16, #tpu.memory_space<vmem>>, vector<128x128xbf16>
    %cst_80 = arith.constant dense<0.000000e+00> : vector<256x128xf32>
    %83 = tpu.matmul %81, %82, %cst_80 {dimension_numbers = #tpu.dot_dimension_numbers<[1], [0], [0], [1], [0, 0, 1, 1], [], []>} : vector<256x128xbf16>, vector<128x128xbf16>, vector<256x128xf32> -> vector<256x128xf32>
    %c0_81 = arith.constant 0 : index
    %c0_82 = arith.constant 0 : index
    %84 = vector.load %arg9[%c0_81, %c0_82] : memref<1x128xf32, #tpu.memory_space<vmem>>, vector<1x128xf32>
    %85 = vector.broadcast %84 : vector<1x128xf32> to vector<256x128xf32>
    %86 = arith.mulf %83, %85 : vector<256x128xf32>
    %c0_83 = arith.constant 0 : index
    %c0_84 = arith.constant 0 : index
    %87 = vector.load %arg10[%c0_83, %c0_84] : memref<1x128xf32, #tpu.memory_space<vmem>>, vector<1x128xf32>
    %88 = vector.broadcast %87 : vector<1x128xf32> to vector<256x128xf32>
    %89 = arith.addf %86, %88 : vector<256x128xf32>
    %90 = arith.extf %2 : vector<256x128xbf16> to vector<256x128xf32>
    %91 = arith.addf %89, %90 : vector<256x128xf32>
    %cst_85 = arith.constant 0.000000e+00 : f32
    %92 = vector.broadcast %cst_85 : f32 to vector<256x128xf32>
    %93 = arith.maximumf %91, %92 : vector<256x128xf32>
    %94 = arith.truncf %93 : vector<256x128xf32> to vector<256x128xbf16>
    %95 = vector.shape_cast %94 : vector<256x128xbf16> to vector<16x16x128xbf16>
    %c0_86 = arith.constant 0 : index
    %c0_87 = arith.constant 0 : index
    %c0_88 = arith.constant 0 : index
    %c0_89 = arith.constant 0 : index
    %96 = vector.load %arg11[%c0_86, %c0_87, %c0_88, %c0_89] : memref<1x16x16x128xbf16, #tpu.memory_space<vmem>>, vector<1x16x16x128xbf16>
    %97 = vector.shape_cast %96 : vector<1x16x16x128xbf16> to vector<16x16x128xbf16>
    %98 = vector.shape_cast %95 : vector<16x16x128xbf16> to vector<1x16x16x128xbf16>
    tpu.vector_store %arg11[%c0_86, %c0_87, %c0_88, %c0_89], %98 {strides = array<i32>} : memref<1x16x16x128xbf16, #tpu.memory_space<vmem>>, vector<1x16x16x128xbf16>,
    return
  }
  func.func @transform_0(%arg0: i32) -> (i32, i32, i32, i32) {
    %c0_i32 = arith.constant 0 : i32
    %c0_i32_0 = arith.constant 0 : i32
    %c0_i32_1 = arith.constant 0 : i32
    %c0_i32_2 = arith.constant 0 : i32
    return %arg0, %c0_i32, %c0_i32_0, %c0_i32_1 : i32, i32, i32, i32
  }
  func.func @transform_1(%arg0: i32) -> (i32, i32) {
    %c0_i32 = arith.constant 0 : i32
    %c0_i32_0 = arith.constant 0 : i32
    %c0_i32_1 = arith.constant 0 : i32
    return %c0_i32, %c0_i32_0 : i32, i32
  }
  func.func @transform_2(%arg0: i32) -> (i32, i32) {
    %c0_i32 = arith.constant 0 : i32
    %c0_i32_0 = arith.constant 0 : i32
    %c0_i32_1 = arith.constant 0 : i32
    return %c0_i32, %c0_i32_0 : i32, i32
  }
  func.func @transform_3(%arg0: i32) -> (i32, i32) {
    %c0_i32 = arith.constant 0 : i32
    %c0_i32_0 = arith.constant 0 : i32
    %c0_i32_1 = arith.constant 0 : i32
    return %c0_i32, %c0_i32_0 : i32, i32
  }
  func.func @transform_4(%arg0: i32) -> (i32, i32, i32) {
    %c0_i32 = arith.constant 0 : i32
    %c0_i32_0 = arith.constant 0 : i32
    %c0_i32_1 = arith.constant 0 : i32
    %c0_i32_2 = arith.constant 0 : i32
    return %c0_i32, %c0_i32_0, %c0_i32_1 : i32, i32, i32
  }
  func.func @transform_5(%arg0: i32) -> (i32, i32) {
    %c0_i32 = arith.constant 0 : i32
    %c0_i32_0 = arith.constant 0 : i32
    %c0_i32_1 = arith.constant 0 : i32
    return %c0_i32, %c0_i32_0 : i32, i32
  }
  func.func @transform_6(%arg0: i32) -> (i32, i32) {
    %c0_i32 = arith.constant 0 : i32
    %c0_i32_0 = arith.constant 0 : i32
    %c0_i32_1 = arith.constant 0 : i32
    return %c0_i32, %c0_i32_0 : i32, i32
  }
  func.func @transform_7(%arg0: i32) -> (i32, i32) {
    %c0_i32 = arith.constant 0 : i32
    %c0_i32_0 = arith.constant 0 : i32
    %c0_i32_1 = arith.constant 0 : i32
    return %c0_i32, %c0_i32_0 : i32, i32
  }
  func.func @transform_8(%arg0: i32) -> (i32, i32) {
    %c0_i32 = arith.constant 0 : i32
    %c0_i32_0 = arith.constant 0 : i32
    %c0_i32_1 = arith.constant 0 : i32
    return %c0_i32, %c0_i32_0 : i32, i32
  }
  func.func @transform_9(%arg0: i32) -> (i32, i32) {
    %c0_i32 = arith.constant 0 : i32
    %c0_i32_0 = arith.constant 0 : i32
    %c0_i32_1 = arith.constant 0 : i32
    return %c0_i32, %c0_i32_0 : i32, i32
  }
  func.func @transform_10(%arg0: i32) -> (i32, i32, i32, i32) {
    %c0_i32 = arith.constant 0 : i32
    %c0_i32_0 = arith.constant 0 : i32
    %c0_i32_1 = arith.constant 0 : i32
    %c0_i32_2 = arith.constant 0 : i32
    return %arg0, %c0_i32, %c0_i32_0, %c0_i32_1 : i32, i32, i32, i32
  }
}

</mosaic_0001>

<llo_original>
// kernel: bottleneck_forward_nhwc.1
$region0: #{bottleneck_forward_nhwc.1}
  #allocation0 [shape = 'u32[]', space=smem, size = 0x4, offset = 0x4, fixed_abs, tag = 'smem constant byte address 0x4 - core index']
  #allocation1 [shape = 'u32[144,128]{1,0:T(1,128)}', space=vmem, size = 0x12000, scoped, tag = 'internal scratch']
  #allocation2 [shape = 'bf16[18,18,128]{2,1,0:T(8,128)(2,1)}', space=vmem, size = 0x1b000, scoped, tag = 'scratch operand']
  %s0 = inlined_call_operand.vmem [shape: bf16[2,16,16,128], index: 0, kind: input, shape index: {}]
  %s1 = inlined_call_operand.vmem [shape: bf16[128,128], index: 1, kind: input, shape index: {}]
  %s2 = inlined_call_operand.vmem [shape: f32[1,128], index: 2, kind: input, shape index: {}]
  %s3 = inlined_call_operand.vmem [shape: f32[1,128], index: 3, kind: input, shape index: {}]
  %s4 = inlined_call_operand.vmem [shape: bf16[9,128,128], index: 4, kind: input, shape index: {}]
  %s5 = inlined_call_operand.vmem [shape: f32[1,128], index: 5, kind: input, shape index: {}]
  %s6 = inlined_call_operand.vmem [shape: f32[1,128], index: 6, kind: input, shape index: {}]
  %s7 = inlined_call_operand.vmem [shape: bf16[128,128], index: 7, kind: input, shape index: {}]
  %s8 = inlined_call_operand.vmem [shape: f32[1,128], index: 8, kind: input, shape index: {}]
  %s9 = inlined_call_operand.vmem [shape: f32[1,128], index: 9, kind: input, shape index: {}]
  %s10 = inlined_call_operand.hbm [shape: bf16[2,16,16,128], index: 10, kind: output, shape index: {}]
  %s11 = sld [smem:[#allocation0]]
  $region73: #{bottleneck_forward_nhwc.1} parent=0
    _
  %s13 = ssub.s32 1, %s11
  %s14 = scalar_select 0, %s13, %s11
  $region1: #{bottleneck_forward_nhwc.1} parent=0
    #allocation3 [shape = 'u8[131072]{0}', space=vmem, size = 0x20000, scoped, tag = 'output window, operand 0']
    #allocation4 [shape = 's32[2]{0}', space=sflag, size = 0x8, scoped, tag = 'scoped memory for bottleneck_forward_nhwc.1']
    %15 = vsyncpa [#allocation4], 0
    %s16 = scalar_lea.sflag [#allocation4], 1
    %17 = vsyncpa %s16, 0
    loop: start=0, step=1, limit=4
    $region2: #{bottleneck_forward_nhwc.1} parent=1 // loop_pre_header
      _
    $region3: #{bottleneck_forward_nhwc.1} parent=1 // loop_header
      %s19 = sphi 0, %s23
      %p20 = scmp.ge.s32.totalorder %s19, 4
      %s29 = sphi 0, %s31
      %s32 = sphi 0, %s29
      %s33 = sphi 0, %s32
      %s49 = sphi 0, %s33
      %s53 = sphi 0, %s53
      %s55 = sphi 0, %s53
      %s56 = sphi 0, %s55
      %s70 = sphi 0, %s56
      %s74 = sphi 0, %s74
      %s76 = sphi 0, %s74
      %s77 = sphi 0, %s76
      %s91 = sphi 0, %s77
      %s95 = sphi 0, %s95
      %s97 = sphi 0, %s95
      %s98 = sphi 0, %s97
      %s112 = sphi 0, %s98
      %s116 = sphi 0, %s116
      %s118 = sphi 0, %s116
      %s119 = sphi 0, %s118
      %s133 = sphi 0, %s119
      %s137 = sphi 0, %s137
      %s139 = sphi 0, %s137
      %s140 = sphi 0, %s139
      %s154 = sphi 0, %s140
      %s158 = sphi 0, %s158
      %s160 = sphi 0, %s158
      %s161 = sphi 0, %s160
      %s175 = sphi 0, %s161
      %s179 = sphi 0, %s179
      %s181 = sphi 0, %s179
      %s182 = sphi 0, %s181
      %s196 = sphi 0, %s182
      %s200 = sphi 0, %s200
      %s202 = sphi 0, %s200
      %s203 = sphi 0, %s202
      %s217 = sphi 0, %s203
      %s221 = sphi 0, %s221
      %s223 = sphi 0, %s221
      %s224 = sphi 0, %s223
      %s238 = sphi 0, %s224
      %s244 = sphi 0, %s246
      %s247 = sphi 0, %s244
      %s248 = sphi 0, %s247
      %s264 = sphi 0, %s248
    $region4: #{bottleneck_forward_nhwc.1} parent=1 // loop_header_branch
      %22 = sbr.rel (%p20) target = $region8
    $region5: #{bottleneck_forward_nhwc.1} parent=1 // loop_body
      %s24 = ssub.s32 %s19, 1
      %s25 = ssub.s32 %s19, 2
      %s26 = sadd.s32 %s19, 1
      %s27 = ssub.s32 %s19, %s26
      %p28 = scmp.eq.s32.totalorder %s27, 0
      %s30 = sadd.s32 %s29, 1
      %s31 = scalar_select %p28, %s29, %s30
      %p34 = pneg %p28
      %p35 = scmp.eq.s32.totalorder %s19, 1
      %p36 = por %p34, %p35
      %p37 = scmp.ne.s32.totalorder %s29, %s32
      %p38 = scmp.eq.s32.totalorder %s19, 0
      %p39 = por %p37, %p38
      %p40 = scmp.ne.s32.totalorder %s29, %s32
      %p41 = scmp.eq.s32.totalorder %s24, 1
      %p42 = por %p40, %p41
      %p43 = scmp.ne.s32.totalorder %s32, %s33
      %p44 = scmp.eq.s32.totalorder %s24, 0
      %p45 = por %p43, %p44
      %p46 = scmp.ne.s32.totalorder %s32, %s33
      %p47 = scmp.eq.s32.totalorder %s25, 1
      %p48 = por %p46, %p47
      %p50 = scmp.ne.s32.totalorder %s33, %s49
      %p51 = scmp.eq.s32.totalorder %s25, 0
      %p52 = por %p50, %p51
      %s54 = sadd.s32 %s53, 1
      %p57 = scmp.eq.s32.totalorder %s19, 1
      %p58 = scmp.ne.s32.totalorder %s53, %s55
      %p59 = scmp.eq.s32.totalorder %s19, 0
      %p60 = por %p58, %p59
      %p61 = scmp.ne.s32.totalorder %s53, %s55
      %p62 = scmp.eq.s32.totalorder %s24, 1
      %p63 = por %p61, %p62
      %p64 = scmp.ne.s32.totalorder %s55, %s56
      %p65 = scmp.eq.s32.totalorder %s24, 0
      %p66 = por %p64, %p65
      %p67 = scmp.ne.s32.totalorder %s55, %s56
      %p68 = scmp.eq.s32.totalorder %s25, 1
      %p69 = por %p67, %p68
      %p71 = scmp.ne.s32.totalorder %s56, %s70
      %p72 = scmp.eq.s32.totalorder %s25, 0
      %p73 = por %p71, %p72
      %s75 = sadd.s32 %s74, 1
      %p78 = scmp.eq.s32.totalorder %s19, 1
      %p79 = scmp.ne.s32.totalorder %s74, %s76
      %p80 = scmp.eq.s32.totalorder %s19, 0
      %p81 = por %p79, %p80
      %p82 = scmp.ne.s32.totalorder %s74, %s76
      %p83 = scmp.eq.s32.totalorder %s24, 1
      %p84 = por %p82, %p83
      %p85 = scmp.ne.s32.totalorder %s76, %s77
      %p86 = scmp.eq.s32.totalorder %s24, 0
      %p87 = por %p85, %p86
      %p88 = scmp.ne.s32.totalorder %s76, %s77
      %p89 = scmp.eq.s32.totalorder %s25, 1
      %p90 = por %p88, %p89
      %p92 = scmp.ne.s32.totalorder %s77, %s91
      %p93 = scmp.eq.s32.totalorder %s25, 0
      %p94 = por %p92, %p93
      %s96 = sadd.s32 %s95, 1
      %p99 = scmp.eq.s32.totalorder %s19, 1
      %p100 = scmp.ne.s32.totalorder %s95, %s97
      %p101 = scmp.eq.s32.totalorder %s19, 0
      %p102 = por %p100, %p101
      %p103 = scmp.ne.s32.totalorder %s95, %s97
      %p104 = scmp.eq.s32.totalorder %s24, 1
      %p105 = por %p103, %p104
      %p106 = scmp.ne.s32.totalorder %s97, %s98
      %p107 = scmp.eq.s32.totalorder %s24, 0
      %p108 = por %p106, %p107
      %p109 = scmp.ne.s32.totalorder %s97, %s98
      %p110 = scmp.eq.s32.totalorder %s25, 1
      %p111 = por %p109, %p110
      %p113 = scmp.ne.s32.totalorder %s98, %s112
      %p114 = scmp.eq.s32.totalorder %s25, 0
      %p115 = por %p113, %p114
      %s117 = sadd.s32 %s116, 1
      %p120 = scmp.eq.s32.totalorder %s19, 1
      %p121 = scmp.ne.s32.totalorder %s116, %s118
      %p122 = scmp.eq.s32.totalorder %s19, 0
      %p123 = por %p121, %p122
      %p124 = scmp.ne.s32.totalorder %s116, %s118
      %p125 = scmp.eq.s32.totalorder %s24, 1
      %p126 = por %p124, %p125
      %p127 = scmp.ne.s32.totalorder %s118, %s119
      %p128 = scmp.eq.s32.totalorder %s24, 0
      %p129 = por %p127, %p128
      %p130 = scmp.ne.s32.totalorder %s118, %s119
      %p131 = scmp.eq.s32.totalorder %s25, 1
      %p132 = por %p130, %p131
      %p134 = scmp.ne.s32.totalorder %s119, %s133
      %p135 = scmp.eq.s32.totalorder %s25, 0
      %p136 = por %p134, %p135
      %s138 = sadd.s32 %s137, 1
      %p141 = scmp.eq.s32.totalorder %s19, 1
      %p142 = scmp.ne.s32.totalorder %s137, %s139
      %p143 = scmp.eq.s32.totalorder %s19, 0
      %p144 = por %p142, %p143
      %p145 = scmp.ne.s32.totalorder %s137, %s139
      %p146 = scmp.eq.s32.totalorder %s24, 1
      %p147 = por %p145, %p146
      %p148 = scmp.ne.s32.totalorder %s139, %s140
      %p149 = scmp.eq.s32.totalorder %s24, 0
      %p150 = por %p148, %p149
      %p151 = scmp.ne.s32.totalorder %s139, %s140
      %p152 = scmp.eq.s32.totalorder %s25, 1
      %p153 = por %p151, %p152
      %p155 = scmp.ne.s32.totalorder %s140, %s154
      %p156 = scmp.eq.s32.totalorder %s25, 0
      %p157 = por %p155, %p156
      %s159 = sadd.s32 %s158, 1
      %p162 = scmp.eq.s32.totalorder %s19, 1
      %p163 = scmp.ne.s32.totalorder %s158, %s160
      %p164 = scmp.eq.s32.totalorder %s19, 0
      %p165 = por %p163, %p164
      %p166 = scmp.ne.s32.totalorder %s158, %s160
      %p167 = scmp.eq.s32.totalorder %s24, 1
      %p168 = por %p166, %p167
      %p169 = scmp.ne.s32.totalorder %s160, %s161
      %p170 = scmp.eq.s32.totalorder %s24, 0
      %p171 = por %p169, %p170
      %p172 = scmp.ne.s32.totalorder %s160, %s161
      %p173 = scmp.eq.s32.totalorder %s25, 1
      %p174 = por %p172, %p173
      %p176 = scmp.ne.s32.totalorder %s161, %s175
      %p177 = scmp.eq.s32.totalorder %s25, 0
      %p178 = por %p176, %p177
      %s180 = sadd.s32 %s179, 1
      %p183 = scmp.eq.s32.totalorder %s19, 1
      %p184 = scmp.ne.s32.totalorder %s179, %s181
      %p185 = scmp.eq.s32.totalorder %s19, 0
      %p186 = por %p184, %p185
      %p187 = scmp.ne.s32.totalorder %s179, %s181
      %p188 = scmp.eq.s32.totalorder %s24, 1
      %p189 = por %p187, %p188
      %p190 = scmp.ne.s32.totalorder %s181, %s182
      %p191 = scmp.eq.s32.totalorder %s24, 0
      %p192 = por %p190, %p191
      %p193 = scmp.ne.s32.totalorder %s181, %s182
      %p194 = scmp.eq.s32.totalorder %s25, 1
      %p195 = por %p193, %p194
      %p197 = scmp.ne.s32.totalorder %s182, %s196
      %p198 = scmp.eq.s32.totalorder %s25, 0
      %p199 = por %p197, %p198
      %s201 = sadd.s32 %s200, 1
      %p204 = scmp.eq.s32.totalorder %s19, 1
      %p205 = scmp.ne.s32.totalorder %s200, %s202
      %p206 = scmp.eq.s32.totalorder %s19, 0
      %p207 = por %p205, %p206
      %p208 = scmp.ne.s32.totalorder %s200, %s202
      %p209 = scmp.eq.s32.totalorder %s24, 1
      %p210 = por %p208, %p209
      %p211 = scmp.ne.s32.totalorder %s202, %s203
      %p212 = scmp.eq.s32.totalorder %s24, 0
      %p213 = por %p211, %p212
      %p214 = scmp.ne.s32.totalorder %s202, %s203
      %p215 = scmp.eq.s32.totalorder %s25, 1
      %p216 = por %p214, %p215
      %p218 = scmp.ne.s32.totalorder %s203, %s217
      %p219 = scmp.eq.s32.totalorder %s25, 0
      %p220 = por %p218, %p219
      %s222 = sadd.s32 %s221, 1
      %p225 = scmp.eq.s32.totalorder %s19, 1
      %p226 = scmp.ne.s32.totalorder %s221, %s223
      %p227 = scmp.eq.s32.totalorder %s19, 0
      %p228 = por %p226, %p227
      %p229 = scmp.ne.s32.totalorder %s221, %s223
      %p230 = scmp.eq.s32.totalorder %s24, 1
      %p231 = por %p229, %p230
      %p232 = scmp.ne.s32.totalorder %s223, %s224
      %p233 = scmp.eq.s32.totalorder %s24, 0
      %p234 = por %p232, %p233
      %p235 = scmp.ne.s32.totalorder %s223, %s224
      %p236 = scmp.eq.s32.totalorder %s25, 1
      %p237 = por %p235, %p236
      %p239 = scmp.ne.s32.totalorder %s224, %s238
      %p240 = scmp.eq.s32.totalorder %s25, 0
      %p241 = por %p239, %p240
      %s242 = ssub.s32 %s19, %s26
      %p243 = scmp.eq.s32.totalorder %s242, 0
      %s245 = sadd.s32 %s244, 1
      %s246 = scalar_select %p243, %s244, %s245
      %p249 = pneg %p243
      %p250 = scmp.eq.s32.totalorder %s19, 1
      %p251 = por %p249, %p250
      %p252 = scmp.ne.s32.totalorder %s244, %s247
      %p253 = scmp.eq.s32.totalorder %s19, 0
      %p254 = por %p252, %p253
      %p255 = scmp.ne.s32.totalorder %s244, %s247
      %p256 = scmp.eq.s32.totalorder %s24, 1
      %p257 = por %p255, %p256
      %p258 = scmp.ne.s32.totalorder %s247, %s248
      %p259 = scmp.eq.s32.totalorder %s24, 0
      %p260 = por %p258, %p259
      %p261 = scmp.ne.s32.totalorder %s247, %s248
      %p262 = scmp.eq.s32.totalorder %s25, 1
      %p263 = por %p261, %p262
      %p265 = scmp.ne.s32.totalorder %s248, %s264
      %p266 = scmp.eq.s32.totalorder %s25, 0
      %p267 = por %p265, %p266
      %p268 = scmp.le.s32.totalorder 1, %s19
      %p269 = scmp.lt.s32.totalorder %s19, 3
      %p270 = pnand %p268, %p269
      %p271 = pneg %p270
      // Predicated region
      $region9: #{bottleneck_forward_nhwc.1} parent=5 // pred_check
        _
      $region10: #{bottleneck_forward_nhwc.1} parent=5 // pred_check_branch
        %273 = sbr.rel (%p270) target = $region12
      $region11: #{bottleneck_forward_nhwc.1} parent=5 // pred_region
        %s274 = ssub.s32 %s19, 1
        // Predicated region
        $region13: #{bottleneck_forward_nhwc.1} parent=11 // pred_check
          %p275 = pneg %p66
        $region14: #{bottleneck_forward_nhwc.1} parent=11 // pred_check_branch
          %277 = sbr.rel (%p275) target = $region16
        $region15: #{bottleneck_forward_nhwc.1} parent=11 // pred_region
          _
        $region16: #{bottleneck_forward_nhwc.1} parent=11 // pred_fallthru
          _
        // Predicated region
        $region17: #{bottleneck_forward_nhwc.1} parent=11 // pred_check
          %p278 = pneg %p87
        $region18: #{bottleneck_forward_nhwc.1} parent=11 // pred_check_branch
          %280 = sbr.rel (%p278) target = $region20
        $region19: #{bottleneck_forward_nhwc.1} parent=11 // pred_region
          _
        $region20: #{bottleneck_forward_nhwc.1} parent=11 // pred_fallthru
          _
        // Predicated region
        $region21: #{bottleneck_forward_nhwc.1} parent=11 // pred_check
          %p281 = pneg %p108
        $region22: #{bottleneck_forward_nhwc.1} parent=11 // pred_check_branch
          %283 = sbr.rel (%p281) target = $region24
        $region23: #{bottleneck_forward_nhwc.1} parent=11 // pred_region
          _
        $region24: #{bottleneck_forward_nhwc.1} parent=11 // pred_fallthru
          _
        // Predicated region
        $region25: #{bottleneck_forward_nhwc.1} parent=11 // pred_check
          %p284 = pneg %p129
        $region26: #{bottleneck_forward_nhwc.1} parent=11 // pred_check_branch
          %286 = sbr.rel (%p284) target = $region28
        $region27: #{bottleneck_forward_nhwc.1} parent=11 // pred_region
          _
        $region28: #{bottleneck_forward_nhwc.1} parent=11 // pred_fallthru
          _
        // Predicated region
        $region29: #{bottleneck_forward_nhwc.1} parent=11 // pred_check
          %p287 = pneg %p150
        $region30: #{bottleneck_forward_nhwc.1} parent=11 // pred_check_branch
          %289 = sbr.rel (%p287) target = $region32
        $region31: #{bottleneck_forward_nhwc.1} parent=11 // pred_region
          _
        $region32: #{bottleneck_forward_nhwc.1} parent=11 // pred_fallthru
          _
        // Predicated region
        $region33: #{bottleneck_forward_nhwc.1} parent=11 // pred_check
          %p290 = pneg %p171
        $region34: #{bottleneck_forward_nhwc.1} parent=11 // pred_check_branch
          %292 = sbr.rel (%p290) target = $region36
        $region35: #{bottleneck_forward_nhwc.1} parent=11 // pred_region
          _
        $region36: #{bottleneck_forward_nhwc.1} parent=11 // pred_fallthru
          _
        // Predicated region
        $region37: #{bottleneck_forward_nhwc.1} parent=11 // pred_check
          %p293 = pneg %p192
        $region38: #{bottleneck_forward_nhwc.1} parent=11 // pred_check_branch
          %295 = sbr.rel (%p293) target = $region40
        $region39: #{bottleneck_forward_nhwc.1} parent=11 // pred_region
          _
        $region40: #{bottleneck_forward_nhwc.1} parent=11 // pred_fallthru
          _
        // Predicated region
        $region41: #{bottleneck_forward_nhwc.1} parent=11 // pred_check
          %p296 = pneg %p213
        $region42: #{bottleneck_forward_nhwc.1} parent=11 // pred_check_branch
          %298 = sbr.rel (%p296) target = $region44
        $region43: #{bottleneck_forward_nhwc.1} parent=11 // pred_region
          _
        $region44: #{bottleneck_forward_nhwc.1} parent=11 // pred_fallthru
          _
        // Predicated region
        $region45: #{bottleneck_forward_nhwc.1} parent=11 // pred_check
          %p299 = pneg %p234
        $region46: #{bottleneck_forward_nhwc.1} parent=11 // pred_check_branch
          %301 = sbr.rel (%p299) target = $region48
        $region47: #{bottleneck_forward_nhwc.1} parent=11 // pred_region
          _
        $region48: #{bottleneck_forward_nhwc.1} parent=11 // pred_fallthru
          _
      $region12: #{bottleneck_forward_nhwc.1} parent=5 // pred_fallthru
        _
      %p302 = scmp.lt.s32.totalorder %s19, 2
      // Predicated region
      $region49: #{bottleneck_forward_nhwc.1} parent=5 // pred_check
        %p303 = pneg %p302
      $region50: #{bottleneck_forward_nhwc.1} parent=5 // pred_check_branch
        %305 = sbr.rel (%p303) target = $region52
      $region51: #{bottleneck_forward_nhwc.1} parent=5 // pred_region
        // Predicated region
        $region53: #{bottleneck_forward_nhwc.1} parent=51 // pred_check
          %p306 = pneg %p39
        $region54: #{bottleneck_forward_nhwc.1} parent=51 // pred_check_branch
          %308 = sbr.rel (%p306) target = $region56
        $region55: #{bottleneck_forward_nhwc.1} parent=51 // pred_region
          %p309 = scmp.lt.s32.totalorder %s19, 1
          %s310 = scalar_select %p309, %s19, 1
          %s311 = smul.addr %s310, 32
          %s312 = smul.addr %s311, 4
          %s313 = scalar_lea.vmem %s0, %s312
        $region56: #{bottleneck_forward_nhwc.1} parent=51 // pred_fallthru
          _
      $region52: #{bottleneck_forward_nhwc.1} parent=5 // pred_fallthru
        _
      %p314 = scmp.le.s32.totalorder 1, %s19
      %p315 = scmp.lt.s32.totalorder %s19, 3
      %p316 = pnand %p314, %p315
      %p317 = pneg %p316
      // Predicated region
      $region57: #{bottleneck_forward_nhwc.1} parent=5 // pred_check
        _
      $region58: #{bottleneck_forward_nhwc.1} parent=5 // pred_check_branch
        %319 = sbr.rel (%p316) target = $region60
      $region59: #{bottleneck_forward_nhwc.1} parent=5 // pred_region
        %s320 = ssub.s32 %s19, 1
        %p321 = scmp.lt.s32.totalorder %s24, 1
        %s322 = scalar_select %p321, %s24, 1
        %s323 = smul.addr %s322, 32
        %s324 = smul.addr %s323, 4
        %s325 = scalar_lea.vmem %s0, %s324
        %p326 = pneg %p45
        %p327 = pneg %p42
        %p328 = pneg %p66
        %p329 = pneg %p63
        %p330 = pneg %p87
        %p331 = pneg %p84
        %p332 = pneg %p108
        %p333 = pneg %p105
        %p334 = pneg %p129
        %p335 = pneg %p126
        %p336 = pneg %p150
        %p337 = pneg %p147
        %p338 = pneg %p171
        %p339 = pneg %p168
        %p340 = pneg %p192
        %p341 = pneg %p189
        %p342 = pneg %p213
        %p343 = pneg %p210
        %p344 = pneg %p234
        %p345 = pneg %p231
        %p346 = pneg %p260
        %p347 = pneg %p257
        %s348 = sand.u32 %s247, 1
        %s349 = scalar_lea.sflag [#allocation4], %s348
        %s350 = sand.u32 %s247, 1
        %s351 = smul.addr %s350, 128
        %s352 = scalar_lea.vmem [#allocation3], %s351
        %p353 = scmp.lt.s32.totalorder %s24, 1
        %s354 = scalar_select %p353, %s24, 1
        %s355 = smul.addr %s354, 32
        %s356 = smul.addr %s355, 4
        %s357 = scalar_lea.vmem %s0, %s356
        %v359 = vld [vmem:[%s357] sm:$0xf]
        %v360 = vld [vmem:[%s357 + $0x4] sm:$0xf]
        %v361 = vld [vmem:[%s357 + $0x8] sm:$0xf]
        %v362 = vld [vmem:[%s357 + $0xc] sm:$0xf]
        %v363 = vld [vmem:[%s357 + $0x10] sm:$0xf]
        %v364 = vld [vmem:[%s357 + $0x14] sm:$0xf]
        %v365 = vld [vmem:[%s357 + $0x18] sm:$0xf]
        %v366 = vld [vmem:[%s357 + $0x1c] sm:$0xf]
        %v367 = vld [vmem:[%s357 + $0x20] sm:$0xf]
        %v368 = vld [vmem:[%s357 + $0x24] sm:$0xf]
        %v369 = vld [vmem:[%s357 + $0x28] sm:$0xf]
        %v370 = vld [vmem:[%s357 + $0x2c] sm:$0xf]
        %v371 = vld [vmem:[%s357 + $0x30] sm:$0xf]
        %v372 = vld [vmem:[%s357 + $0x34] sm:$0xf]
        %v373 = vld [vmem:[%s357 + $0x38] sm:$0xf]
        %v374 = vld [vmem:[%s357 + $0x3c] sm:$0xf]
        %v375 = vld [vmem:[%s357 + $0x40] sm:$0xf]
        %v376 = vld [vmem:[%s357 + $0x44] sm:$0xf]
        %v377 = vld [vmem:[%s357 + $0x48] sm:$0xf]
        %v378 = vld [vmem:[%s357 + $0x4c] sm:$0xf]
        %v379 = vld [vmem:[%s357 + $0x50] sm:$0xf]
        %v380 = vld [vmem:[%s357 + $0x54] sm:$0xf]
        %v381 = vld [vmem:[%s357 + $0x58] sm:$0xf]
        %v382 = vld [vmem:[%s357 + $0x5c] sm:$0xf]
        %v383 = vld [vmem:[%s357 + $0x60] sm:$0xf]
        %v384 = vld [vmem:[%s357 + $0x64] sm:$0xf]
        %v385 = vld [vmem:[%s357 + $0x68] sm:$0xf]
        %v386 = vld [vmem:[%s357 + $0x6c] sm:$0xf]
        %v387 = vld [vmem:[%s357 + $0x70] sm:$0xf]
        %v388 = vld [vmem:[%s357 + $0x74] sm:$0xf]
        %v389 = vld [vmem:[%s357 + $0x78] sm:$0xf]
        %v390 = vld [vmem:[%s357 + $0x7c] sm:$0xf]
        %v391 = vld [vmem:[%s1] sm:$0xf]
        %v392 = vld [vmem:[%s1 + $0x4] sm:$0xf]
        %v393 = vld [vmem:[%s1 + $0x8] sm:$0xf]
        %v394 = vld [vmem:[%s1 + $0xc] sm:$0xf]
        %v395 = vld [vmem:[%s1 + $0x10] sm:$0xf]
        %v396 = vld [vmem:[%s1 + $0x14] sm:$0xf]
        %v397 = vld [vmem:[%s1 + $0x18] sm:$0xf]
        %v398 = vld [vmem:[%s1 + $0x1c] sm:$0xf]
        %v399 = vld [vmem:[%s1 + $0x20] sm:$0xf]
        %v400 = vld [vmem:[%s1 + $0x24] sm:$0xf]
        %v401 = vld [vmem:[%s1 + $0x28] sm:$0xf]
        %v402 = vld [vmem:[%s1 + $0x2c] sm:$0xf]
        %v403 = vld [vmem:[%s1 + $0x30] sm:$0xf]
        %v404 = vld [vmem:[%s1 + $0x34] sm:$0xf]
        %v405 = vld [vmem:[%s1 + $0x38] sm:$0xf]
        %v406 = vld [vmem:[%s1 + $0x3c] sm:$0xf]
        %v439 = vunpack.c.l.b16 %v359
        %v440 = vunpack.c.l.b16 %v360
        %v441 = vunpack.c.l.b16 %v361
        %v442 = vunpack.c.l.b16 %v362
        %v443 = vunpack.c.l.b16 %v363
        %v444 = vunpack.c.l.b16 %v364
        %v445 = vunpack.c.l.b16 %v365
        %v446 = vunpack.c.l.b16 %v366
        %v447 = vunpack.c.l.b16 %v367
        %v448 = vunpack.c.l.b16 %v368
        %v449 = vunpack.c.l.b16 %v369
        %v450 = vunpack.c.l.b16 %v370
        %v451 = vunpack.c.l.b16 %v371
        %v452 = vunpack.c.l.b16 %v372
        %v453 = vunpack.c.l.b16 %v373
        %v454 = vunpack.c.l.b16 %v374
        %v455 = vunpack.c.l.b16 %v375
        %v456 = vunpack.c.l.b16 %v376
        %v457 = vunpack.c.l.b16 %v377
        %v458 = vunpack.c.l.b16 %v378
        %v459 = vunpack.c.l.b16 %v379
        %v460 = vunpack.c.l.b16 %v380
        %v461 = vunpack.c.l.b16 %v381
        %v462 = vunpack.c.l.b16 %v382
        %v463 = vunpack.c.l.b16 %v383
        %v464 = vunpack.c.l.b16 %v384
        %v465 = vunpack.c.l.b16 %v385
        %v466 = vunpack.c.l.b16 %v386
        %v467 = vunpack.c.l.b16 %v387
        %v468 = vunpack.c.l.b16 %v388
        %v469 = vunpack.c.l.b16 %v389
        %v470 = vunpack.c.l.b16 %v390
        %v471 = vpack.c.b16 %v440, %v439
        %v472 = vpack.c.b16 %v442, %v441
        %v473 = vpack.c.b16 %v444, %v443
        %v474 = vpack.c.b16 %v446, %v445
        %v475 = vpack.c.b16 %v448, %v447
        %v476 = vpack.c.b16 %v450, %v449
        %v477 = vpack.c.b16 %v452, %v451
        %v478 = vpack.c.b16 %v454, %v453
        %v479 = vpack.c.b16 %v456, %v455
        %v480 = vpack.c.b16 %v458, %v457
        %v481 = vpack.c.b16 %v460, %v459
        %v482 = vpack.c.b16 %v462, %v461
        %v483 = vpack.c.b16 %v464, %v463
        %v484 = vpack.c.b16 %v466, %v465
        %v485 = vpack.c.b16 %v468, %v467
        %v486 = vpack.c.b16 %v470, %v469
        %v519 = vunpack.c.l.b16 %v391
        %v520 = vunpack.c.l.b16 %v392
        %v521 = vunpack.c.l.b16 %v393
        %v522 = vunpack.c.l.b16 %v394
        %v523 = vunpack.c.l.b16 %v395
        %v524 = vunpack.c.l.b16 %v396
        %v525 = vunpack.c.l.b16 %v397
        %v526 = vunpack.c.l.b16 %v398
        %v527 = vunpack.c.l.b16 %v399
        %v528 = vunpack.c.l.b16 %v400
        %v529 = vunpack.c.l.b16 %v401
        %v530 = vunpack.c.l.b16 %v402
        %v531 = vunpack.c.l.b16 %v403
        %v532 = vunpack.c.l.b16 %v404
        %v533 = vunpack.c.l.b16 %v405
        %v534 = vunpack.c.l.b16 %v406
        %v535 = vpack.c.b16 %v520, %v519
        %v536 = vpack.c.b16 %v522, %v521
        %v537 = vpack.c.b16 %v524, %v523
        %v538 = vpack.c.b16 %v526, %v525
        %v539 = vpack.c.b16 %v528, %v527
        %v540 = vpack.c.b16 %v530, %v529
        %v541 = vpack.c.b16 %v532, %v531
        %v542 = vpack.c.b16 %v534, %v533
        %551 = vmatprep.subr.bf16.mxu0 0
        %552 = vmatpush1.bf16.msra.mxu0 %v535
        %553 = vmatprep.subr.bf16.mxu0 0
        %554 = vmatpush1.bf16.msra.mxu0 %v536
        %555 = vmatprep.subr.bf16.mxu0 0
        %556 = vmatpush1.bf16.msra.mxu0 %v537
        %557 = vmatprep.subr.bf16.mxu0 0
        %558 = vmatpush1.bf16.msra.mxu0 %v538
        %559 = vmatprep.subr.bf16.mxu0 0
        %560 = vmatpush1.bf16.msra.mxu0 %v539
        %561 = vmatprep.subr.bf16.mxu0 0
        %562 = vmatpush1.bf16.msra.mxu0 %v540
        %563 = vmatprep.subr.bf16.mxu0 0
        %564 = vmatpush1.bf16.msra.mxu0 %v541
        %565 = vmatprep.subr.bf16.mxu0 0
        %566 = vmatpush1.bf16.msra.mxu0 %v542
        %567 = vmatprep.subr.bf16.mxu0 0
        %568 = vmatpush1.bf16.msra.mxu0 0
        %569 = vmatprep.subr.bf16.mxu0 0
        %570 = vmatpush1.bf16.msra.mxu0 0
        %571 = vmatprep.subr.bf16.mxu0 0
        %572 = vmatpush1.bf16.msra.mxu0 0
        %573 = vmatprep.subr.bf16.mxu0 0
        %574 = vmatpush1.bf16.msra.mxu0 0
        %575 = vmatprep.subr.bf16.mxu0 0
        %576 = vmatpush1.bf16.msra.mxu0 0
        %577 = vmatprep.subr.bf16.mxu0 0
        %578 = vmatpush1.bf16.msra.mxu0 0
        %579 = vmatprep.subr.bf16.mxu0 0
        %580 = vmatpush1.bf16.msra.mxu0 0
        %581 = vmatprep.subr.bf16.mxu0 0
        %582 = vmatpush1.bf16.msra.mxu0 0
        %583 = vmatprep.mubr.bf16.mxu0 0
        %584 = vmatmul.mubr.bf16.gmra.mrb[0].mxu0 %v471
        %v585 = vpop.f32.mrb[0].mxu0
        %v586 = vadd.f32 0.0, %v585
        %v587 = vpop.f32.mrb[0].mxu0
        %v588 = vpop.f32.mrb[0].mxu0
        %v589 = vadd.f32 0.0, %v588
        %v590 = vpop.f32.mrb[0].mxu0
        %591 = vmatprep.mubr.bf16.mxu0 0
        %592 = vmatmul.mubr.bf16.gmra.mrb[0].mxu0 %v472
        %v593 = vpop.f32.mrb[0].mxu0
        %v594 = vadd.f32 0.0, %v593
        %v595 = vpop.f32.mrb[0].mxu0
        %v596 = vpop.f32.mrb[0].mxu0
        %v597 = vadd.f32 0.0, %v596
        %v598 = vpop.f32.mrb[0].mxu0
        %599 = vmatprep.mubr.bf16.mxu0 0
        %600 = vmatmul.mubr.bf16.gmra.mrb[0].mxu0 %v473
        %v601 = vpop.f32.mrb[0].mxu0
        %v602 = vadd.f32 0.0, %v601
        %v603 = vpop.f32.mrb[0].mxu0
        %v604 = vpop.f32.mrb[0].mxu0
        %v605 = vadd.f32 0.0, %v604
        %v606 = vpop.f32.mrb[0].mxu0
        %607 = vmatprep.mubr.bf16.mxu0 0
        %608 = vmatmul.mubr.bf16.gmra.mrb[0].mxu0 %v474
        %v609 = vpop.f32.mrb[0].mxu0
        %v610 = vadd.f32 0.0, %v609
        %v611 = vpop.f32.mrb[0].mxu0
        %v612 = vpop.f32.mrb[0].mxu0
        %v613 = vadd.f32 0.0, %v612
        %v614 = vpop.f32.mrb[0].mxu0
        %615 = vmatprep.mubr.bf16.mxu0 0
        %616 = vmatmul.mubr.bf16.gmra.mrb[0].mxu0 %v475
        %v617 = vpop.f32.mrb[0].mxu0
        %v618 = vadd.f32 0.0, %v617
        %v619 = vpop.f32.mrb[0].mxu0
        %v620 = vpop.f32.mrb[0].mxu0
        %v621 = vadd.f32 0.0, %v620
        %v622 = vpop.f32.mrb[0].mxu0
        %623 = vmatprep.mubr.bf16.mxu0 0
        %624 = vmatmul.mubr.bf16.gmra.mrb[0].mxu0 %v476
        %v625 = vpop.f32.mrb[0].mxu0
        %v626 = vadd.f32 0.0, %v625
        %v627 = vpop.f32.mrb[0].mxu0
        %v628 = vpop.f32.mrb[0].mxu0
        %v629 = vadd.f32 0.0, %v628
        %v630 = vpop.f32.mrb[0].mxu0
        %631 = vmatprep.mubr.bf16.mxu0 0
        %632 = vmatmul.mubr.bf16.gmra.mrb[0].mxu0 %v477
        %v633 = vpop.f32.mrb[0].mxu0
        %v634 = vadd.f32 0.0, %v633
        %v635 = vpop.f32.mrb[0].mxu0
        %v636 = vpop.f32.mrb[0].mxu0
        %v637 = vadd.f32 0.0, %v636
        %v638 = vpop.f32.mrb[0].mxu0
        %639 = vmatprep.mubr.bf16.mxu0 0
        %640 = vmatmul.mubr.bf16.gmra.mrb[0].mxu0 %v478
        %v641 = vpop.f32.mrb[0].mxu0
        %v642 = vadd.f32 0.0, %v641
        %v643 = vpop.f32.mrb[0].mxu0
        %v644 = vpop.f32.mrb[0].mxu0
        %v645 = vadd.f32 0.0, %v644
        %v646 = vpop.f32.mrb[0].mxu0
        %647 = vmatprep.mubr.bf16.mxu0 0
        %648 = vmatmul.mubr.bf16.gmra.mrb[0].mxu0 %v479
        %v649 = vpop.f32.mrb[0].mxu0
        %v650 = vadd.f32 0.0, %v649
        %v651 = vpop.f32.mrb[0].mxu0
        %v652 = vpop.f32.mrb[0].mxu0
        %v653 = vadd.f32 0.0, %v652
        %v654 = vpop.f32.mrb[0].mxu0
        %655 = vmatprep.mubr.bf16.mxu0 0
        %656 = vmatmul.mubr.bf16.gmra.mrb[0].mxu0 %v480
        %v657 = vpop.f32.mrb[0].mxu0
        %v658 = vadd.f32 0.0, %v657
        %v659 = vpop.f32.mrb[0].mxu0
        %v660 = vpop.f32.mrb[0].mxu0
        %v661 = vadd.f32 0.0, %v660
        %v662 = vpop.f32.mrb[0].mxu0
        %663 = vmatprep.mubr.bf16.mxu0 0
        %664 = vmatmul.mubr.bf16.gmra.mrb[0].mxu0 %v481
        %v665 = vpop.f32.mrb[0].mxu0
        %v666 = vadd.f32 0.0, %v665
        %v667 = vpop.f32.mrb[0].mxu0
        %v668 = vpop.f32.mrb[0].mxu0
        %v669 = vadd.f32 0.0, %v668
        %v670 = vpop.f32.mrb[0].mxu0
        %671 = vmatprep.mubr.bf16.mxu0 0
        %672 = vmatmul.mubr.bf16.gmra.mrb[0].mxu0 %v482
        %v673 = vpop.f32.mrb[0].mxu0
        %v674 = vadd.f32 0.0, %v673
        %v675 = vpop.f32.mrb[0].mxu0
        %v676 = vpop.f32.mrb[0].mxu0
        %v677 = vadd.f32 0.0, %v676
        %v678 = vpop.f32.mrb[0].mxu0
        %679 = vmatprep.mubr.bf16.mxu0 0
        %680 = vmatmul.mubr.bf16.gmra.mrb[0].mxu0 %v483
        %v681 = vpop.f32.mrb[0].mxu0
        %v682 = vadd.f32 0.0, %v681
        %v683 = vpop.f32.mrb[0].mxu0
        %v684 = vpop.f32.mrb[0].mxu0
        %v685 = vadd.f32 0.0, %v684
        %v686 = vpop.f32.mrb[0].mxu0
        %687 = vmatprep.mubr.bf16.mxu0 0
        %688 = vmatmul.mubr.bf16.gmra.mrb[0].mxu0 %v484
        %v689 = vpop.f32.mrb[0].mxu0
        %v690 = vadd.f32 0.0, %v689
        %v691 = vpop.f32.mrb[0].mxu0
        %v692 = vpop.f32.mrb[0].mxu0
        %v693 = vadd.f32 0.0, %v692
        %v694 = vpop.f32.mrb[0].mxu0
        %695 = vmatprep.mubr.bf16.mxu0 0
        %696 = vmatmul.mubr.bf16.gmra.mrb[0].mxu0 %v485
        %v697 = vpop.f32.mrb[0].mxu0
        %v698 = vadd.f32 0.0, %v697
        %v699 = vpop.f32.mrb[0].mxu0
        %v700 = vpop.f32.mrb[0].mxu0
        %v701 = vadd.f32 0.0, %v700
        %v702 = vpop.f32.mrb[0].mxu0
        %703 = vmatprep.mubr.bf16.mxu0 0
        %704 = vmatmul.mubr.bf16.gmra.mrb[0].mxu0 %v486
        %v705 = vpop.f32.mrb[0].mxu0
        %v706 = vadd.f32 0.0, %v705
        %v707 = vpop.f32.mrb[0].mxu0
        %v708 = vpop.f32.mrb[0].mxu0
        %v709 = vadd.f32 0.0, %v708
        %v710 = vpop.f32.mrb[0].mxu0
        %711 = vdwg.mxu0
        %v712 = vld [vmem:[%s2] sm:$0x1]
        %v714 = vlaneseq
        %v715 = vshrl.u32 %v714, 7
        %v716 = vsub.s32 0, %v715
        %v717 = vrot.slane %v712, %v716
        %v719 = vmul.f32 %v586, %v717
        %v720 = vmul.f32 %v589, %v717
        %v721 = vmul.f32 %v594, %v717
        %v722 = vmul.f32 %v597, %v717
        %v723 = vmul.f32 %v602, %v717
        %v724 = vmul.f32 %v605, %v717
        %v725 = vmul.f32 %v610, %v717
        %v726 = vmul.f32 %v613, %v717
        %v727 = vmul.f32 %v618, %v717
        %v728 = vmul.f32 %v621, %v717
        %v729 = vmul.f32 %v626, %v717
        %v730 = vmul.f32 %v629, %v717
        %v731 = vmul.f32 %v634, %v717
        %v732 = vmul.f32 %v637, %v717
        %v733 = vmul.f32 %v642, %v717
        %v734 = vmul.f32 %v645, %v717
        %v735 = vmul.f32 %v650, %v717
        %v736 = vmul.f32 %v653, %v717
        %v737 = vmul.f32 %v658, %v717
        %v738 = vmul.f32 %v661, %v717
        %v739 = vmul.f32 %v666, %v717
        %v740 = vmul.f32 %v669, %v717
        %v741 = vmul.f32 %v674, %v717
        %v742 = vmul.f32 %v677, %v717
        %v743 = vmul.f32 %v682, %v717
        %v744 = vmul.f32 %v685, %v717
        %v745 = vmul.f32 %v690, %v717
        %v746 = vmul.f32 %v693, %v717
        %v747 = vmul.f32 %v698, %v717
        %v748 = vmul.f32 %v701, %v717
        %v749 = vmul.f32 %v706, %v717
        %v750 = vmul.f32 %v709, %v717
        %v751 = vld [vmem:[%s3] sm:$0x1]
        %v753 = vlaneseq
        %v754 = vshrl.u32 %v753, 7
        %v755 = vsub.s32 0, %v754
        %v756 = vrot.slane %v751, %v755
        %v758 = vadd.f32 %v719, %v756
        %v759 = vadd.f32 %v720, %v756
        %v760 = vadd.f32 %v721, %v756
        %v761 = vadd.f32 %v722, %v756
        %v762 = vadd.f32 %v723, %v756
        %v763 = vadd.f32 %v724, %v756
        %v764 = vadd.f32 %v725, %v756
        %v765 = vadd.f32 %v726, %v756
        %v766 = vadd.f32 %v727, %v756
        %v767 = vadd.f32 %v728, %v756
        %v768 = vadd.f32 %v729, %v756
        %v769 = vadd.f32 %v730, %v756
        %v770 = vadd.f32 %v731, %v756
        %v771 = vadd.f32 %v732, %v756
        %v772 = vadd.f32 %v733, %v756
        %v773 = vadd.f32 %v734, %v756
        %v774 = vadd.f32 %v735, %v756
        %v775 = vadd.f32 %v736, %v756
        %v776 = vadd.f32 %v737, %v756
        %v777 = vadd.f32 %v738, %v756
        %v778 = vadd.f32 %v739, %v756
        %v779 = vadd.f32 %v740, %v756
        %v780 = vadd.f32 %v741, %v756
        %v781 = vadd.f32 %v742, %v756
        %v782 = vadd.f32 %v743, %v756
        %v783 = vadd.f32 %v744, %v756
        %v784 = vadd.f32 %v745, %v756
        %v785 = vadd.f32 %v746, %v756
        %v786 = vadd.f32 %v747, %v756
        %v787 = vadd.f32 %v748, %v756
        %v788 = vadd.f32 %v749, %v756
        %v789 = vadd.f32 %v750, %v756
        %v790 = vmax.f32 %v758, 0.0
        %v791 = vmax.f32 %v759, 0.0
        %v792 = vmax.f32 %v760, 0.0
        %v793 = vmax.f32 %v761, 0.0
        %v794 = vmax.f32 %v762, 0.0
        %v795 = vmax.f32 %v763, 0.0
        %v796 = vmax.f32 %v764, 0.0
        %v797 = vmax.f32 %v765, 0.0
        %v798 = vmax.f32 %v766, 0.0
        %v799 = vmax.f32 %v767, 0.0
        %v800 = vmax.f32 %v768, 0.0
        %v801 = vmax.f32 %v769, 0.0
        %v802 = vmax.f32 %v770, 0.0
        %v803 = vmax.f32 %v771, 0.0
        %v804 = vmax.f32 %v772, 0.0
        %v805 = vmax.f32 %v773, 0.0
        %v806 = vmax.f32 %v774, 0.0
        %v807 = vmax.f32 %v775, 0.0
        %v808 = vmax.f32 %v776, 0.0
        %v809 = vmax.f32 %v777, 0.0
        %v810 = vmax.f32 %v778, 0.0
        %v811 = vmax.f32 %v779, 0.0
        %v812 = vmax.f32 %v780, 0.0
        %v813 = vmax.f32 %v781, 0.0
        %v814 = vmax.f32 %v782, 0.0
        %v815 = vmax.f32 %v783, 0.0
        %v816 = vmax.f32 %v784, 0.0
        %v817 = vmax.f32 %v785, 0.0
        %v818 = vmax.f32 %v786, 0.0
        %v819 = vmax.f32 %v787, 0.0
        %v820 = vmax.f32 %v788, 0.0
        %v821 = vmax.f32 %v789, 0.0
        %v822 = vpack.c.bf16 %v791, %v790
        %v823 = vpack.c.bf16 %v793, %v792
        %v824 = vpack.c.bf16 %v795, %v794
        %v825 = vpack.c.bf16 %v797, %v796
        %v826 = vpack.c.bf16 %v799, %v798
        %v827 = vpack.c.bf16 %v801, %v800
        %v828 = vpack.c.bf16 %v803, %v802
        %v829 = vpack.c.bf16 %v805, %v804
        %v830 = vpack.c.bf16 %v807, %v806
        %v831 = vpack.c.bf16 %v809, %v808
        %v832 = vpack.c.bf16 %v811, %v810
        %v833 = vpack.c.bf16 %v813, %v812
        %v834 = vpack.c.bf16 %v815, %v814
        %v835 = vpack.c.bf16 %v817, %v816
        %v836 = vpack.c.bf16 %v819, %v818
        %v837 = vpack.c.bf16 %v821, %v820
        %838 = vst [vmem:[#allocation2] sm:$0xf] 0
        %839 = vst [vmem:[#allocation2 + $0x4] sm:$0xf] 0
        %840 = vst [vmem:[#allocation2 + $0x8] sm:$0x1] 0
        %841 = vst [vmem:[#allocation2 + $0xc] sm:$0xf] 0
        %842 = vst [vmem:[#allocation2 + $0x10] sm:$0xf] 0
        %843 = vst [vmem:[#allocation2 + $0x14] sm:$0x1] 0
        %844 = vst [vmem:[#allocation2 + $0x18] sm:$0xf] 0
        %845 = vst [vmem:[#allocation2 + $0x1c] sm:$0xf] 0
        %846 = vst [vmem:[#allocation2 + $0x20] sm:$0x1] 0
        %847 = vst [vmem:[#allocation2 + $0x24] sm:$0xf] 0
        %848 = vst [vmem:[#allocation2 + $0x28] sm:$0xf] 0
        %849 = vst [vmem:[#allocation2 + $0x2c] sm:$0x1] 0
        %850 = vst [vmem:[#allocation2 + $0x30] sm:$0xf] 0
        %851 = vst [vmem:[#allocation2 + $0x34] sm:$0xf] 0
        %852 = vst [vmem:[#allocation2 + $0x38] sm:$0x1] 0
        %853 = vst [vmem:[#allocation2 + $0x3c] sm:$0xf] 0
        %854 = vst [vmem:[#allocation2 + $0x40] sm:$0xf] 0
        %855 = vst [vmem:[#allocation2 + $0x44] sm:$0x1] 0
        %856 = vst [vmem:[#allocation2 + $0x48] sm:$0xf] 0
        %857 = vst [vmem:[#allocation2 + $0x4c] sm:$0xf] 0
        %858 = vst [vmem:[#allocation2 + $0x50] sm:$0x1] 0
        %859 = vst [vmem:[#allocation2 + $0x54] sm:$0xf] 0
        %860 = vst [vmem:[#allocation2 + $0x58] sm:$0xf] 0
        %861 = vst [vmem:[#allocation2 + $0x5c] sm:$0x1] 0
        %862 = vst [vmem:[#allocation2 + $0x60] sm:$0xf] 0
        %863 = vst [vmem:[#allocation2 + $0x64] sm:$0xf] 0
        %864 = vst [vmem:[#allocation2 + $0x68] sm:$0x1] 0
        %865 = vst [vmem:[#allocation2 + $0x6c] sm:$0xf] 0
        %866 = vst [vmem:[#allocation2 + $0x70] sm:$0xf] 0
        %867 = vst [vmem:[#allocation2 + $0x74] sm:$0x1] 0
        %868 = vst [vmem:[#allocation2 + $0x78] sm:$0xf] 0
        %869 = vst [vmem:[#allocation2 + $0x7c] sm:$0xf] 0
        %870 = vst [vmem:[#allocation2 + $0x80] sm:$0x1] 0
        %871 = vst [vmem:[#allocation2 + $0x84] sm:$0xf] 0
        %872 = vst [vmem:[#allocation2 + $0x88] sm:$0xf] 0
        %873 = vst [vmem:[#allocation2 + $0x8c] sm:$0x1] 0
        %874 = vst [vmem:[#allocation2 + $0x90] sm:$0xf] 0
        %875 = vst [vmem:[#allocation2 + $0x94] sm:$0xf] 0
        %876 = vst [vmem:[#allocation2 + $0x98] sm:$0x1] 0
        %877 = vst [vmem:[#allocation2 + $0x9c] sm:$0xf] 0
        %878 = vst [vmem:[#allocation2 + $0xa0] sm:$0xf] 0
        %879 = vst [vmem:[#allocation2 + $0xa4] sm:$0x1] 0
        %880 = vst [vmem:[#allocation2 + $0xa8] sm:$0xf] 0
        %881 = vst [vmem:[#allocation2 + $0xac] sm:$0xf] 0
        %882 = vst [vmem:[#allocation2 + $0xb0] sm:$0x1] 0
        %883 = vst [vmem:[#allocation2 + $0xb4] sm:$0xf] 0
        %884 = vst [vmem:[#allocation2 + $0xb8] sm:$0xf] 0
        %885 = vst [vmem:[#allocation2 + $0xbc] sm:$0x1] 0
        %886 = vst [vmem:[#allocation2 + $0xc0] sm:$0xf] 0
        %887 = vst [vmem:[#allocation2 + $0xc4] sm:$0xf] 0
        %888 = vst [vmem:[#allocation2 + $0xc8] sm:$0x1] 0
        %889 = vst [vmem:[#allocation2 + $0xcc] sm:$0xf] 0
        %890 = vst [vmem:[#allocation2 + $0xd0] sm:$0xf] 0
        %891 = vst [vmem:[#allocation2 + $0xd4] sm:$0x1] 0
        %v908 = vunpack.c.l.b16 %v822
        %v909 = vunpack.c.h.b16 %v822
        %v910 = vunpack.c.l.b16 %v823
        %v911 = vunpack.c.h.b16 %v823
        %v912 = vunpack.c.l.b16 %v824
        %v913 = vunpack.c.h.b16 %v824
        %v914 = vunpack.c.l.b16 %v825
        %v915 = vunpack.c.h.b16 %v825
        %v916 = vunpack.c.l.b16 %v826
        %v917 = vunpack.c.h.b16 %v826
        %v918 = vunpack.c.l.b16 %v827
        %v919 = vunpack.c.h.b16 %v827
        %v920 = vunpack.c.l.b16 %v828
        %v921 = vunpack.c.h.b16 %v828
        %v922 = vunpack.c.l.b16 %v829
        %v923 = vunpack.c.h.b16 %v829
        %v924 = vunpack.c.l.b16 %v830
        %v925 = vunpack.c.h.b16 %v830
        %v926 = vunpack.c.l.b16 %v831
        %v927 = vunpack.c.h.b16 %v831
        %v928 = vunpack.c.l.b16 %v832
        %v929 = vunpack.c.h.b16 %v832
        %v930 = vunpack.c.l.b16 %v833
        %v931 = vunpack.c.h.b16 %v833
        %v932 = vunpack.c.l.b16 %v834
        %v933 = vunpack.c.h.b16 %v834
        %v934 = vunpack.c.l.b16 %v835
        %v935 = vunpack.c.h.b16 %v835
        %v936 = vunpack.c.l.b16 %v836
        %v937 = vunpack.c.h.b16 %v836
        %v938 = vunpack.c.l.b16 %v837
        %v939 = vunpack.c.h.b16 %v837
        %v940 = vpack.c.b16 %v908, %v908
        %v941 = vpack.c.b16 %v909, %v909
        %v942 = vpack.c.b16 %v910, %v910
        %v943 = vpack.c.b16 %v911, %v911
        %v944 = vpack.c.b16 %v912, %v912
        %v945 = vpack.c.b16 %v913, %v913
        %v946 = vpack.c.b16 %v914, %v914
        %v947 = vpack.c.b16 %v915, %v915
        %v948 = vpack.c.b16 %v916, %v916
        %v949 = vpack.c.b16 %v917, %v917
        %v950 = vpack.c.b16 %v918, %v918
        %v951 = vpack.c.b16 %v919, %v919
        %v952 = vpack.c.b16 %v920, %v920
        %v953 = vpack.c.b16 %v921, %v921
        %v954 = vpack.c.b16 %v922, %v922
        %v955 = vpack.c.b16 %v923, %v923
        %v956 = vpack.c.b16 %v924, %v924
        %v957 = vpack.c.b16 %v925, %v925
        %v958 = vpack.c.b16 %v926, %v926
        %v959 = vpack.c.b16 %v927, %v927
        %v960 = vpack.c.b16 %v928, %v928
        %v961 = vpack.c.b16 %v929, %v929
        %v962 = vpack.c.b16 %v930, %v930
        %v963 = vpack.c.b16 %v931, %v931
        %v964 = vpack.c.b16 %v932, %v932
        %v965 = vpack.c.b16 %v933, %v933
        %v966 = vpack.c.b16 %v934, %v934
        %v967 = vpack.c.b16 %v935, %v935
        %v968 = vpack.c.b16 %v936, %v936
        %v969 = vpack.c.b16 %v937, %v937
        %v970 = vpack.c.b16 %v938, %v938
        %v971 = vpack.c.b16 %v939, %v939
        %vm972 = vsmask.f32 256
        %vm973 = vsmask.f32 4368
        %vm974 = vmor %vm972, %vm973
        %v976 = vshrl.u32 %v940, 16
        %v978 = vrot.slane %v976, 7
        %v979 = vshll.u32 %v940, 16
        %v981 = vor.u32 %v978, %v979
        %v982 = vrot.slane %v978, 4
        %v984 = vshrl.u32 %v941, 16
        %v986 = vrot.slane %v984, 7
        %v987 = vshll.u32 %v941, 16
        %v989 = vor.u32 %v986, %v987
        %v990 = vsel %vm974, %v982, %v989
        %v991 = vrot.slane %v986, 4
        %v993 = vshrl.u32 %v942, 16
        %v995 = vrot.slane %v993, 7
        %v996 = vshll.u32 %v942, 16
        %v998 = vor.u32 %v995, %v996
        %v999 = vrot.slane %v995, 4
        %v1001 = vshrl.u32 %v943, 16
        %v1003 = vrot.slane %v1001, 7
        %v1004 = vshll.u32 %v943, 16
        %v1006 = vor.u32 %v1003, %v1004
        %v1007 = vsel %vm974, %v999, %v1006
        %v1008 = vrot.slane %v1003, 4
        %v1010 = vshrl.u32 %v944, 16
        %v1012 = vrot.slane %v1010, 7
        %v1013 = vshll.u32 %v944, 16
        %v1015 = vor.u32 %v1012, %v1013
        %v1016 = vrot.slane %v1012, 4
        %v1018 = vshrl.u32 %v945, 16
        %v1020 = vrot.slane %v1018, 7
        %v1021 = vshll.u32 %v945, 16
        %v1023 = vor.u32 %v1020, %v1021
        %v1024 = vsel %vm974, %v1016, %v1023
        %v1025 = vrot.slane %v1020, 4
        %v1027 = vshrl.u32 %v946, 16
        %v1029 = vrot.slane %v1027, 7
        %v1030 = vshll.u32 %v946, 16
        %v1032 = vor.u32 %v1029, %v1030
        %v1033 = vrot.slane %v1029, 4
        %v1035 = vshrl.u32 %v947, 16
        %v1037 = vrot.slane %v1035, 7
        %v1038 = vshll.u32 %v947, 16
        %v1040 = vor.u32 %v1037, %v1038
        %v1041 = vsel %vm974, %v1033, %v1040
        %v1042 = vrot.slane %v1037, 4
        %v1044 = vshrl.u32 %v948, 16
        %v1046 = vrot.slane %v1044, 7
        %v1047 = vshll.u32 %v948, 16
        %v1049 = vor.u32 %v1046, %v1047
        %v1050 = vrot.slane %v1046, 4
        %v1052 = vshrl.u32 %v949, 16
        %v1054 = vrot.slane %v1052, 7
        %v1055 = vshll.u32 %v949, 16
        %v1057 = vor.u32 %v1054, %v1055
        %v1058 = vsel %vm974, %v1050, %v1057
        %v1059 = vrot.slane %v1054, 4
        %v1061 = vshrl.u32 %v950, 16
        %v1063 = vrot.slane %v1061, 7
        %v1064 = vshll.u32 %v950, 16
        %v1066 = vor.u32 %v1063, %v1064
        %v1067 = vrot.slane %v1063, 4
        %v1069 = vshrl.u32 %v951, 16
        %v1071 = vrot.slane %v1069, 7
        %v1072 = vshll.u32 %v951, 16
        %v1074 = vor.u32 %v1071, %v1072
        %v1075 = vsel %vm974, %v1067, %v1074
        %v1076 = vrot.slane %v1071, 4
        %v1078 = vshrl.u32 %v952, 16
        %v1080 = vrot.slane %v1078, 7
        %v1081 = vshll.u32 %v952, 16
        %v1083 = vor.u32 %v1080, %v1081
        %v1084 = vrot.slane %v1080, 4
        %v1086 = vshrl.u32 %v953, 16
        %v1088 = vrot.slane %v1086, 7
        %v1089 = vshll.u32 %v953, 16
        %v1091 = vor.u32 %v1088, %v1089
        %v1092 = vsel %vm974, %v1084, %v1091
        %v1093 = vrot.slane %v1088, 4
        %v1095 = vshrl.u32 %v954, 16
        %v1097 = vrot.slane %v1095, 7
        %v1098 = vshll.u32 %v954, 16
        %v1100 = vor.u32 %v1097, %v1098
        %v1101 = vrot.slane %v1097, 4
        %v1103 = vshrl.u32 %v955, 16
        %v1105 = vrot.slane %v1103, 7
        %v1106 = vshll.u32 %v955, 16
        %v1108 = vor.u32 %v1105, %v1106
        %v1109 = vsel %vm974, %v1101, %v1108
        %v1110 = vrot.slane %v1105, 4
        %v1112 = vshrl.u32 %v956, 16
        %v1114 = vrot.slane %v1112, 7
        %v1115 = vshll.u32 %v956, 16
        %v1117 = vor.u32 %v1114, %v1115
        %v1118 = vrot.slane %v1114, 4
        %v1120 = vshrl.u32 %v957, 16
        %v1122 = vrot.slane %v1120, 7
        %v1123 = vshll.u32 %v957, 16
        %v1125 = vor.u32 %v1122, %v1123
        %v1126 = vsel %vm974, %v1118, %v1125
        %v1127 = vrot.slane %v1122, 4
        %v1129 = vshrl.u32 %v958, 16
        %v1131 = vrot.slane %v1129, 7
        %v1132 = vshll.u32 %v958, 16
        %v1134 = vor.u32 %v1131, %v1132
        %v1135 = vrot.slane %v1131, 4
        %v1137 = vshrl.u32 %v959, 16
        %v1139 = vrot.slane %v1137, 7
        %v1140 = vshll.u32 %v959, 16
        %v1142 = vor.u32 %v1139, %v1140
        %v1143 = vsel %vm974, %v1135, %v1142
        %v1144 = vrot.slane %v1139, 4
        %v1146 = vshrl.u32 %v960, 16
        %v1148 = vrot.slane %v1146, 7
        %v1149 = vshll.u32 %v960, 16
        %v1151 = vor.u32 %v1148, %v1149
        %v1152 = vrot.slane %v1148, 4
        %v1154 = vshrl.u32 %v961, 16
        %v1156 = vrot.slane %v1154, 7
        %v1157 = vshll.u32 %v961, 16
        %v1159 = vor.u32 %v1156, %v1157
        %v1160 = vsel %vm974, %v1152, %v1159
        %v1161 = vrot.slane %v1156, 4
        %v1163 = vshrl.u32 %v962, 16
        %v1165 = vrot.slane %v1163, 7
        %v1166 = vshll.u32 %v962, 16
        %v1168 = vor.u32 %v1165, %v1166
        %v1169 = vrot.slane %v1165, 4
        %v1171 = vshrl.u32 %v963, 16
        %v1173 = vrot.slane %v1171, 7
        %v1174 = vshll.u32 %v963, 16
        %v1176 = vor.u32 %v1173, %v1174
        %v1177 = vsel %vm974, %v1169, %v1176
        %v1178 = vrot.slane %v1173, 4
        %v1180 = vshrl.u32 %v964, 16
        %v1182 = vrot.slane %v1180, 7
        %v1183 = vshll.u32 %v964, 16
        %v1185 = vor.u32 %v1182, %v1183
        %v1186 = vrot.slane %v1182, 4
        %v1188 = vshrl.u32 %v965, 16
        %v1190 = vrot.slane %v1188, 7
        %v1191 = vshll.u32 %v965, 16
        %v1193 = vor.u32 %v1190, %v1191
        %v1194 = vsel %vm974, %v1186, %v1193
        %v1195 = vrot.slane %v1190, 4
        %v1197 = vshrl.u32 %v966, 16
        %v1199 = vrot.slane %v1197, 7
        %v1200 = vshll.u32 %v966, 16
        %v1202 = vor.u32 %v1199, %v1200
        %v1203 = vrot.slane %v1199, 4
        %v1205 = vshrl.u32 %v967, 16
        %v1207 = vrot.slane %v1205, 7
        %v1208 = vshll.u32 %v967, 16
        %v1210 = vor.u32 %v1207, %v1208
        %v1211 = vsel %vm974, %v1203, %v1210
        %v1212 = vrot.slane %v1207, 4
        %v1214 = vshrl.u32 %v968, 16
        %v1216 = vrot.slane %v1214, 7
        %v1217 = vshll.u32 %v968, 16
        %v1219 = vor.u32 %v1216, %v1217
        %v1220 = vrot.slane %v1216, 4
        %v1222 = vshrl.u32 %v969, 16
        %v1224 = vrot.slane %v1222, 7
        %v1225 = vshll.u32 %v969, 16
        %v1227 = vor.u32 %v1224, %v1225
        %v1228 = vsel %vm974, %v1220, %v1227
        %v1229 = vrot.slane %v1224, 4
        %v1231 = vshrl.u32 %v970, 16
        %v1233 = vrot.slane %v1231, 7
        %v1234 = vshll.u32 %v970, 16
        %v1236 = vor.u32 %v1233, %v1234
        %v1237 = vrot.slane %v1233, 4
        %v1239 = vshrl.u32 %v971, 16
        %v1241 = vrot.slane %v1239, 7
        %v1242 = vshll.u32 %v971, 16
        %v1244 = vor.u32 %v1241, %v1242
        %v1245 = vsel %vm974, %v1237, %v1244
        %v1246 = vrot.slane %v1241, 4
        %s1295 = scalar_lea.vmem [#allocation2], 12
        %vm1296 = vcmask 1043456
        %vm1297 = vsmask.f32 7938
        %vm1298 = vmand %vm1296, %vm1297
        %v1299 = vld [vmem:[%s1295] sm:$0xf]
        %v1300 = vsel %vm1298, %v981, %v1299
        %1301 = vst [vmem:[%s1295] sm:$0xf] %v1300
        %1302 = vst [vmem:[%s1295 + $0x4] sm:$0xf] %v990
        %vm1303 = vcmask 1040384
        %vm1304 = vmand %vm1303, %vm972
        %v1305 = vld [vmem:[%s1295 + $0x8] sm:$0x1]
        %v1306 = vsel %vm1304, %v991, %v1305
        %1307 = vst [vmem:[%s1295 + $0x8] sm:$0x1] %v1306
        %v1308 = vld [vmem:[%s1295 + $0xc] sm:$0xf]
        %v1309 = vsel %vm1298, %v998, %v1308
        %1310 = vst [vmem:[%s1295 + $0xc] sm:$0xf] %v1309
        %1311 = vst [vmem:[%s1295 + $0x10] sm:$0xf] %v1007
        %v1312 = vld [vmem:[%s1295 + $0x14] sm:$0x1]
        %v1313 = vsel %vm1304, %v1008, %v1312
        %1314 = vst [vmem:[%s1295 + $0x14] sm:$0x1] %v1313
        %v1315 = vld [vmem:[%s1295 + $0x18] sm:$0xf]
        %v1316 = vsel %vm1298, %v1015, %v1315
        %1317 = vst [vmem:[%s1295 + $0x18] sm:$0xf] %v1316
        %1318 = vst [vmem:[%s1295 + $0x1c] sm:$0xf] %v1024
        %v1319 = vld [vmem:[%s1295 + $0x20] sm:$0x1]
        %v1320 = vsel %vm1304, %v1025, %v1319
        %1321 = vst [vmem:[%s1295 + $0x20] sm:$0x1] %v1320
        %v1322 = vld [vmem:[%s1295 + $0x24] sm:$0xf]
        %v1323 = vsel %vm1298, %v1032, %v1322
        %1324 = vst [vmem:[%s1295 + $0x24] sm:$0xf] %v1323
        %1325 = vst [vmem:[%s1295 + $0x28] sm:$0xf] %v1041
        %v1326 = vld [vmem:[%s1295 + $0x2c] sm:$0x1]
        %v1327 = vsel %vm1304, %v1042, %v1326
        %1328 = vst [vmem:[%s1295 + $0x2c] sm:$0x1] %v1327
        %v1329 = vld [vmem:[%s1295 + $0x30] sm:$0xf]
        %v1330 = vsel %vm1298, %v1049, %v1329
        %1331 = vst [vmem:[%s1295 + $0x30] sm:$0xf] %v1330
        %1332 = vst [vmem:[%s1295 + $0x34] sm:$0xf] %v1058
        %v1333 = vld [vmem:[%s1295 + $0x38] sm:$0x1]
        %v1334 = vsel %vm1304, %v1059, %v1333
        %1335 = vst [vmem:[%s1295 + $0x38] sm:$0x1] %v1334
        %v1336 = vld [vmem:[%s1295 + $0x3c] sm:$0xf]
        %v1337 = vsel %vm1298, %v1066, %v1336
        %1338 = vst [vmem:[%s1295 + $0x3c] sm:$0xf] %v1337
        %1339 = vst [vmem:[%s1295 + $0x40] sm:$0xf] %v1075
        %v1340 = vld [vmem:[%s1295 + $0x44] sm:$0x1]
        %v1341 = vsel %vm1304, %v1076, %v1340
        %1342 = vst [vmem:[%s1295 + $0x44] sm:$0x1] %v1341
        %v1343 = vld [vmem:[%s1295 + $0x48] sm:$0xf]
        %v1344 = vsel %vm1298, %v1083, %v1343
        %1345 = vst [vmem:[%s1295 + $0x48] sm:$0xf] %v1344
        %1346 = vst [vmem:[%s1295 + $0x4c] sm:$0xf] %v1092
        %v1347 = vld [vmem:[%s1295 + $0x50] sm:$0x1]
        %v1348 = vsel %vm1304, %v1093, %v1347
        %1349 = vst [vmem:[%s1295 + $0x50] sm:$0x1] %v1348
        %v1350 = vld [vmem:[%s1295 + $0x54] sm:$0xf]
        %v1351 = vsel %vm1298, %v1100, %v1350
        %1352 = vst [vmem:[%s1295 + $0x54] sm:$0xf] %v1351
        %1353 = vst [vmem:[%s1295 + $0x58] sm:$0xf] %v1109
        %v1354 = vld [vmem:[%s1295 + $0x5c] sm:$0x1]
        %v1355 = vsel %vm1304, %v1110, %v1354
        %1356 = vst [vmem:[%s1295 + $0x5c] sm:$0x1] %v1355
        %v1357 = vld [vmem:[%s1295 + $0x60] sm:$0xf]
        %v1358 = vsel %vm1298, %v1117, %v1357
        %1359 = vst [vmem:[%s1295 + $0x60] sm:$0xf] %v1358
        %1360 = vst [vmem:[%s1295 + $0x64] sm:$0xf] %v1126
        %v1361 = vld [vmem:[%s1295 + $0x68] sm:$0x1]
        %v1362 = vsel %vm1304, %v1127, %v1361
        %1363 = vst [vmem:[%s1295 + $0x68] sm:$0x1] %v1362
        %v1364 = vld [vmem:[%s1295 + $0x6c] sm:$0xf]
        %v1365 = vsel %vm1298, %v1134, %v1364
        %1366 = vst [vmem:[%s1295 + $0x6c] sm:$0xf] %v1365
        %1367 = vst [vmem:[%s1295 + $0x70] sm:$0xf] %v1143
        %v1368 = vld [vmem:[%s1295 + $0x74] sm:$0x1]
        %v1369 = vsel %vm1304, %v1144, %v1368
        %1370 = vst [vmem:[%s1295 + $0x74] sm:$0x1] %v1369
        %v1371 = vld [vmem:[%s1295 + $0x78] sm:$0xf]
        %v1372 = vsel %vm1298, %v1151, %v1371
        %1373 = vst [vmem:[%s1295 + $0x78] sm:$0xf] %v1372
        %1374 = vst [vmem:[%s1295 + $0x7c] sm:$0xf] %v1160
        %v1375 = vld [vmem:[%s1295 + $0x80] sm:$0x1]
        %v1376 = vsel %vm1304, %v1161, %v1375
        %1377 = vst [vmem:[%s1295 + $0x80] sm:$0x1] %v1376
        %v1378 = vld [vmem:[%s1295 + $0x84] sm:$0xf]
        %v1379 = vsel %vm1298, %v1168, %v1378
        %1380 = vst [vmem:[%s1295 + $0x84] sm:$0xf] %v1379
        %1381 = vst [vmem:[%s1295 + $0x88] sm:$0xf] %v1177
        %v1382 = vld [vmem:[%s1295 + $0x8c] sm:$0x1]
        %v1383 = vsel %vm1304, %v1178, %v1382
        %1384 = vst [vmem:[%s1295 + $0x8c] sm:$0x1] %v1383
        %v1385 = vld [vmem:[%s1295 + $0x90] sm:$0xf]
        %v1386 = vsel %vm1298, %v1185, %v1385
        %1387 = vst [vmem:[%s1295 + $0x90] sm:$0xf] %v1386
        %1388 = vst [vmem:[%s1295 + $0x94] sm:$0xf] %v1194
        %v1389 = vld [vmem:[%s1295 + $0x98] sm:$0x1]
        %v1390 = vsel %vm1304, %v1195, %v1389
        %1391 = vst [vmem:[%s1295 + $0x98] sm:$0x1] %v1390
        %v1392 = vld [vmem:[%s1295 + $0x9c] sm:$0xf]
        %v1393 = vsel %vm1298, %v1202, %v1392
        %1394 = vst [vmem:[%s1295 + $0x9c] sm:$0xf] %v1393
        %1395 = vst [vmem:[%s1295 + $0xa0] sm:$0xf] %v1211
        %v1396 = vld [vmem:[%s1295 + $0xa4] sm:$0x1]
        %v1397 = vsel %vm1304, %v1212, %v1396
        %1398 = vst [vmem:[%s1295 + $0xa4] sm:$0x1] %v1397
        %v1399 = vld [vmem:[%s1295 + $0xa8] sm:$0xf]
        %v1400 = vsel %vm1298, %v1219, %v1399
        %1401 = vst [vmem:[%s1295 + $0xa8] sm:$0xf] %v1400
        %1402 = vst [vmem:[%s1295 + $0xac] sm:$0xf] %v1228
        %v1403 = vld [vmem:[%s1295 + $0xb0] sm:$0x1]
        %v1404 = vsel %vm1304, %v1229, %v1403
        %1405 = vst [vmem:[%s1295 + $0xb0] sm:$0x1] %v1404
        %v1406 = vld [vmem:[%s1295 + $0xb4] sm:$0xf]
        %v1407 = vsel %vm1298, %v1236, %v1406
        %1408 = vst [vmem:[%s1295 + $0xb4] sm:$0xf] %v1407
        %1409 = vst [vmem:[%s1295 + $0xb8] sm:$0xf] %v1245
        %v1410 = vld [vmem:[%s1295 + $0xbc] sm:$0x1]
        %v1411 = vsel %vm1304, %v1246, %v1410
        %1412 = vst [vmem:[%s1295 + $0xbc] sm:$0x1] %v1411
        %v1413 = vld [vmem:[#allocation2] sm:$0xf]
        %v1414 = vld [vmem:[#allocation2 + $0x4] sm:$0xf]
        %v1415 = vld [vmem:[#allocation2 + $0xc] sm:$0xf]
        %v1416 = vld [vmem:[#allocation2 + $0x10] sm:$0xf]
        %v1417 = vld [vmem:[#allocation2 + $0x18] sm:$0xf]
        %v1418 = vld [vmem:[#allocation2 + $0x1c] sm:$0xf]
        %v1419 = vld [vmem:[#allocation2 + $0x24] sm:$0xf]
        %v1420 = vld [vmem:[#allocation2 + $0x28] sm:$0xf]
        %v1421 = vld [vmem:[#allocation2 + $0x30] sm:$0xf]
        %v1422 = vld [vmem:[#allocation2 + $0x34] sm:$0xf]
        %v1423 = vld [vmem:[#allocation2 + $0x3c] sm:$0xf]
        %v1424 = vld [vmem:[#allocation2 + $0x40] sm:$0xf]
        %v1425 = vld [vmem:[#allocation2 + $0x48] sm:$0xf]
        %v1426 = vld [vmem:[#allocation2 + $0x4c] sm:$0xf]
        %v1427 = vld [vmem:[#allocation2 + $0x54] sm:$0xf]
        %v1428 = vld [vmem:[#allocation2 + $0x58] sm:$0xf]
        %v1429 = vld [vmem:[#allocation2 + $0x60] sm:$0xf]
        %v1430 = vld [vmem:[#allocation2 + $0x64] sm:$0xf]
        %v1431 = vld [vmem:[#allocation2 + $0x6c] sm:$0xf]
        %v1432 = vld [vmem:[#allocation2 + $0x70] sm:$0xf]
        %v1433 = vld [vmem:[#allocation2 + $0x78] sm:$0xf]
        %v1434 = vld [vmem:[#allocation2 + $0x7c] sm:$0xf]
        %v1435 = vld [vmem:[#allocation2 + $0x84] sm:$0xf]
        %v1436 = vld [vmem:[#allocation2 + $0x88] sm:$0xf]
        %v1437 = vld [vmem:[#allocation2 + $0x90] sm:$0xf]
        %v1438 = vld [vmem:[#allocation2 + $0x94] sm:$0xf]
        %v1439 = vld [vmem:[#allocation2 + $0x9c] sm:$0xf]
        %v1440 = vld [vmem:[#allocation2 + $0xa0] sm:$0xf]
        %v1441 = vld [vmem:[#allocation2 + $0xa8] sm:$0xf]
        %v1442 = vld [vmem:[#allocation2 + $0xac] sm:$0xf]
        %v1443 = vld [vmem:[#allocation2 + $0xb4] sm:$0xf]
        %v1444 = vld [vmem:[#allocation2 + $0xb8] sm:$0xf]
        %v1445 = vld [vmem:[%s4] sm:$0xf]
        %v1446 = vld [vmem:[%s4 + $0x4] sm:$0xf]
        %v1447 = vld [vmem:[%s4 + $0x8] sm:$0xf]
        %v1448 = vld [vmem:[%s4 + $0xc] sm:$0xf]
        %v1449 = vld [vmem:[%s4 + $0x10] sm:$0xf]
        %v1450 = vld [vmem:[%s4 + $0x14] sm:$0xf]
        %v1451 = vld [vmem:[%s4 + $0x18] sm:$0xf]
        %v1452 = vld [vmem:[%s4 + $0x1c] sm:$0xf]
        %v1453 = vld [vmem:[%s4 + $0x20] sm:$0xf]
        %v1454 = vld [vmem:[%s4 + $0x24] sm:$0xf]
        %v1455 = vld [vmem:[%s4 + $0x28] sm:$0xf]
        %v1456 = vld [vmem:[%s4 + $0x2c] sm:$0xf]
        %v1457 = vld [vmem:[%s4 + $0x30] sm:$0xf]
        %v1458 = vld [vmem:[%s4 + $0x34] sm:$0xf]
        %v1459 = vld [vmem:[%s4 + $0x38] sm:$0xf]
        %v1460 = vld [vmem:[%s4 + $0x3c] sm:$0xf]
        %v1461 = vld [vmem:[#allocation2 + $0x8] sm:$0x1]
        %v1462 = vld [vmem:[#allocation2 + $0x14] sm:$0x1]
        %v1463 = vld [vmem:[#allocation2 + $0x20] sm:$0x1]
        %v1464 = vld [vmem:[#allocation2 + $0x2c] sm:$0x1]
        %v1465 = vld [vmem:[#allocation2 + $0x38] sm:$0x1]
        %v1466 = vld [vmem:[#allocation2 + $0x44] sm:$0x1]
        %v1467 = vld [vmem:[#allocation2 + $0x50] sm:$0x1]
        %v1468 = vld [vmem:[#allocation2 + $0x5c] sm:$0x1]
        %v1469 = vld [vmem:[#allocation2 + $0x68] sm:$0x1]
        %v1470 = vld [vmem:[#allocation2 + $0x74] sm:$0x1]
        %v1471 = vld [vmem:[#allocation2 + $0x80] sm:$0x1]
        %v1472 = vld [vmem:[#allocation2 + $0x8c] sm:$0x1]
        %v1473 = vld [vmem:[#allocation2 + $0x98] sm:$0x1]
        %v1474 = vld [vmem:[#allocation2 + $0xa4] sm:$0x1]
        %v1475 = vld [vmem:[#allocation2 + $0xb0] sm:$0x1]
        %v1476 = vld [vmem:[#allocation2 + $0xbc] sm:$0x1]
        %vm1477 = vsmask.f32 3328
        %vm1478 = vsmask.f32 7440
        %vm1479 = vmor %vm1477, %vm1478
        %v1481 = vshrl.u32 %v1413, 16
        %v1483 = vrot.slane %v1481, 4
        %v1484 = vshll.u32 %v1413, 16
        %v1486 = vrot.slane %v1484, 5
        %v1487 = vor.u32 %v1483, %v1486
        %v1488 = vrot.slane %v1487, 4
        %v1490 = vshll.u32 %v1414, 16
        %v1492 = vrot.slane %v1490, 5
        %v1493 = vsel %vm1479, %v1488, %v1492
        %v1494 = vshrl.u32 %v1414, 16
        %v1496 = vrot.slane %v1494, 4
        %v1497 = vor.u32 %v1496, %v1492
        %v1498 = vrot.slane %v1497, 4
        %v1500 = vshll.u32 %v1461, 16
        %v1502 = vrot.slane %v1500, 5
        %v1503 = vsel %vm1479, %v1498, %v1502
        %v1505 = vshrl.u32 %v1415, 16
        %v1507 = vrot.slane %v1505, 4
        %v1508 = vshll.u32 %v1415, 16
        %v1510 = vrot.slane %v1508, 5
        %v1511 = vor.u32 %v1507, %v1510
        %v1512 = vrot.slane %v1511, 4
        %v1514 = vshll.u32 %v1416, 16
        %v1516 = vrot.slane %v1514, 5
        %v1517 = vsel %vm1479, %v1512, %v1516
        %v1518 = vshrl.u32 %v1416, 16
        %v1520 = vrot.slane %v1518, 4
        %v1521 = vor.u32 %v1520, %v1516
        %v1522 = vrot.slane %v1521, 4
        %v1524 = vshll.u32 %v1462, 16
        %v1526 = vrot.slane %v1524, 5
        %v1527 = vsel %vm1479, %v1522, %v1526
        %v1529 = vshrl.u32 %v1417, 16
        %v1531 = vrot.slane %v1529, 4
        %v1532 = vshll.u32 %v1417, 16
        %v1534 = vrot.slane %v1532, 5
        %v1535 = vor.u32 %v1531, %v1534
        %v1536 = vrot.slane %v1535, 4
        %v1538 = vshll.u32 %v1418, 16
        %v1540 = vrot.slane %v1538, 5
        %v1541 = vsel %vm1479, %v1536, %v1540
        %v1542 = vshrl.u32 %v1418, 16
        %v1544 = vrot.slane %v1542, 4
        %v1545 = vor.u32 %v1544, %v1540
        %v1546 = vrot.slane %v1545, 4
        %v1548 = vshll.u32 %v1463, 16
        %v1550 = vrot.slane %v1548, 5
        %v1551 = vsel %vm1479, %v1546, %v1550
        %v1553 = vshrl.u32 %v1419, 16
        %v1555 = vrot.slane %v1553, 4
        %v1556 = vshll.u32 %v1419, 16
        %v1558 = vrot.slane %v1556, 5
        %v1559 = vor.u32 %v1555, %v1558
        %v1560 = vrot.slane %v1559, 4
        %v1562 = vshll.u32 %v1420, 16
        %v1564 = vrot.slane %v1562, 5
        %v1565 = vsel %vm1479, %v1560, %v1564
        %v1566 = vshrl.u32 %v1420, 16
        %v1568 = vrot.slane %v1566, 4
        %v1569 = vor.u32 %v1568, %v1564
        %v1570 = vrot.slane %v1569, 4
        %v1572 = vshll.u32 %v1464, 16
        %v1574 = vrot.slane %v1572, 5
        %v1575 = vsel %vm1479, %v1570, %v1574
        %v1577 = vshrl.u32 %v1421, 16
        %v1579 = vrot.slane %v1577, 4
        %v1580 = vshll.u32 %v1421, 16
        %v1582 = vrot.slane %v1580, 5
        %v1583 = vor.u32 %v1579, %v1582
        %v1584 = vrot.slane %v1583, 4
        %v1586 = vshll.u32 %v1422, 16
        %v1588 = vrot.slane %v1586, 5
        %v1589 = vsel %vm1479, %v1584, %v1588
        %v1590 = vshrl.u32 %v1422, 16
        %v1592 = vrot.slane %v1590, 4
        %v1593 = vor.u32 %v1592, %v1588
        %v1594 = vrot.slane %v1593, 4
        %v1596 = vshll.u32 %v1465, 16
        %v1598 = vrot.slane %v1596, 5
        %v1599 = vsel %vm1479, %v1594, %v1598
        %v1601 = vshrl.u32 %v1423, 16
        %v1603 = vrot.slane %v1601, 4
        %v1604 = vshll.u32 %v1423, 16
        %v1606 = vrot.slane %v1604, 5
        %v1607 = vor.u32 %v1603, %v1606
        %v1608 = vrot.slane %v1607, 4
        %v1610 = vshll.u32 %v1424, 16
        %v1612 = vrot.slane %v1610, 5
        %v1613 = vsel %vm1479, %v1608, %v1612
        %v1614 = vshrl.u32 %v1424, 16
        %v1616 = vrot.slane %v1614, 4
        %v1617 = vor.u32 %v1616, %v1612
        %v1618 = vrot.slane %v1617, 4
        %v1620 = vshll.u32 %v1466, 16
        %v1622 = vrot.slane %v1620, 5
        %v1623 = vsel %vm1479, %v1618, %v1622
        %v1625 = vshrl.u32 %v1425, 16
        %v1627 = vrot.slane %v1625, 4
        %v1628 = vshll.u32 %v1425, 16
        %v1630 = vrot.slane %v1628, 5
        %v1631 = vor.u32 %v1627, %v1630
        %v1632 = vrot.slane %v1631, 4
        %v1634 = vshll.u32 %v1426, 16
        %v1636 = vrot.slane %v1634, 5
        %v1637 = vsel %vm1479, %v1632, %v1636
        %v1638 = vshrl.u32 %v1426, 16
        %v1640 = vrot.slane %v1638, 4
        %v1641 = vor.u32 %v1640, %v1636
        %v1642 = vrot.slane %v1641, 4
        %v1644 = vshll.u32 %v1467, 16
        %v1646 = vrot.slane %v1644, 5
        %v1647 = vsel %vm1479, %v1642, %v1646
        %v1649 = vshrl.u32 %v1427, 16
        %v1651 = vrot.slane %v1649, 4
        %v1652 = vshll.u32 %v1427, 16
        %v1654 = vrot.slane %v1652, 5
        %v1655 = vor.u32 %v1651, %v1654
        %v1656 = vrot.slane %v1655, 4
        %v1658 = vshll.u32 %v1428, 16
        %v1660 = vrot.slane %v1658, 5
        %v1661 = vsel %vm1479, %v1656, %v1660
        %v1662 = vshrl.u32 %v1428, 16
        %v1664 = vrot.slane %v1662, 4
        %v1665 = vor.u32 %v1664, %v1660
        %v1666 = vrot.slane %v1665, 4
        %v1668 = vshll.u32 %v1468, 16
        %v1670 = vrot.slane %v1668, 5
        %v1671 = vsel %vm1479, %v1666, %v1670
        %v1673 = vshrl.u32 %v1429, 16
        %v1675 = vrot.slane %v1673, 4
        %v1676 = vshll.u32 %v1429, 16
        %v1678 = vrot.slane %v1676, 5
        %v1679 = vor.u32 %v1675, %v1678
        %v1680 = vrot.slane %v1679, 4
        %v1682 = vshll.u32 %v1430, 16
        %v1684 = vrot.slane %v1682, 5
        %v1685 = vsel %vm1479, %v1680, %v1684
        %v1686 = vshrl.u32 %v1430, 16
        %v1688 = vrot.slane %v1686, 4
        %v1689 = vor.u32 %v1688, %v1684
        %v1690 = vrot.slane %v1689, 4
        %v1692 = vshll.u32 %v1469, 16
        %v1694 = vrot.slane %v1692, 5
        %v1695 = vsel %vm1479, %v1690, %v1694
        %v1697 = vshrl.u32 %v1431, 16
        %v1699 = vrot.slane %v1697, 4
        %v1700 = vshll.u32 %v1431, 16
        %v1702 = vrot.slane %v1700, 5
        %v1703 = vor.u32 %v1699, %v1702
        %v1704 = vrot.slane %v1703, 4
        %v1706 = vshll.u32 %v1432, 16
        %v1708 = vrot.slane %v1706, 5
        %v1709 = vsel %vm1479, %v1704, %v1708
        %v1710 = vshrl.u32 %v1432, 16
        %v1712 = vrot.slane %v1710, 4
        %v1713 = vor.u32 %v1712, %v1708
        %v1714 = vrot.slane %v1713, 4
        %v1716 = vshll.u32 %v1470, 16
        %v1718 = vrot.slane %v1716, 5
        %v1719 = vsel %vm1479, %v1714, %v1718
        %v1721 = vshrl.u32 %v1433, 16
        %v1723 = vrot.slane %v1721, 4
        %v1724 = vshll.u32 %v1433, 16
        %v1726 = vrot.slane %v1724, 5
        %v1727 = vor.u32 %v1723, %v1726
        %v1728 = vrot.slane %v1727, 4
        %v1730 = vshll.u32 %v1434, 16
        %v1732 = vrot.slane %v1730, 5
        %v1733 = vsel %vm1479, %v1728, %v1732
        %v1734 = vshrl.u32 %v1434, 16
        %v1736 = vrot.slane %v1734, 4
        %v1737 = vor.u32 %v1736, %v1732
        %v1738 = vrot.slane %v1737, 4
        %v1740 = vshll.u32 %v1471, 16
        %v1742 = vrot.slane %v1740, 5
        %v1743 = vsel %vm1479, %v1738, %v1742
        %v1745 = vshrl.u32 %v1435, 16
        %v1747 = vrot.slane %v1745, 4
        %v1748 = vshll.u32 %v1435, 16
        %v1750 = vrot.slane %v1748, 5
        %v1751 = vor.u32 %v1747, %v1750
        %v1752 = vrot.slane %v1751, 4
        %v1754 = vshll.u32 %v1436, 16
        %v1756 = vrot.slane %v1754, 5
        %v1757 = vsel %vm1479, %v1752, %v1756
        %v1758 = vshrl.u32 %v1436, 16
        %v1760 = vrot.slane %v1758, 4
        %v1761 = vor.u32 %v1760, %v1756
        %v1762 = vrot.slane %v1761, 4
        %v1764 = vshll.u32 %v1472, 16
        %v1766 = vrot.slane %v1764, 5
        %v1767 = vsel %vm1479, %v1762, %v1766
        %v1769 = vshrl.u32 %v1437, 16
        %v1771 = vrot.slane %v1769, 4
        %v1772 = vshll.u32 %v1437, 16
        %v1774 = vrot.slane %v1772, 5
        %v1775 = vor.u32 %v1771, %v1774
        %v1776 = vrot.slane %v1775, 4
        %v1778 = vshll.u32 %v1438, 16
        %v1780 = vrot.slane %v1778, 5
        %v1781 = vsel %vm1479, %v1776, %v1780
        %v1782 = vshrl.u32 %v1438, 16
        %v1784 = vrot.slane %v1782, 4
        %v1785 = vor.u32 %v1784, %v1780
        %v1786 = vrot.slane %v1785, 4
        %v1788 = vshll.u32 %v1473, 16
        %v1790 = vrot.slane %v1788, 5
        %v1791 = vsel %vm1479, %v1786, %v1790
        %v1793 = vshrl.u32 %v1439, 16
        %v1795 = vrot.slane %v1793, 4
        %v1796 = vshll.u32 %v1439, 16
        %v1798 = vrot.slane %v1796, 5
        %v1799 = vor.u32 %v1795, %v1798
        %v1800 = vrot.slane %v1799, 4
        %v1802 = vshll.u32 %v1440, 16
        %v1804 = vrot.slane %v1802, 5
        %v1805 = vsel %vm1479, %v1800, %v1804
        %v1806 = vshrl.u32 %v1440, 16
        %v1808 = vrot.slane %v1806, 4
        %v1809 = vor.u32 %v1808, %v1804
        %v1810 = vrot.slane %v1809, 4
        %v1812 = vshll.u32 %v1474, 16
        %v1814 = vrot.slane %v1812, 5
        %v1815 = vsel %vm1479, %v1810, %v1814
        %v1817 = vshrl.u32 %v1441, 16
        %v1819 = vrot.slane %v1817, 4
        %v1820 = vshll.u32 %v1441, 16
        %v1822 = vrot.slane %v1820, 5
        %v1823 = vor.u32 %v1819, %v1822
        %v1824 = vrot.slane %v1823, 4
        %v1826 = vshll.u32 %v1442, 16
        %v1828 = vrot.slane %v1826, 5
        %v1829 = vsel %vm1479, %v1824, %v1828
        %v1830 = vshrl.u32 %v1442, 16
        %v1832 = vrot.slane %v1830, 4
        %v1833 = vor.u32 %v1832, %v1828
        %v1834 = vrot.slane %v1833, 4
        %v1836 = vshll.u32 %v1475, 16
        %v1838 = vrot.slane %v1836, 5
        %v1839 = vsel %vm1479, %v1834, %v1838
        %v1841 = vshrl.u32 %v1443, 16
        %v1843 = vrot.slane %v1841, 4
        %v1844 = vshll.u32 %v1443, 16
        %v1846 = vrot.slane %v1844, 5
        %v1847 = vor.u32 %v1843, %v1846
        %v1848 = vrot.slane %v1847, 4
        %v1850 = vshll.u32 %v1444, 16
        %v1852 = vrot.slane %v1850, 5
        %v1853 = vsel %vm1479, %v1848, %v1852
        %v1854 = vshrl.u32 %v1444, 16
        %v1856 = vrot.slane %v1854, 4
        %v1857 = vor.u32 %v1856, %v1852
        %v1858 = vrot.slane %v1857, 4
        %v1860 = vshll.u32 %v1476, 16
        %v1862 = vrot.slane %v1860, 5
        %v1863 = vsel %vm1479, %v1858, %v1862
        %s1864 = scalar_lea.vmem %s4, 64
        %v1865 = vld [vmem:[%s1864] sm:$0xf]
        %v1866 = vld [vmem:[%s1864 + $0x4] sm:$0xf]
        %v1867 = vld [vmem:[%s1864 + $0x8] sm:$0xf]
        %v1868 = vld [vmem:[%s1864 + $0xc] sm:$0xf]
        %v1869 = vld [vmem:[%s1864 + $0x10] sm:$0xf]
        %v1870 = vld [vmem:[%s1864 + $0x14] sm:$0xf]
        %v1871 = vld [vmem:[%s1864 + $0x18] sm:$0xf]
        %v1872 = vld [vmem:[%s1864 + $0x1c] sm:$0xf]
        %v1873 = vld [vmem:[%s1864 + $0x20] sm:$0xf]
        %v1874 = vld [vmem:[%s1864 + $0x24] sm:$0xf]
        %v1875 = vld [vmem:[%s1864 + $0x28] sm:$0xf]
        %v1876 = vld [vmem:[%s1864 + $0x2c] sm:$0xf]
        %v1877 = vld [vmem:[%s1864 + $0x30] sm:$0xf]
        %v1878 = vld [vmem:[%s1864 + $0x34] sm:$0xf]
        %v1879 = vld [vmem:[%s1864 + $0x38] sm:$0xf]
        %v1880 = vld [vmem:[%s1864 + $0x3c] sm:$0xf]
        %v1881 = vunpack.c.l.b16 %v1493
        %v1882 = vunpack.c.l.b16 %v1503
        %v1883 = vunpack.c.l.b16 %v1517
        %v1884 = vunpack.c.l.b16 %v1527
        %v1885 = vunpack.c.l.b16 %v1541
        %v1886 = vunpack.c.l.b16 %v1551
        %v1887 = vunpack.c.l.b16 %v1565
        %v1888 = vunpack.c.l.b16 %v1575
        %v1889 = vunpack.c.l.b16 %v1589
        %v1890 = vunpack.c.l.b16 %v1599
        %v1891 = vunpack.c.l.b16 %v1613
        %v1892 = vunpack.c.l.b16 %v1623
        %v1893 = vunpack.c.l.b16 %v1637
        %v1894 = vunpack.c.l.b16 %v1647
        %v1895 = vunpack.c.l.b16 %v1661
        %v1896 = vunpack.c.l.b16 %v1671
        %v1897 = vunpack.c.l.b16 %v1685
        %v1898 = vunpack.c.l.b16 %v1695
        %v1899 = vunpack.c.l.b16 %v1709
        %v1900 = vunpack.c.l.b16 %v1719
        %v1901 = vunpack.c.l.b16 %v1733
        %v1902 = vunpack.c.l.b16 %v1743
        %v1903 = vunpack.c.l.b16 %v1757
        %v1904 = vunpack.c.l.b16 %v1767
        %v1905 = vunpack.c.l.b16 %v1781
        %v1906 = vunpack.c.l.b16 %v1791
        %v1907 = vunpack.c.l.b16 %v1805
        %v1908 = vunpack.c.l.b16 %v1815
        %v1909 = vunpack.c.l.b16 %v1829
        %v1910 = vunpack.c.l.b16 %v1839
        %v1911 = vunpack.c.l.b16 %v1853
        %v1912 = vunpack.c.l.b16 %v1863
        %v1913 = vpack.c.b16 %v1882, %v1881
        %v1914 = vpack.c.b16 %v1884, %v1883
        %v1915 = vpack.c.b16 %v1886, %v1885
        %v1916 = vpack.c.b16 %v1888, %v1887
        %v1917 = vpack.c.b16 %v1890, %v1889
        %v1918 = vpack.c.b16 %v1892, %v1891
        %v1919 = vpack.c.b16 %v1894, %v1893
        %v1920 = vpack.c.b16 %v1896, %v1895
        %v1921 = vpack.c.b16 %v1898, %v1897
        %v1922 = vpack.c.b16 %v1900, %v1899
        %v1923 = vpack.c.b16 %v1902, %v1901
        %v1924 = vpack.c.b16 %v1904, %v1903
        %v1925 = vpack.c.b16 %v1906, %v1905
        %v1926 = vpack.c.b16 %v1908, %v1907
        %v1927 = vpack.c.b16 %v1910, %v1909
        %v1928 = vpack.c.b16 %v1912, %v1911
        %v1961 = vunpack.c.l.b16 %v1865
        %v1962 = vunpack.c.l.b16 %v1866
        %v1963 = vunpack.c.l.b16 %v1867
        %v1964 = vunpack.c.l.b16 %v1868
        %v1965 = vunpack.c.l.b16 %v1869
        %v1966 = vunpack.c.l.b16 %v1870
        %v1967 = vunpack.c.l.b16 %v1871
        %v1968 = vunpack.c.l.b16 %v1872
        %v1969 = vunpack.c.l.b16 %v1873
        %v1970 = vunpack.c.l.b16 %v1874
        %v1971 = vunpack.c.l.b16 %v1875
        %v1972 = vunpack.c.l.b16 %v1876
        %v1973 = vunpack.c.l.b16 %v1877
        %v1974 = vunpack.c.l.b16 %v1878
        %v1975 = vunpack.c.l.b16 %v1879
        %v1976 = vunpack.c.l.b16 %v1880
        %v1977 = vpack.c.b16 %v1962, %v1961
        %v1978 = vpack.c.b16 %v1964, %v1963
        %v1979 = vpack.c.b16 %v1966, %v1965
        %v1980 = vpack.c.b16 %v1968, %v1967
        %v1981 = vpack.c.b16 %v1970, %v1969
        %v1982 = vpack.c.b16 %v1972, %v1971
        %v1983 = vpack.c.b16 %v1974, %v1973
        %v1984 = vpack.c.b16 %v1976, %v1975
        %1993 = vmatprep.subr.bf16.mxu0 0
        %1994 = vmatpush1.bf16.msra.mxu0 %v1977
        %1995 = vmatprep.subr.bf16.mxu0 0
        %1996 = vmatpush1.bf16.msra.mxu0 %v1978
        %1997 = vmatprep.subr.bf16.mxu0 0
        %1998 = vmatpush1.bf16.msra.mxu0 %v1979
        %1999 = vmatprep.subr.bf16.mxu0 0
        %2000 = vmatpush1.bf16.msra.mxu0 %v1980
        %2001 = vmatprep.subr.bf16.mxu0 0
        %2002 = vmatpush1.bf16.msra.mxu0 %v1981
        %2003 = vmatprep.subr.bf16.mxu0 0
        %2004 = vmatpush1.bf16.msra.mxu0 %v1982
        %2005 = vmatprep.subr.bf16.mxu0 0
        %2006 = vmatpush1.bf16.msra.mxu0 %v1983
        %2007 = vmatprep.subr.bf16.mxu0 0
        %2008 = vmatpush1.bf16.msra.mxu0 %v1984
        %2009 = vmatprep.subr.bf16.mxu0 0
        %2010 = vmatpush1.bf16.msra.mxu0 0
        %2011 = vmatprep.subr.bf16.mxu0 0
        %2012 = vmatpush1.bf16.msra.mxu0 0
        %2013 = vmatprep.subr.bf16.mxu0 0
        %2014 = vmatpush1.bf16.msra.mxu0 0
        %2015 = vmatprep.subr.bf16.mxu0 0
        %2016 = vmatpush1.bf16.msra.mxu0 0
        %2017 = vmatprep.subr.bf16.mxu0 0
        %2018 = vmatpush1.bf16.msra.mxu0 0
        %2019 = vmatprep.subr.bf16.mxu0 0
        %2020 = vmatpush1.bf16.msra.mxu0 0
        %2021 = vmatprep.subr.bf16.mxu0 0
        %2022 = vmatpush1.bf16.msra.mxu0 0
        %2023 = vmatprep.subr.bf16.mxu0 0
        %2024 = vmatpush1.bf16.msra.mxu0 0
        %2025 = vmatprep.mubr.bf16.mxu0 0
        %2026 = vmatmul.mubr.bf16.gmra.mrb[0].mxu0 %v1913
        %v2027 = vpop.f32.mrb[0].mxu0
        %v2028 = vadd.f32 0.0, %v2027
        %v2029 = vpop.f32.mrb[0].mxu0
        %v2030 = vpop.f32.mrb[0].mxu0
        %v2031 = vadd.f32 0.0, %v2030
        %v2032 = vpop.f32.mrb[0].mxu0
        %2033 = vmatprep.mubr.bf16.mxu0 0
        %2034 = vmatmul.mubr.bf16.gmra.mrb[0].mxu0 %v1914
        %v2035 = vpop.f32.mrb[0].mxu0
        %v2036 = vadd.f32 0.0, %v2035
        %v2037 = vpop.f32.mrb[0].mxu0
        %v2038 = vpop.f32.mrb[0].mxu0
        %v2039 = vadd.f32 0.0, %v2038
        %v2040 = vpop.f32.mrb[0].mxu0
        %2041 = vmatprep.mubr.bf16.mxu0 0
        %2042 = vmatmul.mubr.bf16.gmra.mrb[0].mxu0 %v1915
        %v2043 = vpop.f32.mrb[0].mxu0
        %v2044 = vadd.f32 0.0, %v2043
        %v2045 = vpop.f32.mrb[0].mxu0
        %v2046 = vpop.f32.mrb[0].mxu0
        %v2047 = vadd.f32 0.0, %v2046
        %v2048 = vpop.f32.mrb[0].mxu0
        %2049 = vmatprep.mubr.bf16.mxu0 0
        %2050 = vmatmul.mubr.bf16.gmra.mrb[0].mxu0 %v1916
        %v2051 = vpop.f32.mrb[0].mxu0
        %v2052 = vadd.f32 0.0, %v2051
        %v2053 = vpop.f32.mrb[0].mxu0
        %v2054 = vpop.f32.mrb[0].mxu0
        %v2055 = vadd.f32 0.0, %v2054
        %v2056 = vpop.f32.mrb[0].mxu0
        %2057 = vmatprep.mubr.bf16.mxu0 0
        %2058 = vmatmul.mubr.bf16.gmra.mrb[0].mxu0 %v1917
        %v2059 = vpop.f32.mrb[0].mxu0
        %v2060 = vadd.f32 0.0, %v2059
        %v2061 = vpop.f32.mrb[0].mxu0
        %v2062 = vpop.f32.mrb[0].mxu0
        %v2063 = vadd.f32 0.0, %v2062
        %v2064 = vpop.f32.mrb[0].mxu0
        %2065 = vmatprep.mubr.bf16.mxu0 0
        %2066 = vmatmul.mubr.bf16.gmra.mrb[0].mxu0 %v1918
        %v2067 = vpop.f32.mrb[0].mxu0
        %v2068 = vadd.f32 0.0, %v2067
        %v2069 = vpop.f32.mrb[0].mxu0
        %v2070 = vpop.f32.mrb[0].mxu0
        %v2071 = vadd.f32 0.0, %v2070
        %v2072 = vpop.f32.mrb[0].mxu0
        %2073 = vmatprep.mubr.bf16.mxu0 0
        %2074 = vmatmul.mubr.bf16.gmra.mrb[0].mxu0 %v1919
        %v2075 = vpop.f32.mrb[0].mxu0
        %v2076 = vadd.f32 0.0, %v2075
        %v2077 = vpop.f32.mrb[0].mxu0
        %v2078 = vpop.f32.mrb[0].mxu0
        %v2079 = vadd.f32 0.0, %v2078
        %v2080 = vpop.f32.mrb[0].mxu0
        %2081 = vmatprep.mubr.bf16.mxu0 0
        %2082 = vmatmul.mubr.bf16.gmra.mrb[0].mxu0 %v1920
        %v2083 = vpop.f32.mrb[0].mxu0
        %v2084 = vadd.f32 0.0, %v2083
        %v2085 = vpop.f32.mrb[0].mxu0
        %v2086 = vpop.f32.mrb[0].mxu0
        %v2087 = vadd.f32 0.0, %v2086
        %v2088 = vpop.f32.mrb[0].mxu0
        %2089 = vmatprep.mubr.bf16.mxu0 0
        %2090 = vmatmul.mubr.bf16.gmra.mrb[0].mxu0 %v1921
        %v2091 = vpop.f32.mrb[0].mxu0
        %v2092 = vadd.f32 0.0, %v2091
        %v2093 = vpop.f32.mrb[0].mxu0
        %v2094 = vpop.f32.mrb[0].mxu0
        %v2095 = vadd.f32 0.0, %v2094
        %v2096 = vpop.f32.mrb[0].mxu0
        %2097 = vmatprep.mubr.bf16.mxu0 0
        %2098 = vmatmul.mubr.bf16.gmra.mrb[0].mxu0 %v1922
        %v2099 = vpop.f32.mrb[0].mxu0
        %v2100 = vadd.f32 0.0, %v2099
        %v2101 = vpop.f32.mrb[0].mxu0
        %v2102 = vpop.f32.mrb[0].mxu0
        %v2103 = vadd.f32 0.0, %v2102
        %v2104 = vpop.f32.mrb[0].mxu0
        %2105 = vmatprep.mubr.bf16.mxu0 0
        %2106 = vmatmul.mubr.bf16.gmra.mrb[0].mxu0 %v1923
        %v2107 = vpop.f32.mrb[0].mxu0
        %v2108 = vadd.f32 0.0, %v2107
        %v2109 = vpop.f32.mrb[0].mxu0
        %v2110 = vpop.f32.mrb[0].mxu0
        %v2111 = vadd.f32 0.0, %v2110
        %v2112 = vpop.f32.mrb[0].mxu0
        %2113 = vmatprep.mubr.bf16.mxu0 0
        %2114 = vmatmul.mubr.bf16.gmra.mrb[0].mxu0 %v1924
        %v2115 = vpop.f32.mrb[0].mxu0
        %v2116 = vadd.f32 0.0, %v2115
        %v2117 = vpop.f32.mrb[0].mxu0
        %v2118 = vpop.f32.mrb[0].mxu0
        %v2119 = vadd.f32 0.0, %v2118
        %v2120 = vpop.f32.mrb[0].mxu0
        %2121 = vmatprep.mubr.bf16.mxu0 0
        %2122 = vmatmul.mubr.bf16.gmra.mrb[0].mxu0 %v1925
        %v2123 = vpop.f32.mrb[0].mxu0
        %v2124 = vadd.f32 0.0, %v2123
        %v2125 = vpop.f32.mrb[0].mxu0
        %v2126 = vpop.f32.mrb[0].mxu0
        %v2127 = vadd.f32 0.0, %v2126
        %v2128 = vpop.f32.mrb[0].mxu0
        %2129 = vmatprep.mubr.bf16.mxu0 0
        %2130 = vmatmul.mubr.bf16.gmra.mrb[0].mxu0 %v1926
        %v2131 = vpop.f32.mrb[0].mxu0
        %v2132 = vadd.f32 0.0, %v2131
        %v2133 = vpop.f32.mrb[0].mxu0
        %v2134 = vpop.f32.mrb[0].mxu0
        %v2135 = vadd.f32 0.0, %v2134
        %v2136 = vpop.f32.mrb[0].mxu0
        %2137 = vmatprep.mubr.bf16.mxu0 0
        %2138 = vmatmul.mubr.bf16.gmra.mrb[0].mxu0 %v1927
        %v2139 = vpop.f32.mrb[0].mxu0
        %v2140 = vadd.f32 0.0, %v2139
        %v2141 = vpop.f32.mrb[0].mxu0
        %v2142 = vpop.f32.mrb[0].mxu0
        %v2143 = vadd.f32 0.0, %v2142
        %v2144 = vpop.f32.mrb[0].mxu0
        %2145 = vmatprep.mubr.bf16.mxu0 0
        %2146 = vmatmul.mubr.bf16.gmra.mrb[0].mxu0 %v1928
        %v2147 = vpop.f32.mrb[0].mxu0
        %v2148 = vadd.f32 0.0, %v2147
        %v2149 = vpop.f32.mrb[0].mxu0
        %v2150 = vpop.f32.mrb[0].mxu0
        %v2151 = vadd.f32 0.0, %v2150
        %v2152 = vpop.f32.mrb[0].mxu0
        %2153 = vdwg.mxu0
        %v2186 = vunpack.c.l.b16 %v1413
        %v2187 = vunpack.c.l.b16 %v1414
        %v2188 = vunpack.c.l.b16 %v1415
        %v2189 = vunpack.c.l.b16 %v1416
        %v2190 = vunpack.c.l.b16 %v1417
        %v2191 = vunpack.c.l.b16 %v1418
        %v2192 = vunpack.c.l.b16 %v1419
        %v2193 = vunpack.c.l.b16 %v1420
        %v2194 = vunpack.c.l.b16 %v1421
        %v2195 = vunpack.c.l.b16 %v1422
        %v2196 = vunpack.c.l.b16 %v1423
        %v2197 = vunpack.c.l.b16 %v1424
        %v2198 = vunpack.c.l.b16 %v1425
        %v2199 = vunpack.c.l.b16 %v1426
        %v2200 = vunpack.c.l.b16 %v1427
        %v2201 = vunpack.c.l.b16 %v1428
        %v2202 = vunpack.c.l.b16 %v1429
        %v2203 = vunpack.c.l.b16 %v1430
        %v2204 = vunpack.c.l.b16 %v1431
        %v2205 = vunpack.c.l.b16 %v1432
        %v2206 = vunpack.c.l.b16 %v1433
        %v2207 = vunpack.c.l.b16 %v1434
        %v2208 = vunpack.c.l.b16 %v1435
        %v2209 = vunpack.c.l.b16 %v1436
        %v2210 = vunpack.c.l.b16 %v1437
        %v2211 = vunpack.c.l.b16 %v1438
        %v2212 = vunpack.c.l.b16 %v1439
        %v2213 = vunpack.c.l.b16 %v1440
        %v2214 = vunpack.c.l.b16 %v1441
        %v2215 = vunpack.c.l.b16 %v1442
        %v2216 = vunpack.c.l.b16 %v1443
        %v2217 = vunpack.c.l.b16 %v1444
        %v2218 = vpack.c.b16 %v2187, %v2186
        %v2219 = vpack.c.b16 %v2189, %v2188
        %v2220 = vpack.c.b16 %v2191, %v2190
        %v2221 = vpack.c.b16 %v2193, %v2192
        %v2222 = vpack.c.b16 %v2195, %v2194
        %v2223 = vpack.c.b16 %v2197, %v2196
        %v2224 = vpack.c.b16 %v2199, %v2198
        %v2225 = vpack.c.b16 %v2201, %v2200
        %v2226 = vpack.c.b16 %v2203, %v2202
        %v2227 = vpack.c.b16 %v2205, %v2204
        %v2228 = vpack.c.b16 %v2207, %v2206
        %v2229 = vpack.c.b16 %v2209, %v2208
        %v2230 = vpack.c.b16 %v2211, %v2210
        %v2231 = vpack.c.b16 %v2213, %v2212
        %v2232 = vpack.c.b16 %v2215, %v2214
        %v2233 = vpack.c.b16 %v2217, %v2216
        %v2266 = vunpack.c.l.b16 %v1445
        %v2267 = vunpack.c.l.b16 %v1446
        %v2268 = vunpack.c.l.b16 %v1447
        %v2269 = vunpack.c.l.b16 %v1448
        %v2270 = vunpack.c.l.b16 %v1449
        %v2271 = vunpack.c.l.b16 %v1450
        %v2272 = vunpack.c.l.b16 %v1451
        %v2273 = vunpack.c.l.b16 %v1452
        %v2274 = vunpack.c.l.b16 %v1453
        %v2275 = vunpack.c.l.b16 %v1454
        %v2276 = vunpack.c.l.b16 %v1455
        %v2277 = vunpack.c.l.b16 %v1456
        %v2278 = vunpack.c.l.b16 %v1457
        %v2279 = vunpack.c.l.b16 %v1458
        %v2280 = vunpack.c.l.b16 %v1459
        %v2281 = vunpack.c.l.b16 %v1460
        %v2282 = vpack.c.b16 %v2267, %v2266
        %v2283 = vpack.c.b16 %v2269, %v2268
        %v2284 = vpack.c.b16 %v2271, %v2270
        %v2285 = vpack.c.b16 %v2273, %v2272
        %v2286 = vpack.c.b16 %v2275, %v2274
        %v2287 = vpack.c.b16 %v2277, %v2276
        %v2288 = vpack.c.b16 %v2279, %v2278
        %v2289 = vpack.c.b16 %v2281, %v2280
        %2298 = vmatprep.subr.bf16.mxu0 0
        %2299 = vmatpush1.bf16.msra.mxu0 %v2282
        %2300 = vmatprep.subr.bf16.mxu0 0
        %2301 = vmatpush1.bf16.msra.mxu0 %v2283
        %2302 = vmatprep.subr.bf16.mxu0 0
        %2303 = vmatpush1.bf16.msra.mxu0 %v2284
        %2304 = vmatprep.subr.bf16.mxu0 0
        %2305 = vmatpush1.bf16.msra.mxu0 %v2285
        %2306 = vmatprep.subr.bf16.mxu0 0
        %2307 = vmatpush1.bf16.msra.mxu0 %v2286
        %2308 = vmatprep.subr.bf16.mxu0 0
        %2309 = vmatpush1.bf16.msra.mxu0 %v2287
        %2310 = vmatprep.subr.bf16.mxu0 0
        %2311 = vmatpush1.bf16.msra.mxu0 %v2288
        %2312 = vmatprep.subr.bf16.mxu0 0
        %2313 = vmatpush1.bf16.msra.mxu0 %v2289
        %2314 = vmatprep.subr.bf16.mxu0 0
        %2315 = vmatpush1.bf16.msra.mxu0 0
        %2316 = vmatprep.subr.bf16.mxu0 0
        %2317 = vmatpush1.bf16.msra.mxu0 0
        %2318 = vmatprep.subr.bf16.mxu0 0
        %2319 = vmatpush1.bf16.msra.mxu0 0
        %2320 = vmatprep.subr.bf16.mxu0 0
        %2321 = vmatpush1.bf16.msra.mxu0 0
        %2322 = vmatprep.subr.bf16.mxu0 0
        %2323 = vmatpush1.bf16.msra.mxu0 0
        %2324 = vmatprep.subr.bf16.mxu0 0
        %2325 = vmatpush1.bf16.msra.mxu0 0
        %2326 = vmatprep.subr.bf16.mxu0 0
        %2327 = vmatpush1.bf16.msra.mxu0 0
        %2328 = vmatprep.subr.bf16.mxu0 0
        %2329 = vmatpush1.bf16.msra.mxu0 0
        %2330 = vmatprep.mubr.bf16.mxu0 0
        %2331 = vmatmul.mubr.bf16.gmra.mrb[0].mxu0 %v2218
        %v2332 = vpop.f32.mrb[0].mxu0
        %v2333 = vadd.f32 %v2028, %v2332
        %v2334 = vpop.f32.mrb[0].mxu0
        %v2335 = vpop.f32.mrb[0].mxu0
        %v2336 = vadd.f32 %v2031, %v2335
        %v2337 = vpop.f32.mrb[0].mxu0
        %2338 = vmatprep.mubr.bf16.mxu0 0
        %2339 = vmatmul.mubr.bf16.gmra.mrb[0].mxu0 %v2219
        %v2340 = vpop.f32.mrb[0].mxu0
        %v2341 = vadd.f32 %v2036, %v2340
        %v2342 = vpop.f32.mrb[0].mxu0
        %v2343 = vpop.f32.mrb[0].mxu0
        %v2344 = vadd.f32 %v2039, %v2343
        %v2345 = vpop.f32.mrb[0].mxu0
        %2346 = vmatprep.mubr.bf16.mxu0 0
        %2347 = vmatmul.mubr.bf16.gmra.mrb[0].mxu0 %v2220
        %v2348 = vpop.f32.mrb[0].mxu0
        %v2349 = vadd.f32 %v2044, %v2348
        %v2350 = vpop.f32.mrb[0].mxu0
        %v2351 = vpop.f32.mrb[0].mxu0
        %v2352 = vadd.f32 %v2047, %v2351
        %v2353 = vpop.f32.mrb[0].mxu0
        %2354 = vmatprep.mubr.bf16.mxu0 0
        %2355 = vmatmul.mubr.bf16.gmra.mrb[0].mxu0 %v2221
        %v2356 = vpop.f32.mrb[0].mxu0
        %v2357 = vadd.f32 %v2052, %v2356
        %v2358 = vpop.f32.mrb[0].mxu0
        %v2359 = vpop.f32.mrb[0].mxu0
        %v2360 = vadd.f32 %v2055, %v2359
        %v2361 = vpop.f32.mrb[0].mxu0
        %2362 = vmatprep.mubr.bf16.mxu0 0
        %2363 = vmatmul.mubr.bf16.gmra.mrb[0].mxu0 %v2222
        %v2364 = vpop.f32.mrb[0].mxu0
        %v2365 = vadd.f32 %v2060, %v2364
        %v2366 = vpop.f32.mrb[0].mxu0
        %v2367 = vpop.f32.mrb[0].mxu0
        %v2368 = vadd.f32 %v2063, %v2367
        %v2369 = vpop.f32.mrb[0].mxu0
        %2370 = vmatprep.mubr.bf16.mxu0 0
        %2371 = vmatmul.mubr.bf16.gmra.mrb[0].mxu0 %v2223
        %v2372 = vpop.f32.mrb[0].mxu0
        %v2373 = vadd.f32 %v2068, %v2372
        %v2374 = vpop.f32.mrb[0].mxu0
        %v2375 = vpop.f32.mrb[0].mxu0
        %v2376 = vadd.f32 %v2071, %v2375
        %v2377 = vpop.f32.mrb[0].mxu0
        %2378 = vmatprep.mubr.bf16.mxu0 0
        %2379 = vmatmul.mubr.bf16.gmra.mrb[0].mxu0 %v2224
        %v2380 = vpop.f32.mrb[0].mxu0
        %v2381 = vadd.f32 %v2076, %v2380
        %v2382 = vpop.f32.mrb[0].mxu0
        %v2383 = vpop.f32.mrb[0].mxu0
        %v2384 = vadd.f32 %v2079, %v2383
        %v2385 = vpop.f32.mrb[0].mxu0
        %2386 = vmatprep.mubr.bf16.mxu0 0
        %2387 = vmatmul.mubr.bf16.gmra.mrb[0].mxu0 %v2225
        %v2388 = vpop.f32.mrb[0].mxu0
        %v2389 = vadd.f32 %v2084, %v2388
        %v2390 = vpop.f32.mrb[0].mxu0
        %v2391 = vpop.f32.mrb[0].mxu0
        %v2392 = vadd.f32 %v2087, %v2391
        %v2393 = vpop.f32.mrb[0].mxu0
        %2394 = vmatprep.mubr.bf16.mxu0 0
        %2395 = vmatmul.mubr.bf16.gmra.mrb[0].mxu0 %v2226
        %v2396 = vpop.f32.mrb[0].mxu0
        %v2397 = vadd.f32 %v2092, %v2396
        %v2398 = vpop.f32.mrb[0].mxu0
        %v2399 = vpop.f32.mrb[0].mxu0
        %v2400 = vadd.f32 %v2095, %v2399
        %v2401 = vpop.f32.mrb[0].mxu0
        %2402 = vmatprep.mubr.bf16.mxu0 0
        %2403 = vmatmul.mubr.bf16.gmra.mrb[0].mxu0 %v2227
        %v2404 = vpop.f32.mrb[0].mxu0
        %v2405 = vadd.f32 %v2100, %v2404
        %v2406 = vpop.f32.mrb[0].mxu0
        %v2407 = vpop.f32.mrb[0].mxu0
        %v2408 = vadd.f32 %v2103, %v2407
        %v2409 = vpop.f32.mrb[0].mxu0
        %2410 = vmatprep.mubr.bf16.mxu0 0
        %2411 = vmatmul.mubr.bf16.gmra.mrb[0].mxu0 %v2228
        %v2412 = vpop.f32.mrb[0].mxu0
        %v2413 = vadd.f32 %v2108, %v2412
        %v2414 = vpop.f32.mrb[0].mxu0
        %v2415 = vpop.f32.mrb[0].mxu0
        %v2416 = vadd.f32 %v2111, %v2415
        %v2417 = vpop.f32.mrb[0].mxu0
        %2418 = vmatprep.mubr.bf16.mxu0 0
        %2419 = vmatmul.mubr.bf16.gmra.mrb[0].mxu0 %v2229
        %v2420 = vpop.f32.mrb[0].mxu0
        %v2421 = vadd.f32 %v2116, %v2420
        %v2422 = vpop.f32.mrb[0].mxu0
        %v2423 = vpop.f32.mrb[0].mxu0
        %v2424 = vadd.f32 %v2119, %v2423
        %v2425 = vpop.f32.mrb[0].mxu0
        %2426 = vmatprep.mubr.bf16.mxu0 0
        %2427 = vmatmul.mubr.bf16.gmra.mrb[0].mxu0 %v2230
        %v2428 = vpop.f32.mrb[0].mxu0
        %v2429 = vadd.f32 %v2124, %v2428
        %v2430 = vpop.f32.mrb[0].mxu0
        %v2431 = vpop.f32.mrb[0].mxu0
        %v2432 = vadd.f32 %v2127, %v2431
        %v2433 = vpop.f32.mrb[0].mxu0
        %2434 = vmatprep.mubr.bf16.mxu0 0
        %2435 = vmatmul.mubr.bf16.gmra.mrb[0].mxu0 %v2231
        %v2436 = vpop.f32.mrb[0].mxu0
        %v2437 = vadd.f32 %v2132, %v2436
        %v2438 = vpop.f32.mrb[0].mxu0
        %v2439 = vpop.f32.mrb[0].mxu0
        %v2440 = vadd.f32 %v2135, %v2439
        %v2441 = vpop.f32.mrb[0].mxu0
        %2442 = vmatprep.mubr.bf16.mxu0 0
        %2443 = vmatmul.mubr.bf16.gmra.mrb[0].mxu0 %v2232
        %v2444 = vpop.f32.mrb[0].mxu0
        %v2445 = vadd.f32 %v2140, %v2444
        %v2446 = vpop.f32.mrb[0].mxu0
        %v2447 = vpop.f32.mrb[0].mxu0
        %v2448 = vadd.f32 %v2143, %v2447
        %v2449 = vpop.f32.mrb[0].mxu0
        %2450 = vmatprep.mubr.bf16.mxu0 0
        %2451 = vmatmul.mubr.bf16.gmra.mrb[0].mxu0 %v2233
        %v2452 = vpop.f32.mrb[0].mxu0
        %v2453 = vadd.f32 %v2148, %v2452
        %v2454 = vpop.f32.mrb[0].mxu0
        %v2455 = vpop.f32.mrb[0].mxu0
        %v2456 = vadd.f32 %v2151, %v2455
        %v2457 = vpop.f32.mrb[0].mxu0
        %2458 = vdwg.mxu0
        %v2459 = vld [vmem:[#allocation2] sm:$0xe]
        %v2460 = vld [vmem:[#allocation2 + $0xc] sm:$0xe]
        %v2461 = vld [vmem:[#allocation2 + $0x18] sm:$0xe]
        %v2462 = vld [vmem:[#allocation2 + $0x24] sm:$0xe]
        %v2463 = vld [vmem:[#allocation2 + $0x30] sm:$0xe]
        %v2464 = vld [vmem:[#allocation2 + $0x3c] sm:$0xe]
        %v2465 = vld [vmem:[#allocation2 + $0x48] sm:$0xe]
        %v2466 = vld [vmem:[#allocation2 + $0x54] sm:$0xe]
        %v2467 = vld [vmem:[#allocation2 + $0x60] sm:$0xe]
        %v2468 = vld [vmem:[#allocation2 + $0x6c] sm:$0xe]
        %v2469 = vld [vmem:[#allocation2 + $0x78] sm:$0xe]
        %v2470 = vld [vmem:[#allocation2 + $0x84] sm:$0xe]
        %v2471 = vld [vmem:[#allocation2 + $0x90] sm:$0xe]
        %v2472 = vld [vmem:[#allocation2 + $0x9c] sm:$0xe]
        %v2473 = vld [vmem:[#allocation2 + $0xa8] sm:$0xe]
        %v2474 = vld [vmem:[#allocation2 + $0xb4] sm:$0xe]
        %vm2507 = vcmask 1042432
        %vm2508 = vcmask 1046532
        %vm2509 = vmor %vm2507, %vm2508
        %v2510 = vrot.slane %v2459, 5
        %v2511 = vrot.slane %v2510, 4
        %v2512 = vrot.slane %v1414, 5
        %v2513 = vsel %vm2509, %v2511, %v2512
        %v2514 = vrot.slane %v2512, 4
        %v2515 = vrot.slane %v1461, 5
        %v2516 = vsel %vm2509, %v2514, %v2515
        %v2517 = vrot.slane %v2460, 5
        %v2518 = vrot.slane %v2517, 4
        %v2519 = vrot.slane %v1416, 5
        %v2520 = vsel %vm2509, %v2518, %v2519
        %v2521 = vrot.slane %v2519, 4
        %v2522 = vrot.slane %v1462, 5
        %v2523 = vsel %vm2509, %v2521, %v2522
        %v2524 = vrot.slane %v2461, 5
        %v2525 = vrot.slane %v2524, 4
        %v2526 = vrot.slane %v1418, 5
        %v2527 = vsel %vm2509, %v2525, %v2526
        %v2528 = vrot.slane %v2526, 4
        %v2529 = vrot.slane %v1463, 5
        %v2530 = vsel %vm2509, %v2528, %v2529
        %v2531 = vrot.slane %v2462, 5
        %v2532 = vrot.slane %v2531, 4
        %v2533 = vrot.slane %v1420, 5
        %v2534 = vsel %vm2509, %v2532, %v2533
        %v2535 = vrot.slane %v2533, 4
        %v2536 = vrot.slane %v1464, 5
        %v2537 = vsel %vm2509, %v2535, %v2536
        %v2538 = vrot.slane %v2463, 5
        %v2539 = vrot.slane %v2538, 4
        %v2540 = vrot.slane %v1422, 5
        %v2541 = vsel %vm2509, %v2539, %v2540
        %v2542 = vrot.slane %v2540, 4
        %v2543 = vrot.slane %v1465, 5
        %v2544 = vsel %vm2509, %v2542, %v2543
        %v2545 = vrot.slane %v2464, 5
        %v2546 = vrot.slane %v2545, 4
        %v2547 = vrot.slane %v1424, 5
        %v2548 = vsel %vm2509, %v2546, %v2547
        %v2549 = vrot.slane %v2547, 4
        %v2550 = vrot.slane %v1466, 5
        %v2551 = vsel %vm2509, %v2549, %v2550
        %v2552 = vrot.slane %v2465, 5
        %v2553 = vrot.slane %v2552, 4
        %v2554 = vrot.slane %v1426, 5
        %v2555 = vsel %vm2509, %v2553, %v2554
        %v2556 = vrot.slane %v2554, 4
        %v2557 = vrot.slane %v1467, 5
        %v2558 = vsel %vm2509, %v2556, %v2557
        %v2559 = vrot.slane %v2466, 5
        %v2560 = vrot.slane %v2559, 4
        %v2561 = vrot.slane %v1428, 5
        %v2562 = vsel %vm2509, %v2560, %v2561
        %v2563 = vrot.slane %v2561, 4
        %v2564 = vrot.slane %v1468, 5
        %v2565 = vsel %vm2509, %v2563, %v2564
        %v2566 = vrot.slane %v2467, 5
        %v2567 = vrot.slane %v2566, 4
        %v2568 = vrot.slane %v1430, 5
        %v2569 = vsel %vm2509, %v2567, %v2568
        %v2570 = vrot.slane %v2568, 4
        %v2571 = vrot.slane %v1469, 5
        %v2572 = vsel %vm2509, %v2570, %v2571
        %v2573 = vrot.slane %v2468, 5
        %v2574 = vrot.slane %v2573, 4
        %v2575 = vrot.slane %v1432, 5
        %v2576 = vsel %vm2509, %v2574, %v2575
        %v2577 = vrot.slane %v2575, 4
        %v2578 = vrot.slane %v1470, 5
        %v2579 = vsel %vm2509, %v2577, %v2578
        %v2580 = vrot.slane %v2469, 5
        %v2581 = vrot.slane %v2580, 4
        %v2582 = vrot.slane %v1434, 5
        %v2583 = vsel %vm2509, %v2581, %v2582
        %v2584 = vrot.slane %v2582, 4
        %v2585 = vrot.slane %v1471, 5
        %v2586 = vsel %vm2509, %v2584, %v2585
        %v2587 = vrot.slane %v2470, 5
        %v2588 = vrot.slane %v2587, 4
        %v2589 = vrot.slane %v1436, 5
        %v2590 = vsel %vm2509, %v2588, %v2589
        %v2591 = vrot.slane %v2589, 4
        %v2592 = vrot.slane %v1472, 5
        %v2593 = vsel %vm2509, %v2591, %v2592
        %v2594 = vrot.slane %v2471, 5
        %v2595 = vrot.slane %v2594, 4
        %v2596 = vrot.slane %v1438, 5
        %v2597 = vsel %vm2509, %v2595, %v2596
        %v2598 = vrot.slane %v2596, 4
        %v2599 = vrot.slane %v1473, 5
        %v2600 = vsel %vm2509, %v2598, %v2599
        %v2601 = vrot.slane %v2472, 5
        %v2602 = vrot.slane %v2601, 4
        %v2603 = vrot.slane %v1440, 5
        %v2604 = vsel %vm2509, %v2602, %v2603
        %v2605 = vrot.slane %v2603, 4
        %v2606 = vrot.slane %v1474, 5
        %v2607 = vsel %vm2509, %v2605, %v2606
        %v2608 = vrot.slane %v2473, 5
        %v2609 = vrot.slane %v2608, 4
        %v2610 = vrot.slane %v1442, 5
        %v2611 = vsel %vm2509, %v2609, %v2610
        %v2612 = vrot.slane %v2610, 4
        %v2613 = vrot.slane %v1475, 5
        %v2614 = vsel %vm2509, %v2612, %v2613
        %v2615 = vrot.slane %v2474, 5
        %v2616 = vrot.slane %v2615, 4
        %v2617 = vrot.slane %v1444, 5
        %v2618 = vsel %vm2509, %v2616, %v2617
        %v2619 = vrot.slane %v2617, 4
        %v2620 = vrot.slane %v1476, 5
        %v2621 = vsel %vm2509, %v2619, %v2620
        %s2622 = scalar_lea.vmem %s4, 128
        %v2623 = vld [vmem:[%s2622] sm:$0xf]
        %v2624 = vld [vmem:[%s2622 + $0x4] sm:$0xf]
        %v2625 = vld [vmem:[%s2622 + $0x8] sm:$0xf]
        %v2626 = vld [vmem:[%s2622 + $0xc] sm:$0xf]
        %v2627 = vld [vmem:[%s2622 + $0x10] sm:$0xf]
        %v2628 = vld [vmem:[%s2622 + $0x14] sm:$0xf]
        %v2629 = vld [vmem:[%s2622 + $0x18] sm:$0xf]
        %v2630 = vld [vmem:[%s2622 + $0x1c] sm:$0xf]
        %v2631 = vld [vmem:[%s2622 + $0x20] sm:$0xf]
        %v2632 = vld [vmem:[%s2622 + $0x24] sm:$0xf]
        %v2633 = vld [vmem:[%s2622 + $0x28] sm:$0xf]
        %v2634 = vld [vmem:[%s2622 + $0x2c] sm:$0xf]
        %v2635 = vld [vmem:[%s2622 + $0x30] sm:$0xf]
        %v2636 = vld [vmem:[%s2622 + $0x34] sm:$0xf]
        %v2637 = vld [vmem:[%s2622 + $0x38] sm:$0xf]
        %v2638 = vld [vmem:[%s2622 + $0x3c] sm:$0xf]
        %v2639 = vunpack.c.l.b16 %v2513
        %v2640 = vunpack.c.l.b16 %v2516
        %v2641 = vunpack.c.l.b16 %v2520
        %v2642 = vunpack.c.l.b16 %v2523
        %v2643 = vunpack.c.l.b16 %v2527
        %v2644 = vunpack.c.l.b16 %v2530
        %v2645 = vunpack.c.l.b16 %v2534
        %v2646 = vunpack.c.l.b16 %v2537
        %v2647 = vunpack.c.l.b16 %v2541
        %v2648 = vunpack.c.l.b16 %v2544
        %v2649 = vunpack.c.l.b16 %v2548
        %v2650 = vunpack.c.l.b16 %v2551
        %v2651 = vunpack.c.l.b16 %v2555
        %v2652 = vunpack.c.l.b16 %v2558
        %v2653 = vunpack.c.l.b16 %v2562
        %v2654 = vunpack.c.l.b16 %v2565
        %v2655 = vunpack.c.l.b16 %v2569
        %v2656 = vunpack.c.l.b16 %v2572
        %v2657 = vunpack.c.l.b16 %v2576
        %v2658 = vunpack.c.l.b16 %v2579
        %v2659 = vunpack.c.l.b16 %v2583
        %v2660 = vunpack.c.l.b16 %v2586
        %v2661 = vunpack.c.l.b16 %v2590
        %v2662 = vunpack.c.l.b16 %v2593
        %v2663 = vunpack.c.l.b16 %v2597
        %v2664 = vunpack.c.l.b16 %v2600
        %v2665 = vunpack.c.l.b16 %v2604
        %v2666 = vunpack.c.l.b16 %v2607
        %v2667 = vunpack.c.l.b16 %v2611
        %v2668 = vunpack.c.l.b16 %v2614
        %v2669 = vunpack.c.l.b16 %v2618
        %v2670 = vunpack.c.l.b16 %v2621
        %v2671 = vpack.c.b16 %v2640, %v2639
        %v2672 = vpack.c.b16 %v2642, %v2641
        %v2673 = vpack.c.b16 %v2644, %v2643
        %v2674 = vpack.c.b16 %v2646, %v2645
        %v2675 = vpack.c.b16 %v2648, %v2647
        %v2676 = vpack.c.b16 %v2650, %v2649
        %v2677 = vpack.c.b16 %v2652, %v2651
        %v2678 = vpack.c.b16 %v2654, %v2653
        %v2679 = vpack.c.b16 %v2656, %v2655
        %v2680 = vpack.c.b16 %v2658, %v2657
        %v2681 = vpack.c.b16 %v2660, %v2659
        %v2682 = vpack.c.b16 %v2662, %v2661
        %v2683 = vpack.c.b16 %v2664, %v2663
        %v2684 = vpack.c.b16 %v2666, %v2665
        %v2685 = vpack.c.b16 %v2668, %v2667
        %v2686 = vpack.c.b16 %v2670, %v2669
        %v2719 = vunpack.c.l.b16 %v2623
        %v2720 = vunpack.c.l.b16 %v2624
        %v2721 = vunpack.c.l.b16 %v2625
        %v2722 = vunpack.c.l.b16 %v2626
        %v2723 = vunpack.c.l.b16 %v2627
        %v2724 = vunpack.c.l.b16 %v2628
        %v2725 = vunpack.c.l.b16 %v2629
        %v2726 = vunpack.c.l.b16 %v2630
        %v2727 = vunpack.c.l.b16 %v2631
        %v2728 = vunpack.c.l.b16 %v2632
        %v2729 = vunpack.c.l.b16 %v2633
        %v2730 = vunpack.c.l.b16 %v2634
        %v2731 = vunpack.c.l.b16 %v2635
        %v2732 = vunpack.c.l.b16 %v2636
        %v2733 = vunpack.c.l.b16 %v2637
        %v2734 = vunpack.c.l.b16 %v2638
        %v2735 = vpack.c.b16 %v2720, %v2719
        %v2736 = vpack.c.b16 %v2722, %v2721
        %v2737 = vpack.c.b16 %v2724, %v2723
        %v2738 = vpack.c.b16 %v2726, %v2725
        %v2739 = vpack.c.b16 %v2728, %v2727
        %v2740 = vpack.c.b16 %v2730, %v2729
        %v2741 = vpack.c.b16 %v2732, %v2731
        %v2742 = vpack.c.b16 %v2734, %v2733
        %2751 = vmatprep.subr.bf16.mxu0 0
        %2752 = vmatpush1.bf16.msra.mxu0 %v2735
        %2753 = vmatprep.subr.bf16.mxu0 0
        %2754 = vmatpush1.bf16.msra.mxu0 %v2736
        %2755 = vmatprep.subr.bf16.mxu0 0
        %2756 = vmatpush1.bf16.msra.mxu0 %v2737
        %2757 = vmatprep.subr.bf16.mxu0 0
        %2758 = vmatpush1.bf16.msra.mxu0 %v2738
        %2759 = vmatprep.subr.bf16.mxu0 0
        %2760 = vmatpush1.bf16.msra.mxu0 %v2739
        %2761 = vmatprep.subr.bf16.mxu0 0
        %2762 = vmatpush1.bf16.msra.mxu0 %v2740
        %2763 = vmatprep.subr.bf16.mxu0 0
        %2764 = vmatpush1.bf16.msra.mxu0 %v2741
        %2765 = vmatprep.subr.bf16.mxu0 0
        %2766 = vmatpush1.bf16.msra.mxu0 %v2742
        %2767 = vmatprep.subr.bf16.mxu0 0
        %2768 = vmatpush1.bf16.msra.mxu0 0
        %2769 = vmatprep.subr.bf16.mxu0 0
        %2770 = vmatpush1.bf16.msra.mxu0 0
        %2771 = vmatprep.subr.bf16.mxu0 0
        %2772 = vmatpush1.bf16.msra.mxu0 0
        %2773 = vmatprep.subr.bf16.mxu0 0
        %2774 = vmatpush1.bf16.msra.mxu0 0
        %2775 = vmatprep.subr.bf16.mxu0 0
        %2776 = vmatpush1.bf16.msra.mxu0 0
        %2777 = vmatprep.subr.bf16.mxu0 0
        %2778 = vmatpush1.bf16.msra.mxu0 0
        %2779 = vmatprep.subr.bf16.mxu0 0
        %2780 = vmatpush1.bf16.msra.mxu0 0
        %2781 = vmatprep.subr.bf16.mxu0 0
        %2782 = vmatpush1.bf16.msra.mxu0 0
        %2783 = vmatprep.mubr.bf16.mxu0 0
        %2784 = vmatmul.mubr.bf16.gmra.mrb[0].mxu0 %v2671
        %v2785 = vpop.f32.mrb[0].mxu0
        %v2786 = vadd.f32 0.0, %v2785
        %v2787 = vpop.f32.mrb[0].mxu0
        %v2788 = vpop.f32.mrb[0].mxu0
        %v2789 = vadd.f32 0.0, %v2788
        %v2790 = vpop.f32.mrb[0].mxu0
        %2791 = vmatprep.mubr.bf16.mxu0 0
        %2792 = vmatmul.mubr.bf16.gmra.mrb[0].mxu0 %v2672
        %v2793 = vpop.f32.mrb[0].mxu0
        %v2794 = vadd.f32 0.0, %v2793
        %v2795 = vpop.f32.mrb[0].mxu0
        %v2796 = vpop.f32.mrb[0].mxu0
        %v2797 = vadd.f32 0.0, %v2796
        %v2798 = vpop.f32.mrb[0].mxu0
        %2799 = vmatprep.mubr.bf16.mxu0 0
        %2800 = vmatmul.mubr.bf16.gmra.mrb[0].mxu0 %v2673
        %v2801 = vpop.f32.mrb[0].mxu0
        %v2802 = vadd.f32 0.0, %v2801
        %v2803 = vpop.f32.mrb[0].mxu0
        %v2804 = vpop.f32.mrb[0].mxu0
        %v2805 = vadd.f32 0.0, %v2804
        %v2806 = vpop.f32.mrb[0].mxu0
        %2807 = vmatprep.mubr.bf16.mxu0 0
        %2808 = vmatmul.mubr.bf16.gmra.mrb[0].mxu0 %v2674
        %v2809 = vpop.f32.mrb[0].mxu0
        %v2810 = vadd.f32 0.0, %v2809
        %v2811 = vpop.f32.mrb[0].mxu0
        %v2812 = vpop.f32.mrb[0].mxu0
        %v2813 = vadd.f32 0.0, %v2812
        %v2814 = vpop.f32.mrb[0].mxu0
        %2815 = vmatprep.mubr.bf16.mxu0 0
        %2816 = vmatmul.mubr.bf16.gmra.mrb[0].mxu0 %v2675
        %v2817 = vpop.f32.mrb[0].mxu0
        %v2818 = vadd.f32 0.0, %v2817
        %v2819 = vpop.f32.mrb[0].mxu0
        %v2820 = vpop.f32.mrb[0].mxu0
        %v2821 = vadd.f32 0.0, %v2820
        %v2822 = vpop.f32.mrb[0].mxu0
        %2823 = vmatprep.mubr.bf16.mxu0 0
        %2824 = vmatmul.mubr.bf16.gmra.mrb[0].mxu0 %v2676
        %v2825 = vpop.f32.mrb[0].mxu0
        %v2826 = vadd.f32 0.0, %v2825
        %v2827 = vpop.f32.mrb[0].mxu0
        %v2828 = vpop.f32.mrb[0].mxu0
        %v2829 = vadd.f32 0.0, %v2828
        %v2830 = vpop.f32.mrb[0].mxu0
        %2831 = vmatprep.mubr.bf16.mxu0 0
        %2832 = vmatmul.mubr.bf16.gmra.mrb[0].mxu0 %v2677
        %v2833 = vpop.f32.mrb[0].mxu0
        %v2834 = vadd.f32 0.0, %v2833
        %v2835 = vpop.f32.mrb[0].mxu0
        %v2836 = vpop.f32.mrb[0].mxu0
        %v2837 = vadd.f32 0.0, %v2836
        %v2838 = vpop.f32.mrb[0].mxu0
        %2839 = vmatprep.mubr.bf16.mxu0 0
        %2840 = vmatmul.mubr.bf16.gmra.mrb[0].mxu0 %v2678
        %v2841 = vpop.f32.mrb[0].mxu0
        %v2842 = vadd.f32 0.0, %v2841
        %v2843 = vpop.f32.mrb[0].mxu0
        %v2844 = vpop.f32.mrb[0].mxu0
        %v2845 = vadd.f32 0.0, %v2844
        %v2846 = vpop.f32.mrb[0].mxu0
        %2847 = vmatprep.mubr.bf16.mxu0 0
        %2848 = vmatmul.mubr.bf16.gmra.mrb[0].mxu0 %v2679
        %v2849 = vpop.f32.mrb[0].mxu0
        %v2850 = vadd.f32 0.0, %v2849
        %v2851 = vpop.f32.mrb[0].mxu0
        %v2852 = vpop.f32.mrb[0].mxu0
        %v2853 = vadd.f32 0.0, %v2852
        %v2854 = vpop.f32.mrb[0].mxu0
        %2855 = vmatprep.mubr.bf16.mxu0 0
        %2856 = vmatmul.mubr.bf16.gmra.mrb[0].mxu0 %v2680
        %v2857 = vpop.f32.mrb[0].mxu0
        %v2858 = vadd.f32 0.0, %v2857
        %v2859 = vpop.f32.mrb[0].mxu0
        %v2860 = vpop.f32.mrb[0].mxu0
        %v2861 = vadd.f32 0.0, %v2860
        %v2862 = vpop.f32.mrb[0].mxu0
        %2863 = vmatprep.mubr.bf16.mxu0 0
        %2864 = vmatmul.mubr.bf16.gmra.mrb[0].mxu0 %v2681
        %v2865 = vpop.f32.mrb[0].mxu0
        %v2866 = vadd.f32 0.0, %v2865
        %v2867 = vpop.f32.mrb[0].mxu0
        %v2868 = vpop.f32.mrb[0].mxu0
        %v2869 = vadd.f32 0.0, %v2868
        %v2870 = vpop.f32.mrb[0].mxu0
        %2871 = vmatprep.mubr.bf16.mxu0 0
        %2872 = vmatmul.mubr.bf16.gmra.mrb[0].mxu0 %v2682
        %v2873 = vpop.f32.mrb[0].mxu0
        %v2874 = vadd.f32 0.0, %v2873
        %v2875 = vpop.f32.mrb[0].mxu0
        %v2876 = vpop.f32.mrb[0].mxu0
        %v2877 = vadd.f32 0.0, %v2876
        %v2878 = vpop.f32.mrb[0].mxu0
        %2879 = vmatprep.mubr.bf16.mxu0 0
        %2880 = vmatmul.mubr.bf16.gmra.mrb[0].mxu0 %v2683
        %v2881 = vpop.f32.mrb[0].mxu0
        %v2882 = vadd.f32 0.0, %v2881
        %v2883 = vpop.f32.mrb[0].mxu0
        %v2884 = vpop.f32.mrb[0].mxu0
        %v2885 = vadd.f32 0.0, %v2884
        %v2886 = vpop.f32.mrb[0].mxu0
        %2887 = vmatprep.mubr.bf16.mxu0 0
        %2888 = vmatmul.mubr.bf16.gmra.mrb[0].mxu0 %v2684
        %v2889 = vpop.f32.mrb[0].mxu0
        %v2890 = vadd.f32 0.0, %v2889
        %v2891 = vpop.f32.mrb[0].mxu0
        %v2892 = vpop.f32.mrb[0].mxu0
        %v2893 = vadd.f32 0.0, %v2892
        %v2894 = vpop.f32.mrb[0].mxu0
        %2895 = vmatprep.mubr.bf16.mxu0 0
        %2896 = vmatmul.mubr.bf16.gmra.mrb[0].mxu0 %v2685
        %v2897 = vpop.f32.mrb[0].mxu0
        %v2898 = vadd.f32 0.0, %v2897
        %v2899 = vpop.f32.mrb[0].mxu0
        %v2900 = vpop.f32.mrb[0].mxu0
        %v2901 = vadd.f32 0.0, %v2900
        %v2902 = vpop.f32.mrb[0].mxu0
        %2903 = vmatprep.mubr.bf16.mxu0 0
        %2904 = vmatmul.mubr.bf16.gmra.mrb[0].mxu0 %v2686
        %v2905 = vpop.f32.mrb[0].mxu0
        %v2906 = vadd.f32 0.0, %v2905
        %v2907 = vpop.f32.mrb[0].mxu0
        %v2908 = vpop.f32.mrb[0].mxu0
        %v2909 = vadd.f32 0.0, %v2908
        %v2910 = vpop.f32.mrb[0].mxu0
        %2911 = vdwg.mxu0
        %v2912 = vadd.f32 %v2333, %v2786
        %v2913 = vadd.f32 %v2336, %v2789
        %v2914 = vadd.f32 %v2341, %v2794
        %v2915 = vadd.f32 %v2344, %v2797
        %v2916 = vadd.f32 %v2349, %v2802
        %v2917 = vadd.f32 %v2352, %v2805
        %v2918 = vadd.f32 %v2357, %v2810
        %v2919 = vadd.f32 %v2360, %v2813
        %v2920 = vadd.f32 %v2365, %v2818
        %v2921 = vadd.f32 %v2368, %v2821
        %v2922 = vadd.f32 %v2373, %v2826
        %v2923 = vadd.f32 %v2376, %v2829
        %v2924 = vadd.f32 %v2381, %v2834
        %v2925 = vadd.f32 %v2384, %v2837
        %v2926 = vadd.f32 %v2389, %v2842
        %v2927 = vadd.f32 %v2392, %v2845
        %v2928 = vadd.f32 %v2397, %v2850
        %v2929 = vadd.f32 %v2400, %v2853
        %v2930 = vadd.f32 %v2405, %v2858
        %v2931 = vadd.f32 %v2408, %v2861
        %v2932 = vadd.f32 %v2413, %v2866
        %v2933 = vadd.f32 %v2416, %v2869
        %v2934 = vadd.f32 %v2421, %v2874
        %v2935 = vadd.f32 %v2424, %v2877
        %v2936 = vadd.f32 %v2429, %v2882
        %v2937 = vadd.f32 %v2432, %v2885
        %v2938 = vadd.f32 %v2437, %v2890
        %v2939 = vadd.f32 %v2440, %v2893
        %v2940 = vadd.f32 %v2445, %v2898
        %v2941 = vadd.f32 %v2448, %v2901
        %v2942 = vadd.f32 %v2453, %v2906
        %v2943 = vadd.f32 %v2456, %v2909
        %v2944 = vld [vmem:[%s1295] sm:$0xf]
        %v2945 = vld [vmem:[%s1295 + $0x4] sm:$0xf]
        %v2946 = vld [vmem:[%s1295 + $0xc] sm:$0xf]
        %v2947 = vld [vmem:[%s1295 + $0x10] sm:$0xf]
        %v2948 = vld [vmem:[%s1295 + $0x18] sm:$0xf]
        %v2949 = vld [vmem:[%s1295 + $0x1c] sm:$0xf]
        %v2950 = vld [vmem:[%s1295 + $0x24] sm:$0xf]
        %v2951 = vld [vmem:[%s1295 + $0x28] sm:$0xf]
        %v2952 = vld [vmem:[%s1295 + $0x30] sm:$0xf]
        %v2953 = vld [vmem:[%s1295 + $0x34] sm:$0xf]
        %v2954 = vld [vmem:[%s1295 + $0x3c] sm:$0xf]
        %v2955 = vld [vmem:[%s1295 + $0x40] sm:$0xf]
        %v2956 = vld [vmem:[%s1295 + $0x48] sm:$0xf]
        %v2957 = vld [vmem:[%s1295 + $0x4c] sm:$0xf]
        %v2958 = vld [vmem:[%s1295 + $0x54] sm:$0xf]
        %v2959 = vld [vmem:[%s1295 + $0x58] sm:$0xf]
        %v2960 = vld [vmem:[%s1295 + $0x60] sm:$0xf]
        %v2961 = vld [vmem:[%s1295 + $0x64] sm:$0xf]
        %v2962 = vld [vmem:[%s1295 + $0x6c] sm:$0xf]
        %v2963 = vld [vmem:[%s1295 + $0x70] sm:$0xf]
        %v2964 = vld [vmem:[%s1295 + $0x78] sm:$0xf]
        %v2965 = vld [vmem:[%s1295 + $0x7c] sm:$0xf]
        %v2966 = vld [vmem:[%s1295 + $0x84] sm:$0xf]
        %v2967 = vld [vmem:[%s1295 + $0x88] sm:$0xf]
        %v2968 = vld [vmem:[%s1295 + $0x90] sm:$0xf]
        %v2969 = vld [vmem:[%s1295 + $0x94] sm:$0xf]
        %v2970 = vld [vmem:[%s1295 + $0x9c] sm:$0xf]
        %v2971 = vld [vmem:[%s1295 + $0xa0] sm:$0xf]
        %v2972 = vld [vmem:[%s1295 + $0xa8] sm:$0xf]
        %v2973 = vld [vmem:[%s1295 + $0xac] sm:$0xf]
        %v2974 = vld [vmem:[%s1295 + $0xb4] sm:$0xf]
        %v2975 = vld [vmem:[%s1295 + $0xb8] sm:$0xf]
        %s2976 = scalar_lea.vmem %s4, 192
        %v2977 = vld [vmem:[%s2976] sm:$0xf]
        %v2978 = vld [vmem:[%s2976 + $0x4] sm:$0xf]
        %v2979 = vld [vmem:[%s2976 + $0x8] sm:$0xf]
        %v2980 = vld [vmem:[%s2976 + $0xc] sm:$0xf]
        %v2981 = vld [vmem:[%s2976 + $0x10] sm:$0xf]
        %v2982 = vld [vmem:[%s2976 + $0x14] sm:$0xf]
        %v2983 = vld [vmem:[%s2976 + $0x18] sm:$0xf]
        %v2984 = vld [vmem:[%s2976 + $0x1c] sm:$0xf]
        %v2985 = vld [vmem:[%s2976 + $0x20] sm:$0xf]
        %v2986 = vld [vmem:[%s2976 + $0x24] sm:$0xf]
        %v2987 = vld [vmem:[%s2976 + $0x28] sm:$0xf]
        %v2988 = vld [vmem:[%s2976 + $0x2c] sm:$0xf]
        %v2989 = vld [vmem:[%s2976 + $0x30] sm:$0xf]
        %v2990 = vld [vmem:[%s2976 + $0x34] sm:$0xf]
        %v2991 = vld [vmem:[%s2976 + $0x38] sm:$0xf]
        %v2992 = vld [vmem:[%s2976 + $0x3c] sm:$0xf]
        %v3025 = vunpack.c.l.b16 %v2944
        %v3026 = vunpack.c.l.b16 %v2945
        %v3027 = vunpack.c.l.b16 %v2946
        %v3028 = vunpack.c.l.b16 %v2947
        %v3029 = vunpack.c.l.b16 %v2948
        %v3030 = vunpack.c.l.b16 %v2949
        %v3031 = vunpack.c.l.b16 %v2950
        %v3032 = vunpack.c.l.b16 %v2951
        %v3033 = vunpack.c.l.b16 %v2952
        %v3034 = vunpack.c.l.b16 %v2953
        %v3035 = vunpack.c.l.b16 %v2954
        %v3036 = vunpack.c.l.b16 %v2955
        %v3037 = vunpack.c.l.b16 %v2956
        %v3038 = vunpack.c.l.b16 %v2957
        %v3039 = vunpack.c.l.b16 %v2958
        %v3040 = vunpack.c.l.b16 %v2959
        %v3041 = vunpack.c.l.b16 %v2960
        %v3042 = vunpack.c.l.b16 %v2961
        %v3043 = vunpack.c.l.b16 %v2962
        %v3044 = vunpack.c.l.b16 %v2963
        %v3045 = vunpack.c.l.b16 %v2964
        %v3046 = vunpack.c.l.b16 %v2965
        %v3047 = vunpack.c.l.b16 %v2966
        %v3048 = vunpack.c.l.b16 %v2967
        %v3049 = vunpack.c.l.b16 %v2968
        %v3050 = vunpack.c.l.b16 %v2969
        %v3051 = vunpack.c.l.b16 %v2970
        %v3052 = vunpack.c.l.b16 %v2971
        %v3053 = vunpack.c.l.b16 %v2972
        %v3054 = vunpack.c.l.b16 %v2973
        %v3055 = vunpack.c.l.b16 %v2974
        %v3056 = vunpack.c.l.b16 %v2975
        %v3057 = vpack.c.b16 %v3026, %v3025
        %v3058 = vpack.c.b16 %v3028, %v3027
        %v3059 = vpack.c.b16 %v3030, %v3029
        %v3060 = vpack.c.b16 %v3032, %v3031
        %v3061 = vpack.c.b16 %v3034, %v3033
        %v3062 = vpack.c.b16 %v3036, %v3035
        %v3063 = vpack.c.b16 %v3038, %v3037
        %v3064 = vpack.c.b16 %v3040, %v3039
        %v3065 = vpack.c.b16 %v3042, %v3041
        %v3066 = vpack.c.b16 %v3044, %v3043
        %v3067 = vpack.c.b16 %v3046, %v3045
        %v3068 = vpack.c.b16 %v3048, %v3047
        %v3069 = vpack.c.b16 %v3050, %v3049
        %v3070 = vpack.c.b16 %v3052, %v3051
        %v3071 = vpack.c.b16 %v3054, %v3053
        %v3072 = vpack.c.b16 %v3056, %v3055
        %v3105 = vunpack.c.l.b16 %v2977
        %v3106 = vunpack.c.l.b16 %v2978
        %v3107 = vunpack.c.l.b16 %v2979
        %v3108 = vunpack.c.l.b16 %v2980
        %v3109 = vunpack.c.l.b16 %v2981
        %v3110 = vunpack.c.l.b16 %v2982
        %v3111 = vunpack.c.l.b16 %v2983
        %v3112 = vunpack.c.l.b16 %v2984
        %v3113 = vunpack.c.l.b16 %v2985
        %v3114 = vunpack.c.l.b16 %v2986
        %v3115 = vunpack.c.l.b16 %v2987
        %v3116 = vunpack.c.l.b16 %v2988
        %v3117 = vunpack.c.l.b16 %v2989
        %v3118 = vunpack.c.l.b16 %v2990
        %v3119 = vunpack.c.l.b16 %v2991
        %v3120 = vunpack.c.l.b16 %v2992
        %v3121 = vpack.c.b16 %v3106, %v3105
        %v3122 = vpack.c.b16 %v3108, %v3107
        %v3123 = vpack.c.b16 %v3110, %v3109
        %v3124 = vpack.c.b16 %v3112, %v3111
        %v3125 = vpack.c.b16 %v3114, %v3113
        %v3126 = vpack.c.b16 %v3116, %v3115
        %v3127 = vpack.c.b16 %v3118, %v3117
        %v3128 = vpack.c.b16 %v3120, %v3119
        %3137 = vmatprep.subr.bf16.mxu0 0
        %3138 = vmatpush1.bf16.msra.mxu0 %v3121
        %3139 = vmatprep.subr.bf16.mxu0 0
        %3140 = vmatpush1.bf16.msra.mxu0 %v3122
        %3141 = vmatprep.subr.bf16.mxu0 0
        %3142 = vmatpush1.bf16.msra.mxu0 %v3123
        %3143 = vmatprep.subr.bf16.mxu0 0
        %3144 = vmatpush1.bf16.msra.mxu0 %v3124
        %3145 = vmatprep.subr.bf16.mxu0 0
        %3146 = vmatpush1.bf16.msra.mxu0 %v3125
        %3147 = vmatprep.subr.bf16.mxu0 0
        %3148 = vmatpush1.bf16.msra.mxu0 %v3126
        %3149 = vmatprep.subr.bf16.mxu0 0
        %3150 = vmatpush1.bf16.msra.mxu0 %v3127
        %3151 = vmatprep.subr.bf16.mxu0 0
        %3152 = vmatpush1.bf16.msra.mxu0 %v3128
        %3153 = vmatprep.subr.bf16.mxu0 0
        %3154 = vmatpush1.bf16.msra.mxu0 0
        %3155 = vmatprep.subr.bf16.mxu0 0
        %3156 = vmatpush1.bf16.msra.mxu0 0
        %3157 = vmatprep.subr.bf16.mxu0 0
        %3158 = vmatpush1.bf16.msra.mxu0 0
        %3159 = vmatprep.subr.bf16.mxu0 0
        %3160 = vmatpush1.bf16.msra.mxu0 0
        %3161 = vmatprep.subr.bf16.mxu0 0
        %3162 = vmatpush1.bf16.msra.mxu0 0
        %3163 = vmatprep.subr.bf16.mxu0 0
        %3164 = vmatpush1.bf16.msra.mxu0 0
        %3165 = vmatprep.subr.bf16.mxu0 0
        %3166 = vmatpush1.bf16.msra.mxu0 0
        %3167 = vmatprep.subr.bf16.mxu0 0
        %3168 = vmatpush1.bf16.msra.mxu0 0
        %3169 = vmatprep.mubr.bf16.mxu0 0
        %3170 = vmatmul.mubr.bf16.gmra.mrb[0].mxu0 %v3057
        %v3171 = vpop.f32.mrb[0].mxu0
        %v3172 = vadd.f32 0.0, %v3171
        %v3173 = vpop.f32.mrb[0].mxu0
        %v3174 = vpop.f32.mrb[0].mxu0
        %v3175 = vadd.f32 0.0, %v3174
        %v3176 = vpop.f32.mrb[0].mxu0
        %3177 = vmatprep.mubr.bf16.mxu0 0
        %3178 = vmatmul.mubr.bf16.gmra.mrb[0].mxu0 %v3058
        %v3179 = vpop.f32.mrb[0].mxu0
        %v3180 = vadd.f32 0.0, %v3179
        %v3181 = vpop.f32.mrb[0].mxu0
        %v3182 = vpop.f32.mrb[0].mxu0
        %v3183 = vadd.f32 0.0, %v3182
        %v3184 = vpop.f32.mrb[0].mxu0
        %3185 = vmatprep.mubr.bf16.mxu0 0
        %3186 = vmatmul.mubr.bf16.gmra.mrb[0].mxu0 %v3059
        %v3187 = vpop.f32.mrb[0].mxu0
        %v3188 = vadd.f32 0.0, %v3187
        %v3189 = vpop.f32.mrb[0].mxu0
        %v3190 = vpop.f32.mrb[0].mxu0
        %v3191 = vadd.f32 0.0, %v3190
        %v3192 = vpop.f32.mrb[0].mxu0
        %3193 = vmatprep.mubr.bf16.mxu0 0
        %3194 = vmatmul.mubr.bf16.gmra.mrb[0].mxu0 %v3060
        %v3195 = vpop.f32.mrb[0].mxu0
        %v3196 = vadd.f32 0.0, %v3195
        %v3197 = vpop.f32.mrb[0].mxu0
        %v3198 = vpop.f32.mrb[0].mxu0
        %v3199 = vadd.f32 0.0, %v3198
        %v3200 = vpop.f32.mrb[0].mxu0
        %3201 = vmatprep.mubr.bf16.mxu0 0
        %3202 = vmatmul.mubr.bf16.gmra.mrb[0].mxu0 %v3061
        %v3203 = vpop.f32.mrb[0].mxu0
        %v3204 = vadd.f32 0.0, %v3203
        %v3205 = vpop.f32.mrb[0].mxu0
        %v3206 = vpop.f32.mrb[0].mxu0
        %v3207 = vadd.f32 0.0, %v3206
        %v3208 = vpop.f32.mrb[0].mxu0
        %3209 = vmatprep.mubr.bf16.mxu0 0
        %3210 = vmatmul.mubr.bf16.gmra.mrb[0].mxu0 %v3062
        %v3211 = vpop.f32.mrb[0].mxu0
        %v3212 = vadd.f32 0.0, %v3211
        %v3213 = vpop.f32.mrb[0].mxu0
        %v3214 = vpop.f32.mrb[0].mxu0
        %v3215 = vadd.f32 0.0, %v3214
        %v3216 = vpop.f32.mrb[0].mxu0
        %3217 = vmatprep.mubr.bf16.mxu0 0
        %3218 = vmatmul.mubr.bf16.gmra.mrb[0].mxu0 %v3063
        %v3219 = vpop.f32.mrb[0].mxu0
        %v3220 = vadd.f32 0.0, %v3219
        %v3221 = vpop.f32.mrb[0].mxu0
        %v3222 = vpop.f32.mrb[0].mxu0
        %v3223 = vadd.f32 0.0, %v3222
        %v3224 = vpop.f32.mrb[0].mxu0
        %3225 = vmatprep.mubr.bf16.mxu0 0
        %3226 = vmatmul.mubr.bf16.gmra.mrb[0].mxu0 %v3064
        %v3227 = vpop.f32.mrb[0].mxu0
        %v3228 = vadd.f32 0.0, %v3227
        %v3229 = vpop.f32.mrb[0].mxu0
        %v3230 = vpop.f32.mrb[0].mxu0
        %v3231 = vadd.f32 0.0, %v3230
        %v3232 = vpop.f32.mrb[0].mxu0
        %3233 = vmatprep.mubr.bf16.mxu0 0
        %3234 = vmatmul.mubr.bf16.gmra.mrb[0].mxu0 %v3065
        %v3235 = vpop.f32.mrb[0].mxu0
        %v3236 = vadd.f32 0.0, %v3235
        %v3237 = vpop.f32.mrb[0].mxu0
        %v3238 = vpop.f32.mrb[0].mxu0
        %v3239 = vadd.f32 0.0, %v3238
        %v3240 = vpop.f32.mrb[0].mxu0
        %3241 = vmatprep.mubr.bf16.mxu0 0
        %3242 = vmatmul.mubr.bf16.gmra.mrb[0].mxu0 %v3066
        %v3243 = vpop.f32.mrb[0].mxu0
        %v3244 = vadd.f32 0.0, %v3243
        %v3245 = vpop.f32.mrb[0].mxu0
        %v3246 = vpop.f32.mrb[0].mxu0
        %v3247 = vadd.f32 0.0, %v3246
        %v3248 = vpop.f32.mrb[0].mxu0
        %3249 = vmatprep.mubr.bf16.mxu0 0
        %3250 = vmatmul.mubr.bf16.gmra.mrb[0].mxu0 %v3067
        %v3251 = vpop.f32.mrb[0].mxu0
        %v3252 = vadd.f32 0.0, %v3251
        %v3253 = vpop.f32.mrb[0].mxu0
        %v3254 = vpop.f32.mrb[0].mxu0
        %v3255 = vadd.f32 0.0, %v3254
        %v3256 = vpop.f32.mrb[0].mxu0
        %3257 = vmatprep.mubr.bf16.mxu0 0
        %3258 = vmatmul.mubr.bf16.gmra.mrb[0].mxu0 %v3068
        %v3259 = vpop.f32.mrb[0].mxu0
        %v3260 = vadd.f32 0.0, %v3259
        %v3261 = vpop.f32.mrb[0].mxu0
        %v3262 = vpop.f32.mrb[0].mxu0
        %v3263 = vadd.f32 0.0, %v3262
        %v3264 = vpop.f32.mrb[0].mxu0
        %3265 = vmatprep.mubr.bf16.mxu0 0
        %3266 = vmatmul.mubr.bf16.gmra.mrb[0].mxu0 %v3069
        %v3267 = vpop.f32.mrb[0].mxu0
        %v3268 = vadd.f32 0.0, %v3267
        %v3269 = vpop.f32.mrb[0].mxu0
        %v3270 = vpop.f32.mrb[0].mxu0
        %v3271 = vadd.f32 0.0, %v3270
        %v3272 = vpop.f32.mrb[0].mxu0
        %3273 = vmatprep.mubr.bf16.mxu0 0
        %3274 = vmatmul.mubr.bf16.gmra.mrb[0].mxu0 %v3070
        %v3275 = vpop.f32.mrb[0].mxu0
        %v3276 = vadd.f32 0.0, %v3275
        %v3277 = vpop.f32.mrb[0].mxu0
        %v3278 = vpop.f32.mrb[0].mxu0
        %v3279 = vadd.f32 0.0, %v3278
        %v3280 = vpop.f32.mrb[0].mxu0
        %3281 = vmatprep.mubr.bf16.mxu0 0
        %3282 = vmatmul.mubr.bf16.gmra.mrb[0].mxu0 %v3071
        %v3283 = vpop.f32.mrb[0].mxu0
        %v3284 = vadd.f32 0.0, %v3283
        %v3285 = vpop.f32.mrb[0].mxu0
        %v3286 = vpop.f32.mrb[0].mxu0
        %v3287 = vadd.f32 0.0, %v3286
        %v3288 = vpop.f32.mrb[0].mxu0
        %3289 = vmatprep.mubr.bf16.mxu0 0
        %3290 = vmatmul.mubr.bf16.gmra.mrb[0].mxu0 %v3072
        %v3291 = vpop.f32.mrb[0].mxu0
        %v3292 = vadd.f32 0.0, %v3291
        %v3293 = vpop.f32.mrb[0].mxu0
        %v3294 = vpop.f32.mrb[0].mxu0
        %v3295 = vadd.f32 0.0, %v3294
        %v3296 = vpop.f32.mrb[0].mxu0
        %3297 = vdwg.mxu0
        %v3298 = vadd.f32 %v2912, %v3172
        %v3299 = vadd.f32 %v2913, %v3175
        %v3300 = vadd.f32 %v2914, %v3180
        %v3301 = vadd.f32 %v2915, %v3183
        %v3302 = vadd.f32 %v2916, %v3188
        %v3303 = vadd.f32 %v2917, %v3191
        %v3304 = vadd.f32 %v2918, %v3196
        %v3305 = vadd.f32 %v2919, %v3199
        %v3306 = vadd.f32 %v2920, %v3204
        %v3307 = vadd.f32 %v2921, %v3207
        %v3308 = vadd.f32 %v2922, %v3212
        %v3309 = vadd.f32 %v2923, %v3215
        %v3310 = vadd.f32 %v2924, %v3220
        %v3311 = vadd.f32 %v2925, %v3223
        %v3312 = vadd.f32 %v2926, %v3228
        %v3313 = vadd.f32 %v2927, %v3231
        %v3314 = vadd.f32 %v2928, %v3236
        %v3315 = vadd.f32 %v2929, %v3239
        %v3316 = vadd.f32 %v2930, %v3244
        %v3317 = vadd.f32 %v2931, %v3247
        %v3318 = vadd.f32 %v2932, %v3252
        %v3319 = vadd.f32 %v2933, %v3255
        %v3320 = vadd.f32 %v2934, %v3260
        %v3321 = vadd.f32 %v2935, %v3263
        %v3322 = vadd.f32 %v2936, %v3268
        %v3323 = vadd.f32 %v2937, %v3271
        %v3324 = vadd.f32 %v2938, %v3276
        %v3325 = vadd.f32 %v2939, %v3279
        %v3326 = vadd.f32 %v2940, %v3284
        %v3327 = vadd.f32 %v2941, %v3287
        %v3328 = vadd.f32 %v2942, %v3292
        %v3329 = vadd.f32 %v2943, %v3295
        %v3330 = vld [vmem:[%s1295] sm:$0xf]
        %v3331 = vld [vmem:[%s1295 + $0x4] sm:$0xf]
        %v3332 = vld [vmem:[%s1295 + $0x8] sm:$0x1]
        %v3333 = vld [vmem:[%s1295 + $0xc] sm:$0xf]
        %v3334 = vld [vmem:[%s1295 + $0x10] sm:$0xf]
        %v3335 = vld [vmem:[%s1295 + $0x14] sm:$0x1]
        %v3336 = vld [vmem:[%s1295 + $0x18] sm:$0xf]
        %v3337 = vld [vmem:[%s1295 + $0x1c] sm:$0xf]
        %v3338 = vld [vmem:[%s1295 + $0x20] sm:$0x1]
        %v3339 = vld [vmem:[%s1295 + $0x24] sm:$0xf]
        %v3340 = vld [vmem:[%s1295 + $0x28] sm:$0xf]
        %v3341 = vld [vmem:[%s1295 + $0x2c] sm:$0x1]
        %v3342 = vld [vmem:[%s1295 + $0x30] sm:$0xf]
        %v3343 = vld [vmem:[%s1295 + $0x34] sm:$0xf]
        %v3344 = vld [vmem:[%s1295 + $0x38] sm:$0x1]
        %v3345 = vld [vmem:[%s1295 + $0x3c] sm:$0xf]
        %v3346 = vld [vmem:[%s1295 + $0x40] sm:$0xf]
        %v3347 = vld [vmem:[%s1295 + $0x44] sm:$0x1]
        %v3348 = vld [vmem:[%s1295 + $0x48] sm:$0xf]
        %v3349 = vld [vmem:[%s1295 + $0x4c] sm:$0xf]
        %v3350 = vld [vmem:[%s1295 + $0x50] sm:$0x1]
        %v3351 = vld [vmem:[%s1295 + $0x54] sm:$0xf]
        %v3352 = vld [vmem:[%s1295 + $0x58] sm:$0xf]
        %v3353 = vld [vmem:[%s1295 + $0x5c] sm:$0x1]
        %v3354 = vld [vmem:[%s1295 + $0x60] sm:$0xf]
        %v3355 = vld [vmem:[%s1295 + $0x64] sm:$0xf]
        %v3356 = vld [vmem:[%s1295 + $0x68] sm:$0x1]
        %v3357 = vld [vmem:[%s1295 + $0x6c] sm:$0xf]
        %v3358 = vld [vmem:[%s1295 + $0x70] sm:$0xf]
        %v3359 = vld [vmem:[%s1295 + $0x74] sm:$0x1]
        %v3360 = vld [vmem:[%s1295 + $0x78] sm:$0xf]
        %v3361 = vld [vmem:[%s1295 + $0x7c] sm:$0xf]
        %v3362 = vld [vmem:[%s1295 + $0x80] sm:$0x1]
        %v3363 = vld [vmem:[%s1295 + $0x84] sm:$0xf]
        %v3364 = vld [vmem:[%s1295 + $0x88] sm:$0xf]
        %v3365 = vld [vmem:[%s1295 + $0x8c] sm:$0x1]
        %v3366 = vld [vmem:[%s1295 + $0x90] sm:$0xf]
        %v3367 = vld [vmem:[%s1295 + $0x94] sm:$0xf]
        %v3368 = vld [vmem:[%s1295 + $0x98] sm:$0x1]
        %v3369 = vld [vmem:[%s1295 + $0x9c] sm:$0xf]
        %v3370 = vld [vmem:[%s1295 + $0xa0] sm:$0xf]
        %v3371 = vld [vmem:[%s1295 + $0xa4] sm:$0x1]
        %v3372 = vld [vmem:[%s1295 + $0xa8] sm:$0xf]
        %v3373 = vld [vmem:[%s1295 + $0xac] sm:$0xf]
        %v3374 = vld [vmem:[%s1295 + $0xb0] sm:$0x1]
        %v3375 = vld [vmem:[%s1295 + $0xb4] sm:$0xf]
        %v3376 = vld [vmem:[%s1295 + $0xb8] sm:$0xf]
        %v3377 = vld [vmem:[%s1295 + $0xbc] sm:$0x1]
        %v3379 = vshrl.u32 %v3330, 16
        %v3381 = vrot.slane %v3379, 4
        %v3382 = vshll.u32 %v3330, 16
        %v3384 = vrot.slane %v3382, 5
        %v3385 = vor.u32 %v3381, %v3384
        %v3386 = vrot.slane %v3385, 4
        %v3388 = vshll.u32 %v3331, 16
        %v3390 = vrot.slane %v3388, 5
        %v3391 = vsel %vm1479, %v3386, %v3390
        %v3392 = vshrl.u32 %v3331, 16
        %v3394 = vrot.slane %v3392, 4
        %v3395 = vor.u32 %v3394, %v3390
        %v3396 = vrot.slane %v3395, 4
        %v3398 = vshll.u32 %v3332, 16
        %v3400 = vrot.slane %v3398, 5
        %v3401 = vsel %vm1479, %v3396, %v3400
        %v3403 = vshrl.u32 %v3333, 16
        %v3405 = vrot.slane %v3403, 4
        %v3406 = vshll.u32 %v3333, 16
        %v3408 = vrot.slane %v3406, 5
        %v3409 = vor.u32 %v3405, %v3408
        %v3410 = vrot.slane %v3409, 4
        %v3412 = vshll.u32 %v3334, 16
        %v3414 = vrot.slane %v3412, 5
        %v3415 = vsel %vm1479, %v3410, %v3414
        %v3416 = vshrl.u32 %v3334, 16
        %v3418 = vrot.slane %v3416, 4
        %v3419 = vor.u32 %v3418, %v3414
        %v3420 = vrot.slane %v3419, 4
        %v3422 = vshll.u32 %v3335, 16
        %v3424 = vrot.slane %v3422, 5
        %v3425 = vsel %vm1479, %v3420, %v3424
        %v3427 = vshrl.u32 %v3336, 16
        %v3429 = vrot.slane %v3427, 4
        %v3430 = vshll.u32 %v3336, 16
        %v3432 = vrot.slane %v3430, 5
        %v3433 = vor.u32 %v3429, %v3432
        %v3434 = vrot.slane %v3433, 4
        %v3436 = vshll.u32 %v3337, 16
        %v3438 = vrot.slane %v3436, 5
        %v3439 = vsel %vm1479, %v3434, %v3438
        %v3440 = vshrl.u32 %v3337, 16
        %v3442 = vrot.slane %v3440, 4
        %v3443 = vor.u32 %v3442, %v3438
        %v3444 = vrot.slane %v3443, 4
        %v3446 = vshll.u32 %v3338, 16
        %v3448 = vrot.slane %v3446, 5
        %v3449 = vsel %vm1479, %v3444, %v3448
        %v3451 = vshrl.u32 %v3339, 16
        %v3453 = vrot.slane %v3451, 4
        %v3454 = vshll.u32 %v3339, 16
        %v3456 = vrot.slane %v3454, 5
        %v3457 = vor.u32 %v3453, %v3456
        %v3458 = vrot.slane %v3457, 4
        %v3460 = vshll.u32 %v3340, 16
        %v3462 = vrot.slane %v3460, 5
        %v3463 = vsel %vm1479, %v3458, %v3462
        %v3464 = vshrl.u32 %v3340, 16
        %v3466 = vrot.slane %v3464, 4
        %v3467 = vor.u32 %v3466, %v3462
        %v3468 = vrot.slane %v3467, 4
        %v3470 = vshll.u32 %v3341, 16
        %v3472 = vrot.slane %v3470, 5
        %v3473 = vsel %vm1479, %v3468, %v3472
        %v3475 = vshrl.u32 %v3342, 16
        %v3477 = vrot.slane %v3475, 4
        %v3478 = vshll.u32 %v3342, 16
        %v3480 = vrot.slane %v3478, 5
        %v3481 = vor.u32 %v3477, %v3480
        %v3482 = vrot.slane %v3481, 4
        %v3484 = vshll.u32 %v3343, 16
        %v3486 = vrot.slane %v3484, 5
        %v3487 = vsel %vm1479, %v3482, %v3486
        %v3488 = vshrl.u32 %v3343, 16
        %v3490 = vrot.slane %v3488, 4
        %v3491 = vor.u32 %v3490, %v3486
        %v3492 = vrot.slane %v3491, 4
        %v3494 = vshll.u32 %v3344, 16
        %v3496 = vrot.slane %v3494, 5
        %v3497 = vsel %vm1479, %v3492, %v3496
        %v3499 = vshrl.u32 %v3345, 16
        %v3501 = vrot.slane %v3499, 4
        %v3502 = vshll.u32 %v3345, 16
        %v3504 = vrot.slane %v3502, 5
        %v3505 = vor.u32 %v3501, %v3504
        %v3506 = vrot.slane %v3505, 4
        %v3508 = vshll.u32 %v3346, 16
        %v3510 = vrot.slane %v3508, 5
        %v3511 = vsel %vm1479, %v3506, %v3510
        %v3512 = vshrl.u32 %v3346, 16
        %v3514 = vrot.slane %v3512, 4
        %v3515 = vor.u32 %v3514, %v3510
        %v3516 = vrot.slane %v3515, 4
        %v3518 = vshll.u32 %v3347, 16
        %v3520 = vrot.slane %v3518, 5
        %v3521 = vsel %vm1479, %v3516, %v3520
        %v3523 = vshrl.u32 %v3348, 16
        %v3525 = vrot.slane %v3523, 4
        %v3526 = vshll.u32 %v3348, 16
        %v3528 = vrot.slane %v3526, 5
        %v3529 = vor.u32 %v3525, %v3528
        %v3530 = vrot.slane %v3529, 4
        %v3532 = vshll.u32 %v3349, 16
        %v3534 = vrot.slane %v3532, 5
        %v3535 = vsel %vm1479, %v3530, %v3534
        %v3536 = vshrl.u32 %v3349, 16
        %v3538 = vrot.slane %v3536, 4
        %v3539 = vor.u32 %v3538, %v3534
        %v3540 = vrot.slane %v3539, 4
        %v3542 = vshll.u32 %v3350, 16
        %v3544 = vrot.slane %v3542, 5
        %v3545 = vsel %vm1479, %v3540, %v3544
        %v3547 = vshrl.u32 %v3351, 16
        %v3549 = vrot.slane %v3547, 4
        %v3550 = vshll.u32 %v3351, 16
        %v3552 = vrot.slane %v3550, 5
        %v3553 = vor.u32 %v3549, %v3552
        %v3554 = vrot.slane %v3553, 4
        %v3556 = vshll.u32 %v3352, 16
        %v3558 = vrot.slane %v3556, 5
        %v3559 = vsel %vm1479, %v3554, %v3558
        %v3560 = vshrl.u32 %v3352, 16
        %v3562 = vrot.slane %v3560, 4
        %v3563 = vor.u32 %v3562, %v3558
        %v3564 = vrot.slane %v3563, 4
        %v3566 = vshll.u32 %v3353, 16
        %v3568 = vrot.slane %v3566, 5
        %v3569 = vsel %vm1479, %v3564, %v3568
        %v3571 = vshrl.u32 %v3354, 16
        %v3573 = vrot.slane %v3571, 4
        %v3574 = vshll.u32 %v3354, 16
        %v3576 = vrot.slane %v3574, 5
        %v3577 = vor.u32 %v3573, %v3576
        %v3578 = vrot.slane %v3577, 4
        %v3580 = vshll.u32 %v3355, 16
        %v3582 = vrot.slane %v3580, 5
        %v3583 = vsel %vm1479, %v3578, %v3582
        %v3584 = vshrl.u32 %v3355, 16
        %v3586 = vrot.slane %v3584, 4
        %v3587 = vor.u32 %v3586, %v3582
        %v3588 = vrot.slane %v3587, 4
        %v3590 = vshll.u32 %v3356, 16
        %v3592 = vrot.slane %v3590, 5
        %v3593 = vsel %vm1479, %v3588, %v3592
        %v3595 = vshrl.u32 %v3357, 16
        %v3597 = vrot.slane %v3595, 4
        %v3598 = vshll.u32 %v3357, 16
        %v3600 = vrot.slane %v3598, 5
        %v3601 = vor.u32 %v3597, %v3600
        %v3602 = vrot.slane %v3601, 4
        %v3604 = vshll.u32 %v3358, 16
        %v3606 = vrot.slane %v3604, 5
        %v3607 = vsel %vm1479, %v3602, %v3606
        %v3608 = vshrl.u32 %v3358, 16
        %v3610 = vrot.slane %v3608, 4
        %v3611 = vor.u32 %v3610, %v3606
        %v3612 = vrot.slane %v3611, 4
        %v3614 = vshll.u32 %v3359, 16
        %v3616 = vrot.slane %v3614, 5
        %v3617 = vsel %vm1479, %v3612, %v3616
        %v3619 = vshrl.u32 %v3360, 16
        %v3621 = vrot.slane %v3619, 4
        %v3622 = vshll.u32 %v3360, 16
        %v3624 = vrot.slane %v3622, 5
        %v3625 = vor.u32 %v3621, %v3624
        %v3626 = vrot.slane %v3625, 4
        %v3628 = vshll.u32 %v3361, 16
        %v3630 = vrot.slane %v3628, 5
        %v3631 = vsel %vm1479, %v3626, %v3630
        %v3632 = vshrl.u32 %v3361, 16
        %v3634 = vrot.slane %v3632, 4
        %v3635 = vor.u32 %v3634, %v3630
        %v3636 = vrot.slane %v3635, 4
        %v3638 = vshll.u32 %v3362, 16
        %v3640 = vrot.slane %v3638, 5
        %v3641 = vsel %vm1479, %v3636, %v3640
        %v3643 = vshrl.u32 %v3363, 16
        %v3645 = vrot.slane %v3643, 4
        %v3646 = vshll.u32 %v3363, 16
        %v3648 = vrot.slane %v3646, 5
        %v3649 = vor.u32 %v3645, %v3648
        %v3650 = vrot.slane %v3649, 4
        %v3652 = vshll.u32 %v3364, 16
        %v3654 = vrot.slane %v3652, 5
        %v3655 = vsel %vm1479, %v3650, %v3654
        %v3656 = vshrl.u32 %v3364, 16
        %v3658 = vrot.slane %v3656, 4
        %v3659 = vor.u32 %v3658, %v3654
        %v3660 = vrot.slane %v3659, 4
        %v3662 = vshll.u32 %v3365, 16
        %v3664 = vrot.slane %v3662, 5
        %v3665 = vsel %vm1479, %v3660, %v3664
        %v3667 = vshrl.u32 %v3366, 16
        %v3669 = vrot.slane %v3667, 4
        %v3670 = vshll.u32 %v3366, 16
        %v3672 = vrot.slane %v3670, 5
        %v3673 = vor.u32 %v3669, %v3672
        %v3674 = vrot.slane %v3673, 4
        %v3676 = vshll.u32 %v3367, 16
        %v3678 = vrot.slane %v3676, 5
        %v3679 = vsel %vm1479, %v3674, %v3678
        %v3680 = vshrl.u32 %v3367, 16
        %v3682 = vrot.slane %v3680, 4
        %v3683 = vor.u32 %v3682, %v3678
        %v3684 = vrot.slane %v3683, 4
        %v3686 = vshll.u32 %v3368, 16
        %v3688 = vrot.slane %v3686, 5
        %v3689 = vsel %vm1479, %v3684, %v3688
        %v3691 = vshrl.u32 %v3369, 16
        %v3693 = vrot.slane %v3691, 4
        %v3694 = vshll.u32 %v3369, 16
        %v3696 = vrot.slane %v3694, 5
        %v3697 = vor.u32 %v3693, %v3696
        %v3698 = vrot.slane %v3697, 4
        %v3700 = vshll.u32 %v3370, 16
        %v3702 = vrot.slane %v3700, 5
        %v3703 = vsel %vm1479, %v3698, %v3702
        %v3704 = vshrl.u32 %v3370, 16
        %v3706 = vrot.slane %v3704, 4
        %v3707 = vor.u32 %v3706, %v3702
        %v3708 = vrot.slane %v3707, 4
        %v3710 = vshll.u32 %v3371, 16
        %v3712 = vrot.slane %v3710, 5
        %v3713 = vsel %vm1479, %v3708, %v3712
        %v3715 = vshrl.u32 %v3372, 16
        %v3717 = vrot.slane %v3715, 4
        %v3718 = vshll.u32 %v3372, 16
        %v3720 = vrot.slane %v3718, 5
        %v3721 = vor.u32 %v3717, %v3720
        %v3722 = vrot.slane %v3721, 4
        %v3724 = vshll.u32 %v3373, 16
        %v3726 = vrot.slane %v3724, 5
        %v3727 = vsel %vm1479, %v3722, %v3726
        %v3728 = vshrl.u32 %v3373, 16
        %v3730 = vrot.slane %v3728, 4
        %v3731 = vor.u32 %v3730, %v3726
        %v3732 = vrot.slane %v3731, 4
        %v3734 = vshll.u32 %v3374, 16
        %v3736 = vrot.slane %v3734, 5
        %v3737 = vsel %vm1479, %v3732, %v3736
        %v3739 = vshrl.u32 %v3375, 16
        %v3741 = vrot.slane %v3739, 4
        %v3742 = vshll.u32 %v3375, 16
        %v3744 = vrot.slane %v3742, 5
        %v3745 = vor.u32 %v3741, %v3744
        %v3746 = vrot.slane %v3745, 4
        %v3748 = vshll.u32 %v3376, 16
        %v3750 = vrot.slane %v3748, 5
        %v3751 = vsel %vm1479, %v3746, %v3750
        %v3752 = vshrl.u32 %v3376, 16
        %v3754 = vrot.slane %v3752, 4
        %v3755 = vor.u32 %v3754, %v3750
        %v3756 = vrot.slane %v3755, 4
        %v3758 = vshll.u32 %v3377, 16
        %v3760 = vrot.slane %v3758, 5
        %v3761 = vsel %vm1479, %v3756, %v3760
        %s3762 = scalar_lea.vmem %s4, 256
        %v3763 = vld [vmem:[%s3762] sm:$0xf]
        %v3764 = vld [vmem:[%s3762 + $0x4] sm:$0xf]
        %v3765 = vld [vmem:[%s3762 + $0x8] sm:$0xf]
        %v3766 = vld [vmem:[%s3762 + $0xc] sm:$0xf]
        %v3767 = vld [vmem:[%s3762 + $0x10] sm:$0xf]
        %v3768 = vld [vmem:[%s3762 + $0x14] sm:$0xf]
        %v3769 = vld [vmem:[%s3762 + $0x18] sm:$0xf]
        %v3770 = vld [vmem:[%s3762 + $0x1c] sm:$0xf]
        %v3771 = vld [vmem:[%s3762 + $0x20] sm:$0xf]
        %v3772 = vld [vmem:[%s3762 + $0x24] sm:$0xf]
        %v3773 = vld [vmem:[%s3762 + $0x28] sm:$0xf]
        %v3774 = vld [vmem:[%s3762 + $0x2c] sm:$0xf]
        %v3775 = vld [vmem:[%s3762 + $0x30] sm:$0xf]
        %v3776 = vld [vmem:[%s3762 + $0x34] sm:$0xf]
        %v3777 = vld [vmem:[%s3762 + $0x38] sm:$0xf]
        %v3778 = vld [vmem:[%s3762 + $0x3c] sm:$0xf]
        %v3779 = vunpack.c.l.b16 %v3391
        %v3780 = vunpack.c.l.b16 %v3401
        %v3781 = vunpack.c.l.b16 %v3415
        %v3782 = vunpack.c.l.b16 %v3425
        %v3783 = vunpack.c.l.b16 %v3439
        %v3784 = vunpack.c.l.b16 %v3449
        %v3785 = vunpack.c.l.b16 %v3463
        %v3786 = vunpack.c.l.b16 %v3473
        %v3787 = vunpack.c.l.b16 %v3487
        %v3788 = vunpack.c.l.b16 %v3497
        %v3789 = vunpack.c.l.b16 %v3511
        %v3790 = vunpack.c.l.b16 %v3521
        %v3791 = vunpack.c.l.b16 %v3535
        %v3792 = vunpack.c.l.b16 %v3545
        %v3793 = vunpack.c.l.b16 %v3559
        %v3794 = vunpack.c.l.b16 %v3569
        %v3795 = vunpack.c.l.b16 %v3583
        %v3796 = vunpack.c.l.b16 %v3593
        %v3797 = vunpack.c.l.b16 %v3607
        %v3798 = vunpack.c.l.b16 %v3617
        %v3799 = vunpack.c.l.b16 %v3631
        %v3800 = vunpack.c.l.b16 %v3641
        %v3801 = vunpack.c.l.b16 %v3655
        %v3802 = vunpack.c.l.b16 %v3665
        %v3803 = vunpack.c.l.b16 %v3679
        %v3804 = vunpack.c.l.b16 %v3689
        %v3805 = vunpack.c.l.b16 %v3703
        %v3806 = vunpack.c.l.b16 %v3713
        %v3807 = vunpack.c.l.b16 %v3727
        %v3808 = vunpack.c.l.b16 %v3737
        %v3809 = vunpack.c.l.b16 %v3751
        %v3810 = vunpack.c.l.b16 %v3761
        %v3811 = vpack.c.b16 %v3780, %v3779
        %v3812 = vpack.c.b16 %v3782, %v3781
        %v3813 = vpack.c.b16 %v3784, %v3783
        %v3814 = vpack.c.b16 %v3786, %v3785
        %v3815 = vpack.c.b16 %v3788, %v3787
        %v3816 = vpack.c.b16 %v3790, %v3789
        %v3817 = vpack.c.b16 %v3792, %v3791
        %v3818 = vpack.c.b16 %v3794, %v3793
        %v3819 = vpack.c.b16 %v3796, %v3795
        %v3820 = vpack.c.b16 %v3798, %v3797
        %v3821 = vpack.c.b16 %v3800, %v3799
        %v3822 = vpack.c.b16 %v3802, %v3801
        %v3823 = vpack.c.b16 %v3804, %v3803
        %v3824 = vpack.c.b16 %v3806, %v3805
        %v3825 = vpack.c.b16 %v3808, %v3807
        %v3826 = vpack.c.b16 %v3810, %v3809
        %v3859 = vunpack.c.l.b16 %v3763
        %v3860 = vunpack.c.l.b16 %v3764
        %v3861 = vunpack.c.l.b16 %v3765
        %v3862 = vunpack.c.l.b16 %v3766
        %v3863 = vunpack.c.l.b16 %v3767
        %v3864 = vunpack.c.l.b16 %v3768
        %v3865 = vunpack.c.l.b16 %v3769
        %v3866 = vunpack.c.l.b16 %v3770
        %v3867 = vunpack.c.l.b16 %v3771
        %v3868 = vunpack.c.l.b16 %v3772
        %v3869 = vunpack.c.l.b16 %v3773
        %v3870 = vunpack.c.l.b16 %v3774
        %v3871 = vunpack.c.l.b16 %v3775
        %v3872 = vunpack.c.l.b16 %v3776
        %v3873 = vunpack.c.l.b16 %v3777
        %v3874 = vunpack.c.l.b16 %v3778
        %v3875 = vpack.c.b16 %v3860, %v3859
        %v3876 = vpack.c.b16 %v3862, %v3861
        %v3877 = vpack.c.b16 %v3864, %v3863
        %v3878 = vpack.c.b16 %v3866, %v3865
        %v3879 = vpack.c.b16 %v3868, %v3867
        %v3880 = vpack.c.b16 %v3870, %v3869
        %v3881 = vpack.c.b16 %v3872, %v3871
        %v3882 = vpack.c.b16 %v3874, %v3873
        %3891 = vmatprep.subr.bf16.mxu0 0
        %3892 = vmatpush1.bf16.msra.mxu0 %v3875
        %3893 = vmatprep.subr.bf16.mxu0 0
        %3894 = vmatpush1.bf16.msra.mxu0 %v3876
        %3895 = vmatprep.subr.bf16.mxu0 0
        %3896 = vmatpush1.bf16.msra.mxu0 %v3877
        %3897 = vmatprep.subr.bf16.mxu0 0
        %3898 = vmatpush1.bf16.msra.mxu0 %v3878
        %3899 = vmatprep.subr.bf16.mxu0 0
        %3900 = vmatpush1.bf16.msra.mxu0 %v3879
        %3901 = vmatprep.subr.bf16.mxu0 0
        %3902 = vmatpush1.bf16.msra.mxu0 %v3880
        %3903 = vmatprep.subr.bf16.mxu0 0
        %3904 = vmatpush1.bf16.msra.mxu0 %v3881
        %3905 = vmatprep.subr.bf16.mxu0 0
        %3906 = vmatpush1.bf16.msra.mxu0 %v3882
        %3907 = vmatprep.subr.bf16.mxu0 0
        %3908 = vmatpush1.bf16.msra.mxu0 0
        %3909 = vmatprep.subr.bf16.mxu0 0
        %3910 = vmatpush1.bf16.msra.mxu0 0
        %3911 = vmatprep.subr.bf16.mxu0 0
        %3912 = vmatpush1.bf16.msra.mxu0 0
        %3913 = vmatprep.subr.bf16.mxu0 0
        %3914 = vmatpush1.bf16.msra.mxu0 0
        %3915 = vmatprep.subr.bf16.mxu0 0
        %3916 = vmatpush1.bf16.msra.mxu0 0
        %3917 = vmatprep.subr.bf16.mxu0 0
        %3918 = vmatpush1.bf16.msra.mxu0 0
        %3919 = vmatprep.subr.bf16.mxu0 0
        %3920 = vmatpush1.bf16.msra.mxu0 0
        %3921 = vmatprep.subr.bf16.mxu0 0
        %3922 = vmatpush1.bf16.msra.mxu0 0
        %3923 = vmatprep.mubr.bf16.mxu0 0
        %3924 = vmatmul.mubr.bf16.gmra.mrb[0].mxu0 %v3811
        %v3925 = vpop.f32.mrb[0].mxu0
        %v3926 = vadd.f32 0.0, %v3925
        %v3927 = vpop.f32.mrb[0].mxu0
        %v3928 = vpop.f32.mrb[0].mxu0
        %v3929 = vadd.f32 0.0, %v3928
        %v3930 = vpop.f32.mrb[0].mxu0
        %3931 = vmatprep.mubr.bf16.mxu0 0
        %3932 = vmatmul.mubr.bf16.gmra.mrb[0].mxu0 %v3812
        %v3933 = vpop.f32.mrb[0].mxu0
        %v3934 = vadd.f32 0.0, %v3933
        %v3935 = vpop.f32.mrb[0].mxu0
        %v3936 = vpop.f32.mrb[0].mxu0
        %v3937 = vadd.f32 0.0, %v3936
        %v3938 = vpop.f32.mrb[0].mxu0
        %3939 = vmatprep.mubr.bf16.mxu0 0
        %3940 = vmatmul.mubr.bf16.gmra.mrb[0].mxu0 %v3813
        %v3941 = vpop.f32.mrb[0].mxu0
        %v3942 = vadd.f32 0.0, %v3941
        %v3943 = vpop.f32.mrb[0].mxu0
        %v3944 = vpop.f32.mrb[0].mxu0
        %v3945 = vadd.f32 0.0, %v3944
        %v3946 = vpop.f32.mrb[0].mxu0
        %3947 = vmatprep.mubr.bf16.mxu0 0
        %3948 = vmatmul.mubr.bf16.gmra.mrb[0].mxu0 %v3814
        %v3949 = vpop.f32.mrb[0].mxu0
        %v3950 = vadd.f32 0.0, %v3949
        %v3951 = vpop.f32.mrb[0].mxu0
        %v3952 = vpop.f32.mrb[0].mxu0
        %v3953 = vadd.f32 0.0, %v3952
        %v3954 = vpop.f32.mrb[0].mxu0
        %3955 = vmatprep.mubr.bf16.mxu0 0
        %3956 = vmatmul.mubr.bf16.gmra.mrb[0].mxu0 %v3815
        %v3957 = vpop.f32.mrb[0].mxu0
        %v3958 = vadd.f32 0.0, %v3957
        %v3959 = vpop.f32.mrb[0].mxu0
        %v3960 = vpop.f32.mrb[0].mxu0
        %v3961 = vadd.f32 0.0, %v3960
        %v3962 = vpop.f32.mrb[0].mxu0
        %3963 = vmatprep.mubr.bf16.mxu0 0
        %3964 = vmatmul.mubr.bf16.gmra.mrb[0].mxu0 %v3816
        %v3965 = vpop.f32.mrb[0].mxu0
        %v3966 = vadd.f32 0.0, %v3965
        %v3967 = vpop.f32.mrb[0].mxu0
        %v3968 = vpop.f32.mrb[0].mxu0
        %v3969 = vadd.f32 0.0, %v3968
        %v3970 = vpop.f32.mrb[0].mxu0
        %3971 = vmatprep.mubr.bf16.mxu0 0
        %3972 = vmatmul.mubr.bf16.gmra.mrb[0].mxu0 %v3817
        %v3973 = vpop.f32.mrb[0].mxu0
        %v3974 = vadd.f32 0.0, %v3973
        %v3975 = vpop.f32.mrb[0].mxu0
        %v3976 = vpop.f32.mrb[0].mxu0
        %v3977 = vadd.f32 0.0, %v3976
        %v3978 = vpop.f32.mrb[0].mxu0
        %3979 = vmatprep.mubr.bf16.mxu0 0
        %3980 = vmatmul.mubr.bf16.gmra.mrb[0].mxu0 %v3818
        %v3981 = vpop.f32.mrb[0].mxu0
        %v3982 = vadd.f32 0.0, %v3981
        %v3983 = vpop.f32.mrb[0].mxu0
        %v3984 = vpop.f32.mrb[0].mxu0
        %v3985 = vadd.f32 0.0, %v3984
        %v3986 = vpop.f32.mrb[0].mxu0
        %3987 = vmatprep.mubr.bf16.mxu0 0
        %3988 = vmatmul.mubr.bf16.gmra.mrb[0].mxu0 %v3819
        %v3989 = vpop.f32.mrb[0].mxu0
        %v3990 = vadd.f32 0.0, %v3989
        %v3991 = vpop.f32.mrb[0].mxu0
        %v3992 = vpop.f32.mrb[0].mxu0
        %v3993 = vadd.f32 0.0, %v3992
        %v3994 = vpop.f32.mrb[0].mxu0
        %3995 = vmatprep.mubr.bf16.mxu0 0
        %3996 = vmatmul.mubr.bf16.gmra.mrb[0].mxu0 %v3820
        %v3997 = vpop.f32.mrb[0].mxu0
        %v3998 = vadd.f32 0.0, %v3997
        %v3999 = vpop.f32.mrb[0].mxu0
        %v4000 = vpop.f32.mrb[0].mxu0
        %v4001 = vadd.f32 0.0, %v4000
        %v4002 = vpop.f32.mrb[0].mxu0
        %4003 = vmatprep.mubr.bf16.mxu0 0
        %4004 = vmatmul.mubr.bf16.gmra.mrb[0].mxu0 %v3821
        %v4005 = vpop.f32.mrb[0].mxu0
        %v4006 = vadd.f32 0.0, %v4005
        %v4007 = vpop.f32.mrb[0].mxu0
        %v4008 = vpop.f32.mrb[0].mxu0
        %v4009 = vadd.f32 0.0, %v4008
        %v4010 = vpop.f32.mrb[0].mxu0
        %4011 = vmatprep.mubr.bf16.mxu0 0
        %4012 = vmatmul.mubr.bf16.gmra.mrb[0].mxu0 %v3822
        %v4013 = vpop.f32.mrb[0].mxu0
        %v4014 = vadd.f32 0.0, %v4013
        %v4015 = vpop.f32.mrb[0].mxu0
        %v4016 = vpop.f32.mrb[0].mxu0
        %v4017 = vadd.f32 0.0, %v4016
        %v4018 = vpop.f32.mrb[0].mxu0
        %4019 = vmatprep.mubr.bf16.mxu0 0
        %4020 = vmatmul.mubr.bf16.gmra.mrb[0].mxu0 %v3823
        %v4021 = vpop.f32.mrb[0].mxu0
        %v4022 = vadd.f32 0.0, %v4021
        %v4023 = vpop.f32.mrb[0].mxu0
        %v4024 = vpop.f32.mrb[0].mxu0
        %v4025 = vadd.f32 0.0, %v4024
        %v4026 = vpop.f32.mrb[0].mxu0
        %4027 = vmatprep.mubr.bf16.mxu0 0
        %4028 = vmatmul.mubr.bf16.gmra.mrb[0].mxu0 %v3824
        %v4029 = vpop.f32.mrb[0].mxu0
        %v4030 = vadd.f32 0.0, %v4029
        %v4031 = vpop.f32.mrb[0].mxu0
        %v4032 = vpop.f32.mrb[0].mxu0
        %v4033 = vadd.f32 0.0, %v4032
        %v4034 = vpop.f32.mrb[0].mxu0
        %4035 = vmatprep.mubr.bf16.mxu0 0
        %4036 = vmatmul.mubr.bf16.gmra.mrb[0].mxu0 %v3825
        %v4037 = vpop.f32.mrb[0].mxu0
        %v4038 = vadd.f32 0.0, %v4037
        %v4039 = vpop.f32.mrb[0].mxu0
        %v4040 = vpop.f32.mrb[0].mxu0
        %v4041 = vadd.f32 0.0, %v4040
        %v4042 = vpop.f32.mrb[0].mxu0
        %4043 = vmatprep.mubr.bf16.mxu0 0
        %4044 = vmatmul.mubr.bf16.gmra.mrb[0].mxu0 %v3826
        %v4045 = vpop.f32.mrb[0].mxu0
        %v4046 = vadd.f32 0.0, %v4045
        %v4047 = vpop.f32.mrb[0].mxu0
        %v4048 = vpop.f32.mrb[0].mxu0
        %v4049 = vadd.f32 0.0, %v4048
        %v4050 = vpop.f32.mrb[0].mxu0
        %4051 = vdwg.mxu0
        %v4052 = vadd.f32 %v3298, %v3926
        %v4053 = vadd.f32 %v3299, %v3929
        %v4054 = vadd.f32 %v3300, %v3934
        %v4055 = vadd.f32 %v3301, %v3937
        %v4056 = vadd.f32 %v3302, %v3942
        %v4057 = vadd.f32 %v3303, %v3945
        %v4058 = vadd.f32 %v3304, %v3950
        %v4059 = vadd.f32 %v3305, %v3953
        %v4060 = vadd.f32 %v3306, %v3958
        %v4061 = vadd.f32 %v3307, %v3961
        %v4062 = vadd.f32 %v3308, %v3966
        %v4063 = vadd.f32 %v3309, %v3969
        %v4064 = vadd.f32 %v3310, %v3974
        %v4065 = vadd.f32 %v3311, %v3977
        %v4066 = vadd.f32 %v3312, %v3982
        %v4067 = vadd.f32 %v3313, %v3985
        %v4068 = vadd.f32 %v3314, %v3990
        %v4069 = vadd.f32 %v3315, %v3993
        %v4070 = vadd.f32 %v3316, %v3998
        %v4071 = vadd.f32 %v3317, %v4001
        %v4072 = vadd.f32 %v3318, %v4006
        %v4073 = vadd.f32 %v3319, %v4009
        %v4074 = vadd.f32 %v3320, %v4014
        %v4075 = vadd.f32 %v3321, %v4017
        %v4076 = vadd.f32 %v3322, %v4022
        %v4077 = vadd.f32 %v3323, %v4025
        %v4078 = vadd.f32 %v3324, %v4030
        %v4079 = vadd.f32 %v3325, %v4033
        %v4080 = vadd.f32 %v3326, %v4038
        %v4081 = vadd.f32 %v3327, %v4041
        %v4082 = vadd.f32 %v3328, %v4046
        %v4083 = vadd.f32 %v3329, %v4049
        %v4084 = vld [vmem:[%s1295] sm:$0xe]
        %v4085 = vld [vmem:[%s1295 + $0xc] sm:$0xe]
        %v4086 = vld [vmem:[%s1295 + $0x18] sm:$0xe]
        %v4087 = vld [vmem:[%s1295 + $0x24] sm:$0xe]
        %v4088 = vld [vmem:[%s1295 + $0x30] sm:$0xe]
        %v4089 = vld [vmem:[%s1295 + $0x3c] sm:$0xe]
        %v4090 = vld [vmem:[%s1295 + $0x48] sm:$0xe]
        %v4091 = vld [vmem:[%s1295 + $0x54] sm:$0xe]
        %v4092 = vld [vmem:[%s1295 + $0x60] sm:$0xe]
        %v4093 = vld [vmem:[%s1295 + $0x6c] sm:$0xe]
        %v4094 = vld [vmem:[%s1295 + $0x78] sm:$0xe]
        %v4095 = vld [vmem:[%s1295 + $0x84] sm:$0xe]
        %v4096 = vld [vmem:[%s1295 + $0x90] sm:$0xe]
        %v4097 = vld [vmem:[%s1295 + $0x9c] sm:$0xe]
        %v4098 = vld [vmem:[%s1295 + $0xa8] sm:$0xe]
        %v4099 = vld [vmem:[%s1295 + $0xb4] sm:$0xe]
        %v4148 = vrot.slane %v4084, 5
        %v4149 = vrot.slane %v4148, 4
        %v4150 = vrot.slane %v3331, 5
        %v4151 = vsel %vm2509, %v4149, %v4150
        %v4152 = vrot.slane %v4150, 4
        %v4153 = vrot.slane %v3332, 5
        %v4154 = vsel %vm2509, %v4152, %v4153
        %v4155 = vrot.slane %v4085, 5
        %v4156 = vrot.slane %v4155, 4
        %v4157 = vrot.slane %v3334, 5
        %v4158 = vsel %vm2509, %v4156, %v4157
        %v4159 = vrot.slane %v4157, 4
        %v4160 = vrot.slane %v3335, 5
        %v4161 = vsel %vm2509, %v4159, %v4160
        %v4162 = vrot.slane %v4086, 5
        %v4163 = vrot.slane %v4162, 4
        %v4164 = vrot.slane %v3337, 5
        %v4165 = vsel %vm2509, %v4163, %v4164
        %v4166 = vrot.slane %v4164, 4
        %v4167 = vrot.slane %v3338, 5
        %v4168 = vsel %vm2509, %v4166, %v4167
        %v4169 = vrot.slane %v4087, 5
        %v4170 = vrot.slane %v4169, 4
        %v4171 = vrot.slane %v3340, 5
        %v4172 = vsel %vm2509, %v4170, %v4171
        %v4173 = vrot.slane %v4171, 4
        %v4174 = vrot.slane %v3341, 5
        %v4175 = vsel %vm2509, %v4173, %v4174
        %v4176 = vrot.slane %v4088, 5
        %v4177 = vrot.slane %v4176, 4
        %v4178 = vrot.slane %v3343, 5
        %v4179 = vsel %vm2509, %v4177, %v4178
        %v4180 = vrot.slane %v4178, 4
        %v4181 = vrot.slane %v3344, 5
        %v4182 = vsel %vm2509, %v4180, %v4181
        %v4183 = vrot.slane %v4089, 5
        %v4184 = vrot.slane %v4183, 4
        %v4185 = vrot.slane %v3346, 5
        %v4186 = vsel %vm2509, %v4184, %v4185
        %v4187 = vrot.slane %v4185, 4
        %v4188 = vrot.slane %v3347, 5
        %v4189 = vsel %vm2509, %v4187, %v4188
        %v4190 = vrot.slane %v4090, 5
        %v4191 = vrot.slane %v4190, 4
        %v4192 = vrot.slane %v3349, 5
        %v4193 = vsel %vm2509, %v4191, %v4192
        %v4194 = vrot.slane %v4192, 4
        %v4195 = vrot.slane %v3350, 5
        %v4196 = vsel %vm2509, %v4194, %v4195
        %v4197 = vrot.slane %v4091, 5
        %v4198 = vrot.slane %v4197, 4
        %v4199 = vrot.slane %v3352, 5
        %v4200 = vsel %vm2509, %v4198, %v4199
        %v4201 = vrot.slane %v4199, 4
        %v4202 = vrot.slane %v3353, 5
        %v4203 = vsel %vm2509, %v4201, %v4202
        %v4204 = vrot.slane %v4092, 5
        %v4205 = vrot.slane %v4204, 4
        %v4206 = vrot.slane %v3355, 5
        %v4207 = vsel %vm2509, %v4205, %v4206
        %v4208 = vrot.slane %v4206, 4
        %v4209 = vrot.slane %v3356, 5
        %v4210 = vsel %vm2509, %v4208, %v4209
        %v4211 = vrot.slane %v4093, 5
        %v4212 = vrot.slane %v4211, 4
        %v4213 = vrot.slane %v3358, 5
        %v4214 = vsel %vm2509, %v4212, %v4213
        %v4215 = vrot.slane %v4213, 4
        %v4216 = vrot.slane %v3359, 5
        %v4217 = vsel %vm2509, %v4215, %v4216
        %v4218 = vrot.slane %v4094, 5
        %v4219 = vrot.slane %v4218, 4
        %v4220 = vrot.slane %v3361, 5
        %v4221 = vsel %vm2509, %v4219, %v4220
        %v4222 = vrot.slane %v4220, 4
        %v4223 = vrot.slane %v3362, 5
        %v4224 = vsel %vm2509, %v4222, %v4223
        %v4225 = vrot.slane %v4095, 5
        %v4226 = vrot.slane %v4225, 4
        %v4227 = vrot.slane %v3364, 5
        %v4228 = vsel %vm2509, %v4226, %v4227
        %v4229 = vrot.slane %v4227, 4
        %v4230 = vrot.slane %v3365, 5
        %v4231 = vsel %vm2509, %v4229, %v4230
        %v4232 = vrot.slane %v4096, 5
        %v4233 = vrot.slane %v4232, 4
        %v4234 = vrot.slane %v3367, 5
        %v4235 = vsel %vm2509, %v4233, %v4234
        %v4236 = vrot.slane %v4234, 4
        %v4237 = vrot.slane %v3368, 5
        %v4238 = vsel %vm2509, %v4236, %v4237
        %v4239 = vrot.slane %v4097, 5
        %v4240 = vrot.slane %v4239, 4
        %v4241 = vrot.slane %v3370, 5
        %v4242 = vsel %vm2509, %v4240, %v4241
        %v4243 = vrot.slane %v4241, 4
        %v4244 = vrot.slane %v3371, 5
        %v4245 = vsel %vm2509, %v4243, %v4244
        %v4246 = vrot.slane %v4098, 5
        %v4247 = vrot.slane %v4246, 4
        %v4248 = vrot.slane %v3373, 5
        %v4249 = vsel %vm2509, %v4247, %v4248
        %v4250 = vrot.slane %v4248, 4
        %v4251 = vrot.slane %v3374, 5
        %v4252 = vsel %vm2509, %v4250, %v4251
        %v4253 = vrot.slane %v4099, 5
        %v4254 = vrot.slane %v4253, 4
        %v4255 = vrot.slane %v3376, 5
        %v4256 = vsel %vm2509, %v4254, %v4255
        %v4257 = vrot.slane %v4255, 4
        %v4258 = vrot.slane %v3377, 5
        %v4259 = vsel %vm2509, %v4257, %v4258
        %s4260 = scalar_lea.vmem %s4, 320
        %v4261 = vld [vmem:[%s4260] sm:$0xf]
        %v4262 = vld [vmem:[%s4260 + $0x4] sm:$0xf]
        %v4263 = vld [vmem:[%s4260 + $0x8] sm:$0xf]
        %v4264 = vld [vmem:[%s4260 + $0xc] sm:$0xf]
        %v4265 = vld [vmem:[%s4260 + $0x10] sm:$0xf]
        %v4266 = vld [vmem:[%s4260 + $0x14] sm:$0xf]
        %v4267 = vld [vmem:[%s4260 + $0x18] sm:$0xf]
        %v4268 = vld [vmem:[%s4260 + $0x1c] sm:$0xf]
        %v4269 = vld [vmem:[%s4260 + $0x20] sm:$0xf]
        %v4270 = vld [vmem:[%s4260 + $0x24] sm:$0xf]
        %v4271 = vld [vmem:[%s4260 + $0x28] sm:$0xf]
        %v4272 = vld [vmem:[%s4260 + $0x2c] sm:$0xf]
        %v4273 = vld [vmem:[%s4260 + $0x30] sm:$0xf]
        %v4274 = vld [vmem:[%s4260 + $0x34] sm:$0xf]
        %v4275 = vld [vmem:[%s4260 + $0x38] sm:$0xf]
        %v4276 = vld [vmem:[%s4260 + $0x3c] sm:$0xf]
        %v4277 = vunpack.c.l.b16 %v4151
        %v4278 = vunpack.c.l.b16 %v4154
        %v4279 = vunpack.c.l.b16 %v4158
        %v4280 = vunpack.c.l.b16 %v4161
        %v4281 = vunpack.c.l.b16 %v4165
        %v4282 = vunpack.c.l.b16 %v4168
        %v4283 = vunpack.c.l.b16 %v4172
        %v4284 = vunpack.c.l.b16 %v4175
        %v4285 = vunpack.c.l.b16 %v4179
        %v4286 = vunpack.c.l.b16 %v4182
        %v4287 = vunpack.c.l.b16 %v4186
        %v4288 = vunpack.c.l.b16 %v4189
        %v4289 = vunpack.c.l.b16 %v4193
        %v4290 = vunpack.c.l.b16 %v4196
        %v4291 = vunpack.c.l.b16 %v4200
        %v4292 = vunpack.c.l.b16 %v4203
        %v4293 = vunpack.c.l.b16 %v4207
        %v4294 = vunpack.c.l.b16 %v4210
        %v4295 = vunpack.c.l.b16 %v4214
        %v4296 = vunpack.c.l.b16 %v4217
        %v4297 = vunpack.c.l.b16 %v4221
        %v4298 = vunpack.c.l.b16 %v4224
        %v4299 = vunpack.c.l.b16 %v4228
        %v4300 = vunpack.c.l.b16 %v4231
        %v4301 = vunpack.c.l.b16 %v4235
        %v4302 = vunpack.c.l.b16 %v4238
        %v4303 = vunpack.c.l.b16 %v4242
        %v4304 = vunpack.c.l.b16 %v4245
        %v4305 = vunpack.c.l.b16 %v4249
        %v4306 = vunpack.c.l.b16 %v4252
        %v4307 = vunpack.c.l.b16 %v4256
        %v4308 = vunpack.c.l.b16 %v4259
        %v4309 = vpack.c.b16 %v4278, %v4277
        %v4310 = vpack.c.b16 %v4280, %v4279
        %v4311 = vpack.c.b16 %v4282, %v4281
        %v4312 = vpack.c.b16 %v4284, %v4283
        %v4313 = vpack.c.b16 %v4286, %v4285
        %v4314 = vpack.c.b16 %v4288, %v4287
        %v4315 = vpack.c.b16 %v4290, %v4289
        %v4316 = vpack.c.b16 %v4292, %v4291
        %v4317 = vpack.c.b16 %v4294, %v4293
        %v4318 = vpack.c.b16 %v4296, %v4295
        %v4319 = vpack.c.b16 %v4298, %v4297
        %v4320 = vpack.c.b16 %v4300, %v4299
        %v4321 = vpack.c.b16 %v4302, %v4301
        %v4322 = vpack.c.b16 %v4304, %v4303
        %v4323 = vpack.c.b16 %v4306, %v4305
        %v4324 = vpack.c.b16 %v4308, %v4307
        %v4357 = vunpack.c.l.b16 %v4261
        %v4358 = vunpack.c.l.b16 %v4262
        %v4359 = vunpack.c.l.b16 %v4263
        %v4360 = vunpack.c.l.b16 %v4264
        %v4361 = vunpack.c.l.b16 %v4265
        %v4362 = vunpack.c.l.b16 %v4266
        %v4363 = vunpack.c.l.b16 %v4267
        %v4364 = vunpack.c.l.b16 %v4268
        %v4365 = vunpack.c.l.b16 %v4269
        %v4366 = vunpack.c.l.b16 %v4270
        %v4367 = vunpack.c.l.b16 %v4271
        %v4368 = vunpack.c.l.b16 %v4272
        %v4369 = vunpack.c.l.b16 %v4273
        %v4370 = vunpack.c.l.b16 %v4274
        %v4371 = vunpack.c.l.b16 %v4275
        %v4372 = vunpack.c.l.b16 %v4276
        %v4373 = vpack.c.b16 %v4358, %v4357
        %v4374 = vpack.c.b16 %v4360, %v4359
        %v4375 = vpack.c.b16 %v4362, %v4361
        %v4376 = vpack.c.b16 %v4364, %v4363
        %v4377 = vpack.c.b16 %v4366, %v4365
        %v4378 = vpack.c.b16 %v4368, %v4367
        %v4379 = vpack.c.b16 %v4370, %v4369
        %v4380 = vpack.c.b16 %v4372, %v4371
        %4389 = vmatprep.subr.bf16.mxu0 0
        %4390 = vmatpush1.bf16.msra.mxu0 %v4373
        %4391 = vmatprep.subr.bf16.mxu0 0
        %4392 = vmatpush1.bf16.msra.mxu0 %v4374
        %4393 = vmatprep.subr.bf16.mxu0 0
        %4394 = vmatpush1.bf16.msra.mxu0 %v4375
        %4395 = vmatprep.subr.bf16.mxu0 0
        %4396 = vmatpush1.bf16.msra.mxu0 %v4376
        %4397 = vmatprep.subr.bf16.mxu0 0
        %4398 = vmatpush1.bf16.msra.mxu0 %v4377
        %4399 = vmatprep.subr.bf16.mxu0 0
        %4400 = vmatpush1.bf16.msra.mxu0 %v4378
        %4401 = vmatprep.subr.bf16.mxu0 0
        %4402 = vmatpush1.bf16.msra.mxu0 %v4379
        %4403 = vmatprep.subr.bf16.mxu0 0
        %4404 = vmatpush1.bf16.msra.mxu0 %v4380
        %4405 = vmatprep.subr.bf16.mxu0 0
        %4406 = vmatpush1.bf16.msra.mxu0 0
        %4407 = vmatprep.subr.bf16.mxu0 0
        %4408 = vmatpush1.bf16.msra.mxu0 0
        %4409 = vmatprep.subr.bf16.mxu0 0
        %4410 = vmatpush1.bf16.msra.mxu0 0
        %4411 = vmatprep.subr.bf16.mxu0 0
        %4412 = vmatpush1.bf16.msra.mxu0 0
        %4413 = vmatprep.subr.bf16.mxu0 0
        %4414 = vmatpush1.bf16.msra.mxu0 0
        %4415 = vmatprep.subr.bf16.mxu0 0
        %4416 = vmatpush1.bf16.msra.mxu0 0
        %4417 = vmatprep.subr.bf16.mxu0 0
        %4418 = vmatpush1.bf16.msra.mxu0 0
        %4419 = vmatprep.subr.bf16.mxu0 0
        %4420 = vmatpush1.bf16.msra.mxu0 0
        %4421 = vmatprep.mubr.bf16.mxu0 0
        %4422 = vmatmul.mubr.bf16.gmra.mrb[0].mxu0 %v4309
        %v4423 = vpop.f32.mrb[0].mxu0
        %v4424 = vadd.f32 0.0, %v4423
        %v4425 = vpop.f32.mrb[0].mxu0
        %v4426 = vpop.f32.mrb[0].mxu0
        %v4427 = vadd.f32 0.0, %v4426
        %v4428 = vpop.f32.mrb[0].mxu0
        %4429 = vmatprep.mubr.bf16.mxu0 0
        %4430 = vmatmul.mubr.bf16.gmra.mrb[0].mxu0 %v4310
        %v4431 = vpop.f32.mrb[0].mxu0
        %v4432 = vadd.f32 0.0, %v4431
        %v4433 = vpop.f32.mrb[0].mxu0
        %v4434 = vpop.f32.mrb[0].mxu0
        %v4435 = vadd.f32 0.0, %v4434
        %v4436 = vpop.f32.mrb[0].mxu0
        %4437 = vmatprep.mubr.bf16.mxu0 0
        %4438 = vmatmul.mubr.bf16.gmra.mrb[0].mxu0 %v4311
        %v4439 = vpop.f32.mrb[0].mxu0
        %v4440 = vadd.f32 0.0, %v4439
        %v4441 = vpop.f32.mrb[0].mxu0
        %v4442 = vpop.f32.mrb[0].mxu0
        %v4443 = vadd.f32 0.0, %v4442
        %v4444 = vpop.f32.mrb[0].mxu0
        %4445 = vmatprep.mubr.bf16.mxu0 0
        %4446 = vmatmul.mubr.bf16.gmra.mrb[0].mxu0 %v4312
        %v4447 = vpop.f32.mrb[0].mxu0
        %v4448 = vadd.f32 0.0, %v4447
        %v4449 = vpop.f32.mrb[0].mxu0
        %v4450 = vpop.f32.mrb[0].mxu0
        %v4451 = vadd.f32 0.0, %v4450
        %v4452 = vpop.f32.mrb[0].mxu0
        %4453 = vmatprep.mubr.bf16.mxu0 0
        %4454 = vmatmul.mubr.bf16.gmra.mrb[0].mxu0 %v4313
        %v4455 = vpop.f32.mrb[0].mxu0
        %v4456 = vadd.f32 0.0, %v4455
        %v4457 = vpop.f32.mrb[0].mxu0
        %v4458 = vpop.f32.mrb[0].mxu0
        %v4459 = vadd.f32 0.0, %v4458
        %v4460 = vpop.f32.mrb[0].mxu0
        %4461 = vmatprep.mubr.bf16.mxu0 0
        %4462 = vmatmul.mubr.bf16.gmra.mrb[0].mxu0 %v4314
        %v4463 = vpop.f32.mrb[0].mxu0
        %v4464 = vadd.f32 0.0, %v4463
        %v4465 = vpop.f32.mrb[0].mxu0
        %v4466 = vpop.f32.mrb[0].mxu0
        %v4467 = vadd.f32 0.0, %v4466
        %v4468 = vpop.f32.mrb[0].mxu0
        %4469 = vmatprep.mubr.bf16.mxu0 0
        %4470 = vmatmul.mubr.bf16.gmra.mrb[0].mxu0 %v4315
        %v4471 = vpop.f32.mrb[0].mxu0
        %v4472 = vadd.f32 0.0, %v4471
        %v4473 = vpop.f32.mrb[0].mxu0
        %v4474 = vpop.f32.mrb[0].mxu0
        %v4475 = vadd.f32 0.0, %v4474
        %v4476 = vpop.f32.mrb[0].mxu0
        %4477 = vmatprep.mubr.bf16.mxu0 0
        %4478 = vmatmul.mubr.bf16.gmra.mrb[0].mxu0 %v4316
        %v4479 = vpop.f32.mrb[0].mxu0
        %v4480 = vadd.f32 0.0, %v4479
        %v4481 = vpop.f32.mrb[0].mxu0
        %v4482 = vpop.f32.mrb[0].mxu0
        %v4483 = vadd.f32 0.0, %v4482
        %v4484 = vpop.f32.mrb[0].mxu0
        %4485 = vmatprep.mubr.bf16.mxu0 0
        %4486 = vmatmul.mubr.bf16.gmra.mrb[0].mxu0 %v4317
        %v4487 = vpop.f32.mrb[0].mxu0
        %v4488 = vadd.f32 0.0, %v4487
        %v4489 = vpop.f32.mrb[0].mxu0
        %v4490 = vpop.f32.mrb[0].mxu0
        %v4491 = vadd.f32 0.0, %v4490
        %v4492 = vpop.f32.mrb[0].mxu0
        %4493 = vmatprep.mubr.bf16.mxu0 0
        %4494 = vmatmul.mubr.bf16.gmra.mrb[0].mxu0 %v4318
        %v4495 = vpop.f32.mrb[0].mxu0
        %v4496 = vadd.f32 0.0, %v4495
        %v4497 = vpop.f32.mrb[0].mxu0
        %v4498 = vpop.f32.mrb[0].mxu0
        %v4499 = vadd.f32 0.0, %v4498
        %v4500 = vpop.f32.mrb[0].mxu0
        %4501 = vmatprep.mubr.bf16.mxu0 0
        %4502 = vmatmul.mubr.bf16.gmra.mrb[0].mxu0 %v4319
        %v4503 = vpop.f32.mrb[0].mxu0
        %v4504 = vadd.f32 0.0, %v4503
        %v4505 = vpop.f32.mrb[0].mxu0
        %v4506 = vpop.f32.mrb[0].mxu0
        %v4507 = vadd.f32 0.0, %v4506
        %v4508 = vpop.f32.mrb[0].mxu0
        %4509 = vmatprep.mubr.bf16.mxu0 0
        %4510 = vmatmul.mubr.bf16.gmra.mrb[0].mxu0 %v4320
        %v4511 = vpop.f32.mrb[0].mxu0
        %v4512 = vadd.f32 0.0, %v4511
        %v4513 = vpop.f32.mrb[0].mxu0
        %v4514 = vpop.f32.mrb[0].mxu0
        %v4515 = vadd.f32 0.0, %v4514
        %v4516 = vpop.f32.mrb[0].mxu0
        %4517 = vmatprep.mubr.bf16.mxu0 0
        %4518 = vmatmul.mubr.bf16.gmra.mrb[0].mxu0 %v4321
        %v4519 = vpop.f32.mrb[0].mxu0
        %v4520 = vadd.f32 0.0, %v4519
        %v4521 = vpop.f32.mrb[0].mxu0
        %v4522 = vpop.f32.mrb[0].mxu0
        %v4523 = vadd.f32 0.0, %v4522
        %v4524 = vpop.f32.mrb[0].mxu0
        %4525 = vmatprep.mubr.bf16.mxu0 0
        %4526 = vmatmul.mubr.bf16.gmra.mrb[0].mxu0 %v4322
        %v4527 = vpop.f32.mrb[0].mxu0
        %v4528 = vadd.f32 0.0, %v4527
        %v4529 = vpop.f32.mrb[0].mxu0
        %v4530 = vpop.f32.mrb[0].mxu0
        %v4531 = vadd.f32 0.0, %v4530
        %v4532 = vpop.f32.mrb[0].mxu0
        %4533 = vmatprep.mubr.bf16.mxu0 0
        %4534 = vmatmul.mubr.bf16.gmra.mrb[0].mxu0 %v4323
        %v4535 = vpop.f32.mrb[0].mxu0
        %v4536 = vadd.f32 0.0, %v4535
        %v4537 = vpop.f32.mrb[0].mxu0
        %v4538 = vpop.f32.mrb[0].mxu0
        %v4539 = vadd.f32 0.0, %v4538
        %v4540 = vpop.f32.mrb[0].mxu0
        %4541 = vmatprep.mubr.bf16.mxu0 0
        %4542 = vmatmul.mubr.bf16.gmra.mrb[0].mxu0 %v4324
        %v4543 = vpop.f32.mrb[0].mxu0
        %v4544 = vadd.f32 0.0, %v4543
        %v4545 = vpop.f32.mrb[0].mxu0
        %v4546 = vpop.f32.mrb[0].mxu0
        %v4547 = vadd.f32 0.0, %v4546
        %v4548 = vpop.f32.mrb[0].mxu0
        %4549 = vdwg.mxu0
        %v4550 = vadd.f32 %v4052, %v4424
        %v4551 = vadd.f32 %v4053, %v4427
        %v4552 = vadd.f32 %v4054, %v4432
        %v4553 = vadd.f32 %v4055, %v4435
        %v4554 = vadd.f32 %v4056, %v4440
        %v4555 = vadd.f32 %v4057, %v4443
        %v4556 = vadd.f32 %v4058, %v4448
        %v4557 = vadd.f32 %v4059, %v4451
        %v4558 = vadd.f32 %v4060, %v4456
        %v4559 = vadd.f32 %v4061, %v4459
        %v4560 = vadd.f32 %v4062, %v4464
        %v4561 = vadd.f32 %v4063, %v4467
        %v4562 = vadd.f32 %v4064, %v4472
        %v4563 = vadd.f32 %v4065, %v4475
        %v4564 = vadd.f32 %v4066, %v4480
        %v4565 = vadd.f32 %v4067, %v4483
        %v4566 = vadd.f32 %v4068, %v4488
        %v4567 = vadd.f32 %v4069, %v4491
        %v4568 = vadd.f32 %v4070, %v4496
        %v4569 = vadd.f32 %v4071, %v4499
        %v4570 = vadd.f32 %v4072, %v4504
        %v4571 = vadd.f32 %v4073, %v4507
        %v4572 = vadd.f32 %v4074, %v4512
        %v4573 = vadd.f32 %v4075, %v4515
        %v4574 = vadd.f32 %v4076, %v4520
        %v4575 = vadd.f32 %v4077, %v4523
        %v4576 = vadd.f32 %v4078, %v4528
        %v4577 = vadd.f32 %v4079, %v4531
        %v4578 = vadd.f32 %v4080, %v4536
        %v4579 = vadd.f32 %v4081, %v4539
        %v4580 = vadd.f32 %v4082, %v4544
        %v4581 = vadd.f32 %v4083, %v4547
        %s4582 = scalar_lea.vmem [#allocation2], 24
        %v4583 = vld [vmem:[%s4582] sm:$0xf]
        %v4584 = vld [vmem:[%s4582 + $0x4] sm:$0xf]
        %v4585 = vld [vmem:[%s4582 + $0xc] sm:$0xf]
        %v4586 = vld [vmem:[%s4582 + $0x10] sm:$0xf]
        %v4587 = vld [vmem:[%s4582 + $0x18] sm:$0xf]
        %v4588 = vld [vmem:[%s4582 + $0x1c] sm:$0xf]
        %v4589 = vld [vmem:[%s4582 + $0x24] sm:$0xf]
        %v4590 = vld [vmem:[%s4582 + $0x28] sm:$0xf]
        %v4591 = vld [vmem:[%s4582 + $0x30] sm:$0xf]
        %v4592 = vld [vmem:[%s4582 + $0x34] sm:$0xf]
        %v4593 = vld [vmem:[%s4582 + $0x3c] sm:$0xf]
        %v4594 = vld [vmem:[%s4582 + $0x40] sm:$0xf]
        %v4595 = vld [vmem:[%s4582 + $0x48] sm:$0xf]
        %v4596 = vld [vmem:[%s4582 + $0x4c] sm:$0xf]
        %v4597 = vld [vmem:[%s4582 + $0x54] sm:$0xf]
        %v4598 = vld [vmem:[%s4582 + $0x58] sm:$0xf]
        %v4599 = vld [vmem:[%s4582 + $0x60] sm:$0xf]
        %v4600 = vld [vmem:[%s4582 + $0x64] sm:$0xf]
        %v4601 = vld [vmem:[%s4582 + $0x6c] sm:$0xf]
        %v4602 = vld [vmem:[%s4582 + $0x70] sm:$0xf]
        %v4603 = vld [vmem:[%s4582 + $0x78] sm:$0xf]
        %v4604 = vld [vmem:[%s4582 + $0x7c] sm:$0xf]
        %v4605 = vld [vmem:[%s4582 + $0x84] sm:$0xf]
        %v4606 = vld [vmem:[%s4582 + $0x88] sm:$0xf]
        %v4607 = vld [vmem:[%s4582 + $0x90] sm:$0xf]
        %v4608 = vld [vmem:[%s4582 + $0x94] sm:$0xf]
        %v4609 = vld [vmem:[%s4582 + $0x9c] sm:$0xf]
        %v4610 = vld [vmem:[%s4582 + $0xa0] sm:$0xf]
        %v4611 = vld [vmem:[%s4582 + $0xa8] sm:$0xf]
        %v4612 = vld [vmem:[%s4582 + $0xac] sm:$0xf]
        %v4613 = vld [vmem:[%s4582 + $0xb4] sm:$0xf]
        %v4614 = vld [vmem:[%s4582 + $0xb8] sm:$0xf]
        %s4615 = scalar_lea.vmem %s4, 384
        %v4616 = vld [vmem:[%s4615] sm:$0xf]
        %v4617 = vld [vmem:[%s4615 + $0x4] sm:$0xf]
        %v4618 = vld [vmem:[%s4615 + $0x8] sm:$0xf]
        %v4619 = vld [vmem:[%s4615 + $0xc] sm:$0xf]
        %v4620 = vld [vmem:[%s4615 + $0x10] sm:$0xf]
        %v4621 = vld [vmem:[%s4615 + $0x14] sm:$0xf]
        %v4622 = vld [vmem:[%s4615 + $0x18] sm:$0xf]
        %v4623 = vld [vmem:[%s4615 + $0x1c] sm:$0xf]
        %v4624 = vld [vmem:[%s4615 + $0x20] sm:$0xf]
        %v4625 = vld [vmem:[%s4615 + $0x24] sm:$0xf]
        %v4626 = vld [vmem:[%s4615 + $0x28] sm:$0xf]
        %v4627 = vld [vmem:[%s4615 + $0x2c] sm:$0xf]
        %v4628 = vld [vmem:[%s4615 + $0x30] sm:$0xf]
        %v4629 = vld [vmem:[%s4615 + $0x34] sm:$0xf]
        %v4630 = vld [vmem:[%s4615 + $0x38] sm:$0xf]
        %v4631 = vld [vmem:[%s4615 + $0x3c] sm:$0xf]
        %v4664 = vunpack.c.l.b16 %v4583
        %v4665 = vunpack.c.l.b16 %v4584
        %v4666 = vunpack.c.l.b16 %v4585
        %v4667 = vunpack.c.l.b16 %v4586
        %v4668 = vunpack.c.l.b16 %v4587
        %v4669 = vunpack.c.l.b16 %v4588
        %v4670 = vunpack.c.l.b16 %v4589
        %v4671 = vunpack.c.l.b16 %v4590
        %v4672 = vunpack.c.l.b16 %v4591
        %v4673 = vunpack.c.l.b16 %v4592
        %v4674 = vunpack.c.l.b16 %v4593
        %v4675 = vunpack.c.l.b16 %v4594
        %v4676 = vunpack.c.l.b16 %v4595
        %v4677 = vunpack.c.l.b16 %v4596
        %v4678 = vunpack.c.l.b16 %v4597
        %v4679 = vunpack.c.l.b16 %v4598
        %v4680 = vunpack.c.l.b16 %v4599
        %v4681 = vunpack.c.l.b16 %v4600
        %v4682 = vunpack.c.l.b16 %v4601
        %v4683 = vunpack.c.l.b16 %v4602
        %v4684 = vunpack.c.l.b16 %v4603
        %v4685 = vunpack.c.l.b16 %v4604
        %v4686 = vunpack.c.l.b16 %v4605
        %v4687 = vunpack.c.l.b16 %v4606
        %v4688 = vunpack.c.l.b16 %v4607
        %v4689 = vunpack.c.l.b16 %v4608
        %v4690 = vunpack.c.l.b16 %v4609
        %v4691 = vunpack.c.l.b16 %v4610
        %v4692 = vunpack.c.l.b16 %v4611
        %v4693 = vunpack.c.l.b16 %v4612
        %v4694 = vunpack.c.l.b16 %v4613
        %v4695 = vunpack.c.l.b16 %v4614
        %v4696 = vpack.c.b16 %v4665, %v4664
        %v4697 = vpack.c.b16 %v4667, %v4666
        %v4698 = vpack.c.b16 %v4669, %v4668
        %v4699 = vpack.c.b16 %v4671, %v4670
        %v4700 = vpack.c.b16 %v4673, %v4672
        %v4701 = vpack.c.b16 %v4675, %v4674
        %v4702 = vpack.c.b16 %v4677, %v4676
        %v4703 = vpack.c.b16 %v4679, %v4678
        %v4704 = vpack.c.b16 %v4681, %v4680
        %v4705 = vpack.c.b16 %v4683, %v4682
        %v4706 = vpack.c.b16 %v4685, %v4684
        %v4707 = vpack.c.b16 %v4687, %v4686
        %v4708 = vpack.c.b16 %v4689, %v4688
        %v4709 = vpack.c.b16 %v4691, %v4690
        %v4710 = vpack.c.b16 %v4693, %v4692
        %v4711 = vpack.c.b16 %v4695, %v4694
        %v4744 = vunpack.c.l.b16 %v4616
        %v4745 = vunpack.c.l.b16 %v4617
        %v4746 = vunpack.c.l.b16 %v4618
        %v4747 = vunpack.c.l.b16 %v4619
        %v4748 = vunpack.c.l.b16 %v4620
        %v4749 = vunpack.c.l.b16 %v4621
        %v4750 = vunpack.c.l.b16 %v4622
        %v4751 = vunpack.c.l.b16 %v4623
        %v4752 = vunpack.c.l.b16 %v4624
        %v4753 = vunpack.c.l.b16 %v4625
        %v4754 = vunpack.c.l.b16 %v4626
        %v4755 = vunpack.c.l.b16 %v4627
        %v4756 = vunpack.c.l.b16 %v4628
        %v4757 = vunpack.c.l.b16 %v4629
        %v4758 = vunpack.c.l.b16 %v4630
        %v4759 = vunpack.c.l.b16 %v4631
        %v4760 = vpack.c.b16 %v4745, %v4744
        %v4761 = vpack.c.b16 %v4747, %v4746
        %v4762 = vpack.c.b16 %v4749, %v4748
        %v4763 = vpack.c.b16 %v4751, %v4750
        %v4764 = vpack.c.b16 %v4753, %v4752
        %v4765 = vpack.c.b16 %v4755, %v4754
        %v4766 = vpack.c.b16 %v4757, %v4756
        %v4767 = vpack.c.b16 %v4759, %v4758
        %4776 = vmatprep.subr.bf16.mxu0 0
        %4777 = vmatpush1.bf16.msra.mxu0 %v4760
        %4778 = vmatprep.subr.bf16.mxu0 0
        %4779 = vmatpush1.bf16.msra.mxu0 %v4761
        %4780 = vmatprep.subr.bf16.mxu0 0
        %4781 = vmatpush1.bf16.msra.mxu0 %v4762
        %4782 = vmatprep.subr.bf16.mxu0 0
        %4783 = vmatpush1.bf16.msra.mxu0 %v4763
        %4784 = vmatprep.subr.bf16.mxu0 0
        %4785 = vmatpush1.bf16.msra.mxu0 %v4764
        %4786 = vmatprep.subr.bf16.mxu0 0
        %4787 = vmatpush1.bf16.msra.mxu0 %v4765
        %4788 = vmatprep.subr.bf16.mxu0 0
        %4789 = vmatpush1.bf16.msra.mxu0 %v4766
        %4790 = vmatprep.subr.bf16.mxu0 0
        %4791 = vmatpush1.bf16.msra.mxu0 %v4767
        %4792 = vmatprep.subr.bf16.mxu0 0
        %4793 = vmatpush1.bf16.msra.mxu0 0
        %4794 = vmatprep.subr.bf16.mxu0 0
        %4795 = vmatpush1.bf16.msra.mxu0 0
        %4796 = vmatprep.subr.bf16.mxu0 0
        %4797 = vmatpush1.bf16.msra.mxu0 0
        %4798 = vmatprep.subr.bf16.mxu0 0
        %4799 = vmatpush1.bf16.msra.mxu0 0
        %4800 = vmatprep.subr.bf16.mxu0 0
        %4801 = vmatpush1.bf16.msra.mxu0 0
        %4802 = vmatprep.subr.bf16.mxu0 0
        %4803 = vmatpush1.bf16.msra.mxu0 0
        %4804 = vmatprep.subr.bf16.mxu0 0
        %4805 = vmatpush1.bf16.msra.mxu0 0
        %4806 = vmatprep.subr.bf16.mxu0 0
        %4807 = vmatpush1.bf16.msra.mxu0 0
        %4808 = vmatprep.mubr.bf16.mxu0 0
        %4809 = vmatmul.mubr.bf16.gmra.mrb[0].mxu0 %v4696
        %v4810 = vpop.f32.mrb[0].mxu0
        %v4811 = vadd.f32 0.0, %v4810
        %v4812 = vpop.f32.mrb[0].mxu0
        %v4813 = vpop.f32.mrb[0].mxu0
        %v4814 = vadd.f32 0.0, %v4813
        %v4815 = vpop.f32.mrb[0].mxu0
        %4816 = vmatprep.mubr.bf16.mxu0 0
        %4817 = vmatmul.mubr.bf16.gmra.mrb[0].mxu0 %v4697
        %v4818 = vpop.f32.mrb[0].mxu0
        %v4819 = vadd.f32 0.0, %v4818
        %v4820 = vpop.f32.mrb[0].mxu0
        %v4821 = vpop.f32.mrb[0].mxu0
        %v4822 = vadd.f32 0.0, %v4821
        %v4823 = vpop.f32.mrb[0].mxu0
        %4824 = vmatprep.mubr.bf16.mxu0 0
        %4825 = vmatmul.mubr.bf16.gmra.mrb[0].mxu0 %v4698
        %v4826 = vpop.f32.mrb[0].mxu0
        %v4827 = vadd.f32 0.0, %v4826
        %v4828 = vpop.f32.mrb[0].mxu0
        %v4829 = vpop.f32.mrb[0].mxu0
        %v4830 = vadd.f32 0.0, %v4829
        %v4831 = vpop.f32.mrb[0].mxu0
        %4832 = vmatprep.mubr.bf16.mxu0 0
        %4833 = vmatmul.mubr.bf16.gmra.mrb[0].mxu0 %v4699
        %v4834 = vpop.f32.mrb[0].mxu0
        %v4835 = vadd.f32 0.0, %v4834
        %v4836 = vpop.f32.mrb[0].mxu0
        %v4837 = vpop.f32.mrb[0].mxu0
        %v4838 = vadd.f32 0.0, %v4837
        %v4839 = vpop.f32.mrb[0].mxu0
        %4840 = vmatprep.mubr.bf16.mxu0 0
        %4841 = vmatmul.mubr.bf16.gmra.mrb[0].mxu0 %v4700
        %v4842 = vpop.f32.mrb[0].mxu0
        %v4843 = vadd.f32 0.0, %v4842
        %v4844 = vpop.f32.mrb[0].mxu0
        %v4845 = vpop.f32.mrb[0].mxu0
        %v4846 = vadd.f32 0.0, %v4845
        %v4847 = vpop.f32.mrb[0].mxu0
        %4848 = vmatprep.mubr.bf16.mxu0 0
        %4849 = vmatmul.mubr.bf16.gmra.mrb[0].mxu0 %v4701
        %v4850 = vpop.f32.mrb[0].mxu0
        %v4851 = vadd.f32 0.0, %v4850
        %v4852 = vpop.f32.mrb[0].mxu0
        %v4853 = vpop.f32.mrb[0].mxu0
        %v4854 = vadd.f32 0.0, %v4853
        %v4855 = vpop.f32.mrb[0].mxu0
        %4856 = vmatprep.mubr.bf16.mxu0 0
        %4857 = vmatmul.mubr.bf16.gmra.mrb[0].mxu0 %v4702
        %v4858 = vpop.f32.mrb[0].mxu0
        %v4859 = vadd.f32 0.0, %v4858
        %v4860 = vpop.f32.mrb[0].mxu0
        %v4861 = vpop.f32.mrb[0].mxu0
        %v4862 = vadd.f32 0.0, %v4861
        %v4863 = vpop.f32.mrb[0].mxu0
        %4864 = vmatprep.mubr.bf16.mxu0 0
        %4865 = vmatmul.mubr.bf16.gmra.mrb[0].mxu0 %v4703
        %v4866 = vpop.f32.mrb[0].mxu0
        %v4867 = vadd.f32 0.0, %v4866
        %v4868 = vpop.f32.mrb[0].mxu0
        %v4869 = vpop.f32.mrb[0].mxu0
        %v4870 = vadd.f32 0.0, %v4869
        %v4871 = vpop.f32.mrb[0].mxu0
        %4872 = vmatprep.mubr.bf16.mxu0 0
        %4873 = vmatmul.mubr.bf16.gmra.mrb[0].mxu0 %v4704
        %v4874 = vpop.f32.mrb[0].mxu0
        %v4875 = vadd.f32 0.0, %v4874
        %v4876 = vpop.f32.mrb[0].mxu0
        %v4877 = vpop.f32.mrb[0].mxu0
        %v4878 = vadd.f32 0.0, %v4877
        %v4879 = vpop.f32.mrb[0].mxu0
        %4880 = vmatprep.mubr.bf16.mxu0 0
        %4881 = vmatmul.mubr.bf16.gmra.mrb[0].mxu0 %v4705
        %v4882 = vpop.f32.mrb[0].mxu0
        %v4883 = vadd.f32 0.0, %v4882
        %v4884 = vpop.f32.mrb[0].mxu0
        %v4885 = vpop.f32.mrb[0].mxu0
        %v4886 = vadd.f32 0.0, %v4885
        %v4887 = vpop.f32.mrb[0].mxu0
        %4888 = vmatprep.mubr.bf16.mxu0 0
        %4889 = vmatmul.mubr.bf16.gmra.mrb[0].mxu0 %v4706
        %v4890 = vpop.f32.mrb[0].mxu0
        %v4891 = vadd.f32 0.0, %v4890
        %v4892 = vpop.f32.mrb[0].mxu0
        %v4893 = vpop.f32.mrb[0].mxu0
        %v4894 = vadd.f32 0.0, %v4893
        %v4895 = vpop.f32.mrb[0].mxu0
        %4896 = vmatprep.mubr.bf16.mxu0 0
        %4897 = vmatmul.mubr.bf16.gmra.mrb[0].mxu0 %v4707
        %v4898 = vpop.f32.mrb[0].mxu0
        %v4899 = vadd.f32 0.0, %v4898
        %v4900 = vpop.f32.mrb[0].mxu0
        %v4901 = vpop.f32.mrb[0].mxu0
        %v4902 = vadd.f32 0.0, %v4901
        %v4903 = vpop.f32.mrb[0].mxu0
        %4904 = vmatprep.mubr.bf16.mxu0 0
        %4905 = vmatmul.mubr.bf16.gmra.mrb[0].mxu0 %v4708
        %v4906 = vpop.f32.mrb[0].mxu0
        %v4907 = vadd.f32 0.0, %v4906
        %v4908 = vpop.f32.mrb[0].mxu0
        %v4909 = vpop.f32.mrb[0].mxu0
        %v4910 = vadd.f32 0.0, %v4909
        %v4911 = vpop.f32.mrb[0].mxu0
        %4912 = vmatprep.mubr.bf16.mxu0 0
        %4913 = vmatmul.mubr.bf16.gmra.mrb[0].mxu0 %v4709
        %v4914 = vpop.f32.mrb[0].mxu0
        %v4915 = vadd.f32 0.0, %v4914
        %v4916 = vpop.f32.mrb[0].mxu0
        %v4917 = vpop.f32.mrb[0].mxu0
        %v4918 = vadd.f32 0.0, %v4917
        %v4919 = vpop.f32.mrb[0].mxu0
        %4920 = vmatprep.mubr.bf16.mxu0 0
        %4921 = vmatmul.mubr.bf16.gmra.mrb[0].mxu0 %v4710
        %v4922 = vpop.f32.mrb[0].mxu0
        %v4923 = vadd.f32 0.0, %v4922
        %v4924 = vpop.f32.mrb[0].mxu0
        %v4925 = vpop.f32.mrb[0].mxu0
        %v4926 = vadd.f32 0.0, %v4925
        %v4927 = vpop.f32.mrb[0].mxu0
        %4928 = vmatprep.mubr.bf16.mxu0 0
        %4929 = vmatmul.mubr.bf16.gmra.mrb[0].mxu0 %v4711
        %v4930 = vpop.f32.mrb[0].mxu0
        %v4931 = vadd.f32 0.0, %v4930
        %v4932 = vpop.f32.mrb[0].mxu0
        %v4933 = vpop.f32.mrb[0].mxu0
        %v4934 = vadd.f32 0.0, %v4933
        %v4935 = vpop.f32.mrb[0].mxu0
        %4936 = vdwg.mxu0
        %v4937 = vadd.f32 %v4550, %v4811
        %v4938 = vadd.f32 %v4551, %v4814
        %v4939 = vadd.f32 %v4552, %v4819
        %v4940 = vadd.f32 %v4553, %v4822
        %v4941 = vadd.f32 %v4554, %v4827
        %v4942 = vadd.f32 %v4555, %v4830
        %v4943 = vadd.f32 %v4556, %v4835
        %v4944 = vadd.f32 %v4557, %v4838
        %v4945 = vadd.f32 %v4558, %v4843
        %v4946 = vadd.f32 %v4559, %v4846
        %v4947 = vadd.f32 %v4560, %v4851
        %v4948 = vadd.f32 %v4561, %v4854
        %v4949 = vadd.f32 %v4562, %v4859
        %v4950 = vadd.f32 %v4563, %v4862
        %v4951 = vadd.f32 %v4564, %v4867
        %v4952 = vadd.f32 %v4565, %v4870
        %v4953 = vadd.f32 %v4566, %v4875
        %v4954 = vadd.f32 %v4567, %v4878
        %v4955 = vadd.f32 %v4568, %v4883
        %v4956 = vadd.f32 %v4569, %v4886
        %v4957 = vadd.f32 %v4570, %v4891
        %v4958 = vadd.f32 %v4571, %v4894
        %v4959 = vadd.f32 %v4572, %v4899
        %v4960 = vadd.f32 %v4573, %v4902
        %v4961 = vadd.f32 %v4574, %v4907
        %v4962 = vadd.f32 %v4575, %v4910
        %v4963 = vadd.f32 %v4576, %v4915
        %v4964 = vadd.f32 %v4577, %v4918
        %v4965 = vadd.f32 %v4578, %v4923
        %v4966 = vadd.f32 %v4579, %v4926
        %v4967 = vadd.f32 %v4580, %v4931
        %v4968 = vadd.f32 %v4581, %v4934
        %v4969 = vld [vmem:[%s4582] sm:$0xf]
        %v4970 = vld [vmem:[%s4582 + $0x4] sm:$0xf]
        %v4971 = vld [vmem:[%s4582 + $0x8] sm:$0x1]
        %v4972 = vld [vmem:[%s4582 + $0xc] sm:$0xf]
        %v4973 = vld [vmem:[%s4582 + $0x10] sm:$0xf]
        %v4974 = vld [vmem:[%s4582 + $0x14] sm:$0x1]
        %v4975 = vld [vmem:[%s4582 + $0x18] sm:$0xf]
        %v4976 = vld [vmem:[%s4582 + $0x1c] sm:$0xf]
        %v4977 = vld [vmem:[%s4582 + $0x20] sm:$0x1]
        %v4978 = vld [vmem:[%s4582 + $0x24] sm:$0xf]
        %v4979 = vld [vmem:[%s4582 + $0x28] sm:$0xf]
        %v4980 = vld [vmem:[%s4582 + $0x2c] sm:$0x1]
        %v4981 = vld [vmem:[%s4582 + $0x30] sm:$0xf]
        %v4982 = vld [vmem:[%s4582 + $0x34] sm:$0xf]
        %v4983 = vld [vmem:[%s4582 + $0x38] sm:$0x1]
        %v4984 = vld [vmem:[%s4582 + $0x3c] sm:$0xf]
        %v4985 = vld [vmem:[%s4582 + $0x40] sm:$0xf]
        %v4986 = vld [vmem:[%s4582 + $0x44] sm:$0x1]
        %v4987 = vld [vmem:[%s4582 + $0x48] sm:$0xf]
        %v4988 = vld [vmem:[%s4582 + $0x4c] sm:$0xf]
        %v4989 = vld [vmem:[%s4582 + $0x50] sm:$0x1]
        %v4990 = vld [vmem:[%s4582 + $0x54] sm:$0xf]
        %v4991 = vld [vmem:[%s4582 + $0x58] sm:$0xf]
        %v4992 = vld [vmem:[%s4582 + $0x5c] sm:$0x1]
        %v4993 = vld [vmem:[%s4582 + $0x60] sm:$0xf]
        %v4994 = vld [vmem:[%s4582 + $0x64] sm:$0xf]
        %v4995 = vld [vmem:[%s4582 + $0x68] sm:$0x1]
        %v4996 = vld [vmem:[%s4582 + $0x6c] sm:$0xf]
        %v4997 = vld [vmem:[%s4582 + $0x70] sm:$0xf]
        %v4998 = vld [vmem:[%s4582 + $0x74] sm:$0x1]
        %v4999 = vld [vmem:[%s4582 + $0x78] sm:$0xf]
        %v5000 = vld [vmem:[%s4582 + $0x7c] sm:$0xf]
        %v5001 = vld [vmem:[%s4582 + $0x80] sm:$0x1]
        %v5002 = vld [vmem:[%s4582 + $0x84] sm:$0xf]
        %v5003 = vld [vmem:[%s4582 + $0x88] sm:$0xf]
        %v5004 = vld [vmem:[%s4582 + $0x8c] sm:$0x1]
        %v5005 = vld [vmem:[%s4582 + $0x90] sm:$0xf]
        %v5006 = vld [vmem:[%s4582 + $0x94] sm:$0xf]
        %v5007 = vld [vmem:[%s4582 + $0x98] sm:$0x1]
        %v5008 = vld [vmem:[%s4582 + $0x9c] sm:$0xf]
        %v5009 = vld [vmem:[%s4582 + $0xa0] sm:$0xf]
        %v5010 = vld [vmem:[%s4582 + $0xa4] sm:$0x1]
        %v5011 = vld [vmem:[%s4582 + $0xa8] sm:$0xf]
        %v5012 = vld [vmem:[%s4582 + $0xac] sm:$0xf]
        %v5013 = vld [vmem:[%s4582 + $0xb0] sm:$0x1]
        %v5014 = vld [vmem:[%s4582 + $0xb4] sm:$0xf]
        %v5015 = vld [vmem:[%s4582 + $0xb8] sm:$0xf]
        %v5016 = vld [vmem:[%s4582 + $0xbc] sm:$0x1]
        %v5018 = vshrl.u32 %v4969, 16
        %v5020 = vrot.slane %v5018, 4
        %v5021 = vshll.u32 %v4969, 16
        %v5023 = vrot.slane %v5021, 5
        %v5024 = vor.u32 %v5020, %v5023
        %v5025 = vrot.slane %v5024, 4
        %v5027 = vshll.u32 %v4970, 16
        %v5029 = vrot.slane %v5027, 5
        %v5030 = vsel %vm1479, %v5025, %v5029
        %v5031 = vshrl.u32 %v4970, 16
        %v5033 = vrot.slane %v5031, 4
        %v5034 = vor.u32 %v5033, %v5029
        %v5035 = vrot.slane %v5034, 4
        %v5037 = vshll.u32 %v4971, 16
        %v5039 = vrot.slane %v5037, 5
        %v5040 = vsel %vm1479, %v5035, %v5039
        %v5042 = vshrl.u32 %v4972, 16
        %v5044 = vrot.slane %v5042, 4
        %v5045 = vshll.u32 %v4972, 16
        %v5047 = vrot.slane %v5045, 5
        %v5048 = vor.u32 %v5044, %v5047
        %v5049 = vrot.slane %v5048, 4
        %v5051 = vshll.u32 %v4973, 16
        %v5053 = vrot.slane %v5051, 5
        %v5054 = vsel %vm1479, %v5049, %v5053
        %v5055 = vshrl.u32 %v4973, 16
        %v5057 = vrot.slane %v5055, 4
        %v5058 = vor.u32 %v5057, %v5053
        %v5059 = vrot.slane %v5058, 4
        %v5061 = vshll.u32 %v4974, 16
        %v5063 = vrot.slane %v5061, 5
        %v5064 = vsel %vm1479, %v5059, %v5063
        %v5066 = vshrl.u32 %v4975, 16
        %v5068 = vrot.slane %v5066, 4
        %v5069 = vshll.u32 %v4975, 16
        %v5071 = vrot.slane %v5069, 5
        %v5072 = vor.u32 %v5068, %v5071
        %v5073 = vrot.slane %v5072, 4
        %v5075 = vshll.u32 %v4976, 16
        %v5077 = vrot.slane %v5075, 5
        %v5078 = vsel %vm1479, %v5073, %v5077
        %v5079 = vshrl.u32 %v4976, 16
        %v5081 = vrot.slane %v5079, 4
        %v5082 = vor.u32 %v5081, %v5077
        %v5083 = vrot.slane %v5082, 4
        %v5085 = vshll.u32 %v4977, 16
        %v5087 = vrot.slane %v5085, 5
        %v5088 = vsel %vm1479, %v5083, %v5087
        %v5090 = vshrl.u32 %v4978, 16
        %v5092 = vrot.slane %v5090, 4
        %v5093 = vshll.u32 %v4978, 16
        %v5095 = vrot.slane %v5093, 5
        %v5096 = vor.u32 %v5092, %v5095
        %v5097 = vrot.slane %v5096, 4
        %v5099 = vshll.u32 %v4979, 16
        %v5101 = vrot.slane %v5099, 5
        %v5102 = vsel %vm1479, %v5097, %v5101
        %v5103 = vshrl.u32 %v4979, 16
        %v5105 = vrot.slane %v5103, 4
        %v5106 = vor.u32 %v5105, %v5101
        %v5107 = vrot.slane %v5106, 4
        %v5109 = vshll.u32 %v4980, 16
        %v5111 = vrot.slane %v5109, 5
        %v5112 = vsel %vm1479, %v5107, %v5111
        %v5114 = vshrl.u32 %v4981, 16
        %v5116 = vrot.slane %v5114, 4
        %v5117 = vshll.u32 %v4981, 16
        %v5119 = vrot.slane %v5117, 5
        %v5120 = vor.u32 %v5116, %v5119
        %v5121 = vrot.slane %v5120, 4
        %v5123 = vshll.u32 %v4982, 16
        %v5125 = vrot.slane %v5123, 5
        %v5126 = vsel %vm1479, %v5121, %v5125
        %v5127 = vshrl.u32 %v4982, 16
        %v5129 = vrot.slane %v5127, 4
        %v5130 = vor.u32 %v5129, %v5125
        %v5131 = vrot.slane %v5130, 4
        %v5133 = vshll.u32 %v4983, 16
        %v5135 = vrot.slane %v5133, 5
        %v5136 = vsel %vm1479, %v5131, %v5135
        %v5138 = vshrl.u32 %v4984, 16
        %v5140 = vrot.slane %v5138, 4
        %v5141 = vshll.u32 %v4984, 16
        %v5143 = vrot.slane %v5141, 5
        %v5144 = vor.u32 %v5140, %v5143
        %v5145 = vrot.slane %v5144, 4
        %v5147 = vshll.u32 %v4985, 16
        %v5149 = vrot.slane %v5147, 5
        %v5150 = vsel %vm1479, %v5145, %v5149
        %v5151 = vshrl.u32 %v4985, 16
        %v5153 = vrot.slane %v5151, 4
        %v5154 = vor.u32 %v5153, %v5149
        %v5155 = vrot.slane %v5154, 4
        %v5157 = vshll.u32 %v4986, 16
        %v5159 = vrot.slane %v5157, 5
        %v5160 = vsel %vm1479, %v5155, %v5159
        %v5162 = vshrl.u32 %v4987, 16
        %v5164 = vrot.slane %v5162, 4
        %v5165 = vshll.u32 %v4987, 16
        %v5167 = vrot.slane %v5165, 5
        %v5168 = vor.u32 %v5164, %v5167
        %v5169 = vrot.slane %v5168, 4
        %v5171 = vshll.u32 %v4988, 16
        %v5173 = vrot.slane %v5171, 5
        %v5174 = vsel %vm1479, %v5169, %v5173
        %v5175 = vshrl.u32 %v4988, 16
        %v5177 = vrot.slane %v5175, 4
        %v5178 = vor.u32 %v5177, %v5173
        %v5179 = vrot.slane %v5178, 4
        %v5181 = vshll.u32 %v4989, 16
        %v5183 = vrot.slane %v5181, 5
        %v5184 = vsel %vm1479, %v5179, %v5183
        %v5186 = vshrl.u32 %v4990, 16
        %v5188 = vrot.slane %v5186, 4
        %v5189 = vshll.u32 %v4990, 16
        %v5191 = vrot.slane %v5189, 5
        %v5192 = vor.u32 %v5188, %v5191
        %v5193 = vrot.slane %v5192, 4
        %v5195 = vshll.u32 %v4991, 16
        %v5197 = vrot.slane %v5195, 5
        %v5198 = vsel %vm1479, %v5193, %v5197
        %v5199 = vshrl.u32 %v4991, 16
        %v5201 = vrot.slane %v5199, 4
        %v5202 = vor.u32 %v5201, %v5197
        %v5203 = vrot.slane %v5202, 4
        %v5205 = vshll.u32 %v4992, 16
        %v5207 = vrot.slane %v5205, 5
        %v5208 = vsel %vm1479, %v5203, %v5207
        %v5210 = vshrl.u32 %v4993, 16
        %v5212 = vrot.slane %v5210, 4
        %v5213 = vshll.u32 %v4993, 16
        %v5215 = vrot.slane %v5213, 5
        %v5216 = vor.u32 %v5212, %v5215
        %v5217 = vrot.slane %v5216, 4
        %v5219 = vshll.u32 %v4994, 16
        %v5221 = vrot.slane %v5219, 5
        %v5222 = vsel %vm1479, %v5217, %v5221
        %v5223 = vshrl.u32 %v4994, 16
        %v5225 = vrot.slane %v5223, 4
        %v5226 = vor.u32 %v5225, %v5221
        %v5227 = vrot.slane %v5226, 4
        %v5229 = vshll.u32 %v4995, 16
        %v5231 = vrot.slane %v5229, 5
        %v5232 = vsel %vm1479, %v5227, %v5231
        %v5234 = vshrl.u32 %v4996, 16
        %v5236 = vrot.slane %v5234, 4
        %v5237 = vshll.u32 %v4996, 16
        %v5239 = vrot.slane %v5237, 5
        %v5240 = vor.u32 %v5236, %v5239
        %v5241 = vrot.slane %v5240, 4
        %v5243 = vshll.u32 %v4997, 16
        %v5245 = vrot.slane %v5243, 5
        %v5246 = vsel %vm1479, %v5241, %v5245
        %v5247 = vshrl.u32 %v4997, 16
        %v5249 = vrot.slane %v5247, 4
        %v5250 = vor.u32 %v5249, %v5245
        %v5251 = vrot.slane %v5250, 4
        %v5253 = vshll.u32 %v4998, 16
        %v5255 = vrot.slane %v5253, 5
        %v5256 = vsel %vm1479, %v5251, %v5255
        %v5258 = vshrl.u32 %v4999, 16
        %v5260 = vrot.slane %v5258, 4
        %v5261 = vshll.u32 %v4999, 16
        %v5263 = vrot.slane %v5261, 5
        %v5264 = vor.u32 %v5260, %v5263
        %v5265 = vrot.slane %v5264, 4
        %v5267 = vshll.u32 %v5000, 16
        %v5269 = vrot.slane %v5267, 5
        %v5270 = vsel %vm1479, %v5265, %v5269
        %v5271 = vshrl.u32 %v5000, 16
        %v5273 = vrot.slane %v5271, 4
        %v5274 = vor.u32 %v5273, %v5269
        %v5275 = vrot.slane %v5274, 4
        %v5277 = vshll.u32 %v5001, 16
        %v5279 = vrot.slane %v5277, 5
        %v5280 = vsel %vm1479, %v5275, %v5279
        %v5282 = vshrl.u32 %v5002, 16
        %v5284 = vrot.slane %v5282, 4
        %v5285 = vshll.u32 %v5002, 16
        %v5287 = vrot.slane %v5285, 5
        %v5288 = vor.u32 %v5284, %v5287
        %v5289 = vrot.slane %v5288, 4
        %v5291 = vshll.u32 %v5003, 16
        %v5293 = vrot.slane %v5291, 5
        %v5294 = vsel %vm1479, %v5289, %v5293
        %v5295 = vshrl.u32 %v5003, 16
        %v5297 = vrot.slane %v5295, 4
        %v5298 = vor.u32 %v5297, %v5293
        %v5299 = vrot.slane %v5298, 4
        %v5301 = vshll.u32 %v5004, 16
        %v5303 = vrot.slane %v5301, 5
        %v5304 = vsel %vm1479, %v5299, %v5303
        %v5306 = vshrl.u32 %v5005, 16
        %v5308 = vrot.slane %v5306, 4
        %v5309 = vshll.u32 %v5005, 16
        %v5311 = vrot.slane %v5309, 5
        %v5312 = vor.u32 %v5308, %v5311
        %v5313 = vrot.slane %v5312, 4
        %v5315 = vshll.u32 %v5006, 16
        %v5317 = vrot.slane %v5315, 5
        %v5318 = vsel %vm1479, %v5313, %v5317
        %v5319 = vshrl.u32 %v5006, 16
        %v5321 = vrot.slane %v5319, 4
        %v5322 = vor.u32 %v5321, %v5317
        %v5323 = vrot.slane %v5322, 4
        %v5325 = vshll.u32 %v5007, 16
        %v5327 = vrot.slane %v5325, 5
        %v5328 = vsel %vm1479, %v5323, %v5327
        %v5330 = vshrl.u32 %v5008, 16
        %v5332 = vrot.slane %v5330, 4
        %v5333 = vshll.u32 %v5008, 16
        %v5335 = vrot.slane %v5333, 5
        %v5336 = vor.u32 %v5332, %v5335
        %v5337 = vrot.slane %v5336, 4
        %v5339 = vshll.u32 %v5009, 16
        %v5341 = vrot.slane %v5339, 5
        %v5342 = vsel %vm1479, %v5337, %v5341
        %v5343 = vshrl.u32 %v5009, 16
        %v5345 = vrot.slane %v5343, 4
        %v5346 = vor.u32 %v5345, %v5341
        %v5347 = vrot.slane %v5346, 4
        %v5349 = vshll.u32 %v5010, 16
        %v5351 = vrot.slane %v5349, 5
        %v5352 = vsel %vm1479, %v5347, %v5351
        %v5354 = vshrl.u32 %v5011, 16
        %v5356 = vrot.slane %v5354, 4
        %v5357 = vshll.u32 %v5011, 16
        %v5359 = vrot.slane %v5357, 5
        %v5360 = vor.u32 %v5356, %v5359
        %v5361 = vrot.slane %v5360, 4
        %v5363 = vshll.u32 %v5012, 16
        %v5365 = vrot.slane %v5363, 5
        %v5366 = vsel %vm1479, %v5361, %v5365
        %v5367 = vshrl.u32 %v5012, 16
        %v5369 = vrot.slane %v5367, 4
        %v5370 = vor.u32 %v5369, %v5365
        %v5371 = vrot.slane %v5370, 4
        %v5373 = vshll.u32 %v5013, 16
        %v5375 = vrot.slane %v5373, 5
        %v5376 = vsel %vm1479, %v5371, %v5375
        %v5378 = vshrl.u32 %v5014, 16
        %v5380 = vrot.slane %v5378, 4
        %v5381 = vshll.u32 %v5014, 16
        %v5383 = vrot.slane %v5381, 5
        %v5384 = vor.u32 %v5380, %v5383
        %v5385 = vrot.slane %v5384, 4
        %v5387 = vshll.u32 %v5015, 16
        %v5389 = vrot.slane %v5387, 5
        %v5390 = vsel %vm1479, %v5385, %v5389
        %v5391 = vshrl.u32 %v5015, 16
        %v5393 = vrot.slane %v5391, 4
        %v5394 = vor.u32 %v5393, %v5389
        %v5395 = vrot.slane %v5394, 4
        %v5397 = vshll.u32 %v5016, 16
        %v5399 = vrot.slane %v5397, 5
        %v5400 = vsel %vm1479, %v5395, %v5399
        %s5401 = scalar_lea.vmem %s4, 448
        %v5402 = vld [vmem:[%s5401] sm:$0xf]
        %v5403 = vld [vmem:[%s5401 + $0x4] sm:$0xf]
        %v5404 = vld [vmem:[%s5401 + $0x8] sm:$0xf]
        %v5405 = vld [vmem:[%s5401 + $0xc] sm:$0xf]
        %v5406 = vld [vmem:[%s5401 + $0x10] sm:$0xf]
        %v5407 = vld [vmem:[%s5401 + $0x14] sm:$0xf]
        %v5408 = vld [vmem:[%s5401 + $0x18] sm:$0xf]
        %v5409 = vld [vmem:[%s5401 + $0x1c] sm:$0xf]
        %v5410 = vld [vmem:[%s5401 + $0x20] sm:$0xf]
        %v5411 = vld [vmem:[%s5401 + $0x24] sm:$0xf]
        %v5412 = vld [vmem:[%s5401 + $0x28] sm:$0xf]
        %v5413 = vld [vmem:[%s5401 + $0x2c] sm:$0xf]
        %v5414 = vld [vmem:[%s5401 + $0x30] sm:$0xf]
        %v5415 = vld [vmem:[%s5401 + $0x34] sm:$0xf]
        %v5416 = vld [vmem:[%s5401 + $0x38] sm:$0xf]
        %v5417 = vld [vmem:[%s5401 + $0x3c] sm:$0xf]
        %v5418 = vunpack.c.l.b16 %v5030
        %v5419 = vunpack.c.l.b16 %v5040
        %v5420 = vunpack.c.l.b16 %v5054
        %v5421 = vunpack.c.l.b16 %v5064
        %v5422 = vunpack.c.l.b16 %v5078
        %v5423 = vunpack.c.l.b16 %v5088
        %v5424 = vunpack.c.l.b16 %v5102
        %v5425 = vunpack.c.l.b16 %v5112
        %v5426 = vunpack.c.l.b16 %v5126
        %v5427 = vunpack.c.l.b16 %v5136
        %v5428 = vunpack.c.l.b16 %v5150
        %v5429 = vunpack.c.l.b16 %v5160
        %v5430 = vunpack.c.l.b16 %v5174
        %v5431 = vunpack.c.l.b16 %v5184
        %v5432 = vunpack.c.l.b16 %v5198
        %v5433 = vunpack.c.l.b16 %v5208
        %v5434 = vunpack.c.l.b16 %v5222
        %v5435 = vunpack.c.l.b16 %v5232
        %v5436 = vunpack.c.l.b16 %v5246
        %v5437 = vunpack.c.l.b16 %v5256
        %v5438 = vunpack.c.l.b16 %v5270
        %v5439 = vunpack.c.l.b16 %v5280
        %v5440 = vunpack.c.l.b16 %v5294
        %v5441 = vunpack.c.l.b16 %v5304
        %v5442 = vunpack.c.l.b16 %v5318
        %v5443 = vunpack.c.l.b16 %v5328
        %v5444 = vunpack.c.l.b16 %v5342
        %v5445 = vunpack.c.l.b16 %v5352
        %v5446 = vunpack.c.l.b16 %v5366
        %v5447 = vunpack.c.l.b16 %v5376
        %v5448 = vunpack.c.l.b16 %v5390
        %v5449 = vunpack.c.l.b16 %v5400
        %v5450 = vpack.c.b16 %v5419, %v5418
        %v5451 = vpack.c.b16 %v5421, %v5420
        %v5452 = vpack.c.b16 %v5423, %v5422
        %v5453 = vpack.c.b16 %v5425, %v5424
        %v5454 = vpack.c.b16 %v5427, %v5426
        %v5455 = vpack.c.b16 %v5429, %v5428
        %v5456 = vpack.c.b16 %v5431, %v5430
        %v5457 = vpack.c.b16 %v5433, %v5432
        %v5458 = vpack.c.b16 %v5435, %v5434
        %v5459 = vpack.c.b16 %v5437, %v5436
        %v5460 = vpack.c.b16 %v5439, %v5438
        %v5461 = vpack.c.b16 %v5441, %v5440
        %v5462 = vpack.c.b16 %v5443, %v5442
        %v5463 = vpack.c.b16 %v5445, %v5444
        %v5464 = vpack.c.b16 %v5447, %v5446
        %v5465 = vpack.c.b16 %v5449, %v5448
        %v5498 = vunpack.c.l.b16 %v5402
        %v5499 = vunpack.c.l.b16 %v5403
        %v5500 = vunpack.c.l.b16 %v5404
        %v5501 = vunpack.c.l.b16 %v5405
        %v5502 = vunpack.c.l.b16 %v5406
        %v5503 = vunpack.c.l.b16 %v5407
        %v5504 = vunpack.c.l.b16 %v5408
        %v5505 = vunpack.c.l.b16 %v5409
        %v5506 = vunpack.c.l.b16 %v5410
        %v5507 = vunpack.c.l.b16 %v5411
        %v5508 = vunpack.c.l.b16 %v5412
        %v5509 = vunpack.c.l.b16 %v5413
        %v5510 = vunpack.c.l.b16 %v5414
        %v5511 = vunpack.c.l.b16 %v5415
        %v5512 = vunpack.c.l.b16 %v5416
        %v5513 = vunpack.c.l.b16 %v5417
        %v5514 = vpack.c.b16 %v5499, %v5498
        %v5515 = vpack.c.b16 %v5501, %v5500
        %v5516 = vpack.c.b16 %v5503, %v5502
        %v5517 = vpack.c.b16 %v5505, %v5504
        %v5518 = vpack.c.b16 %v5507, %v5506
        %v5519 = vpack.c.b16 %v5509, %v5508
        %v5520 = vpack.c.b16 %v5511, %v5510
        %v5521 = vpack.c.b16 %v5513, %v5512
        %5530 = vmatprep.subr.bf16.mxu0 0
        %5531 = vmatpush1.bf16.msra.mxu0 %v5514
        %5532 = vmatprep.subr.bf16.mxu0 0
        %5533 = vmatpush1.bf16.msra.mxu0 %v5515
        %5534 = vmatprep.subr.bf16.mxu0 0
        %5535 = vmatpush1.bf16.msra.mxu0 %v5516
        %5536 = vmatprep.subr.bf16.mxu0 0
        %5537 = vmatpush1.bf16.msra.mxu0 %v5517
        %5538 = vmatprep.subr.bf16.mxu0 0
        %5539 = vmatpush1.bf16.msra.mxu0 %v5518
        %5540 = vmatprep.subr.bf16.mxu0 0
        %5541 = vmatpush1.bf16.msra.mxu0 %v5519
        %5542 = vmatprep.subr.bf16.mxu0 0
        %5543 = vmatpush1.bf16.msra.mxu0 %v5520
        %5544 = vmatprep.subr.bf16.mxu0 0
        %5545 = vmatpush1.bf16.msra.mxu0 %v5521
        %5546 = vmatprep.subr.bf16.mxu0 0
        %5547 = vmatpush1.bf16.msra.mxu0 0
        %5548 = vmatprep.subr.bf16.mxu0 0
        %5549 = vmatpush1.bf16.msra.mxu0 0
        %5550 = vmatprep.subr.bf16.mxu0 0
        %5551 = vmatpush1.bf16.msra.mxu0 0
        %5552 = vmatprep.subr.bf16.mxu0 0
        %5553 = vmatpush1.bf16.msra.mxu0 0
        %5554 = vmatprep.subr.bf16.mxu0 0
        %5555 = vmatpush1.bf16.msra.mxu0 0
        %5556 = vmatprep.subr.bf16.mxu0 0
        %5557 = vmatpush1.bf16.msra.mxu0 0
        %5558 = vmatprep.subr.bf16.mxu0 0
        %5559 = vmatpush1.bf16.msra.mxu0 0
        %5560 = vmatprep.subr.bf16.mxu0 0
        %5561 = vmatpush1.bf16.msra.mxu0 0
        %5562 = vmatprep.mubr.bf16.mxu0 0
        %5563 = vmatmul.mubr.bf16.gmra.mrb[0].mxu0 %v5450
        %v5564 = vpop.f32.mrb[0].mxu0
        %v5565 = vadd.f32 0.0, %v5564
        %v5566 = vpop.f32.mrb[0].mxu0
        %v5567 = vpop.f32.mrb[0].mxu0
        %v5568 = vadd.f32 0.0, %v5567
        %v5569 = vpop.f32.mrb[0].mxu0
        %5570 = vmatprep.mubr.bf16.mxu0 0
        %5571 = vmatmul.mubr.bf16.gmra.mrb[0].mxu0 %v5451
        %v5572 = vpop.f32.mrb[0].mxu0
        %v5573 = vadd.f32 0.0, %v5572
        %v5574 = vpop.f32.mrb[0].mxu0
        %v5575 = vpop.f32.mrb[0].mxu0
        %v5576 = vadd.f32 0.0, %v5575
        %v5577 = vpop.f32.mrb[0].mxu0
        %5578 = vmatprep.mubr.bf16.mxu0 0
        %5579 = vmatmul.mubr.bf16.gmra.mrb[0].mxu0 %v5452
        %v5580 = vpop.f32.mrb[0].mxu0
        %v5581 = vadd.f32 0.0, %v5580
        %v5582 = vpop.f32.mrb[0].mxu0
        %v5583 = vpop.f32.mrb[0].mxu0
        %v5584 = vadd.f32 0.0, %v5583
        %v5585 = vpop.f32.mrb[0].mxu0
        %5586 = vmatprep.mubr.bf16.mxu0 0
        %5587 = vmatmul.mubr.bf16.gmra.mrb[0].mxu0 %v5453
        %v5588 = vpop.f32.mrb[0].mxu0
        %v5589 = vadd.f32 0.0, %v5588
        %v5590 = vpop.f32.mrb[0].mxu0
        %v5591 = vpop.f32.mrb[0].mxu0
        %v5592 = vadd.f32 0.0, %v5591
        %v5593 = vpop.f32.mrb[0].mxu0
        %5594 = vmatprep.mubr.bf16.mxu0 0
        %5595 = vmatmul.mubr.bf16.gmra.mrb[0].mxu0 %v5454
        %v5596 = vpop.f32.mrb[0].mxu0
        %v5597 = vadd.f32 0.0, %v5596
        %v5598 = vpop.f32.mrb[0].mxu0
        %v5599 = vpop.f32.mrb[0].mxu0
        %v5600 = vadd.f32 0.0, %v5599
        %v5601 = vpop.f32.mrb[0].mxu0
        %5602 = vmatprep.mubr.bf16.mxu0 0
        %5603 = vmatmul.mubr.bf16.gmra.mrb[0].mxu0 %v5455
        %v5604 = vpop.f32.mrb[0].mxu0
        %v5605 = vadd.f32 0.0, %v5604
        %v5606 = vpop.f32.mrb[0].mxu0
        %v5607 = vpop.f32.mrb[0].mxu0
        %v5608 = vadd.f32 0.0, %v5607
        %v5609 = vpop.f32.mrb[0].mxu0
        %5610 = vmatprep.mubr.bf16.mxu0 0
        %5611 = vmatmul.mubr.bf16.gmra.mrb[0].mxu0 %v5456
        %v5612 = vpop.f32.mrb[0].mxu0
        %v5613 = vadd.f32 0.0, %v5612
        %v5614 = vpop.f32.mrb[0].mxu0
        %v5615 = vpop.f32.mrb[0].mxu0
        %v5616 = vadd.f32 0.0, %v5615
        %v5617 = vpop.f32.mrb[0].mxu0
        %5618 = vmatprep.mubr.bf16.mxu0 0
        %5619 = vmatmul.mubr.bf16.gmra.mrb[0].mxu0 %v5457
        %v5620 = vpop.f32.mrb[0].mxu0
        %v5621 = vadd.f32 0.0, %v5620
        %v5622 = vpop.f32.mrb[0].mxu0
        %v5623 = vpop.f32.mrb[0].mxu0
        %v5624 = vadd.f32 0.0, %v5623
        %v5625 = vpop.f32.mrb[0].mxu0
        %5626 = vmatprep.mubr.bf16.mxu0 0
        %5627 = vmatmul.mubr.bf16.gmra.mrb[0].mxu0 %v5458
        %v5628 = vpop.f32.mrb[0].mxu0
        %v5629 = vadd.f32 0.0, %v5628
        %v5630 = vpop.f32.mrb[0].mxu0
        %v5631 = vpop.f32.mrb[0].mxu0
        %v5632 = vadd.f32 0.0, %v5631
        %v5633 = vpop.f32.mrb[0].mxu0
        %5634 = vmatprep.mubr.bf16.mxu0 0
        %5635 = vmatmul.mubr.bf16.gmra.mrb[0].mxu0 %v5459
        %v5636 = vpop.f32.mrb[0].mxu0
        %v5637 = vadd.f32 0.0, %v5636
        %v5638 = vpop.f32.mrb[0].mxu0
        %v5639 = vpop.f32.mrb[0].mxu0
        %v5640 = vadd.f32 0.0, %v5639
        %v5641 = vpop.f32.mrb[0].mxu0
        %5642 = vmatprep.mubr.bf16.mxu0 0
        %5643 = vmatmul.mubr.bf16.gmra.mrb[0].mxu0 %v5460
        %v5644 = vpop.f32.mrb[0].mxu0
        %v5645 = vadd.f32 0.0, %v5644
        %v5646 = vpop.f32.mrb[0].mxu0
        %v5647 = vpop.f32.mrb[0].mxu0
        %v5648 = vadd.f32 0.0, %v5647
        %v5649 = vpop.f32.mrb[0].mxu0
        %5650 = vmatprep.mubr.bf16.mxu0 0
        %5651 = vmatmul.mubr.bf16.gmra.mrb[0].mxu0 %v5461
        %v5652 = vpop.f32.mrb[0].mxu0
        %v5653 = vadd.f32 0.0, %v5652
        %v5654 = vpop.f32.mrb[0].mxu0
        %v5655 = vpop.f32.mrb[0].mxu0
        %v5656 = vadd.f32 0.0, %v5655
        %v5657 = vpop.f32.mrb[0].mxu0
        %5658 = vmatprep.mubr.bf16.mxu0 0
        %5659 = vmatmul.mubr.bf16.gmra.mrb[0].mxu0 %v5462
        %v5660 = vpop.f32.mrb[0].mxu0
        %v5661 = vadd.f32 0.0, %v5660
        %v5662 = vpop.f32.mrb[0].mxu0
        %v5663 = vpop.f32.mrb[0].mxu0
        %v5664 = vadd.f32 0.0, %v5663
        %v5665 = vpop.f32.mrb[0].mxu0
        %5666 = vmatprep.mubr.bf16.mxu0 0
        %5667 = vmatmul.mubr.bf16.gmra.mrb[0].mxu0 %v5463
        %v5668 = vpop.f32.mrb[0].mxu0
        %v5669 = vadd.f32 0.0, %v5668
        %v5670 = vpop.f32.mrb[0].mxu0
        %v5671 = vpop.f32.mrb[0].mxu0
        %v5672 = vadd.f32 0.0, %v5671
        %v5673 = vpop.f32.mrb[0].mxu0
        %5674 = vmatprep.mubr.bf16.mxu0 0
        %5675 = vmatmul.mubr.bf16.gmra.mrb[0].mxu0 %v5464
        %v5676 = vpop.f32.mrb[0].mxu0
        %v5677 = vadd.f32 0.0, %v5676
        %v5678 = vpop.f32.mrb[0].mxu0
        %v5679 = vpop.f32.mrb[0].mxu0
        %v5680 = vadd.f32 0.0, %v5679
        %v5681 = vpop.f32.mrb[0].mxu0
        %5682 = vmatprep.mubr.bf16.mxu0 0
        %5683 = vmatmul.mubr.bf16.gmra.mrb[0].mxu0 %v5465
        %v5684 = vpop.f32.mrb[0].mxu0
        %v5685 = vadd.f32 0.0, %v5684
        %v5686 = vpop.f32.mrb[0].mxu0
        %v5687 = vpop.f32.mrb[0].mxu0
        %v5688 = vadd.f32 0.0, %v5687
        %v5689 = vpop.f32.mrb[0].mxu0
        %5690 = vdwg.mxu0
        %v5691 = vadd.f32 %v4937, %v5565
        %v5692 = vadd.f32 %v4938, %v5568
        %v5693 = vadd.f32 %v4939, %v5573
        %v5694 = vadd.f32 %v4940, %v5576
        %v5695 = vadd.f32 %v4941, %v5581
        %v5696 = vadd.f32 %v4942, %v5584
        %v5697 = vadd.f32 %v4943, %v5589
        %v5698 = vadd.f32 %v4944, %v5592
        %v5699 = vadd.f32 %v4945, %v5597
        %v5700 = vadd.f32 %v4946, %v5600
        %v5701 = vadd.f32 %v4947, %v5605
        %v5702 = vadd.f32 %v4948, %v5608
        %v5703 = vadd.f32 %v4949, %v5613
        %v5704 = vadd.f32 %v4950, %v5616
        %v5705 = vadd.f32 %v4951, %v5621
        %v5706 = vadd.f32 %v4952, %v5624
        %v5707 = vadd.f32 %v4953, %v5629
        %v5708 = vadd.f32 %v4954, %v5632
        %v5709 = vadd.f32 %v4955, %v5637
        %v5710 = vadd.f32 %v4956, %v5640
        %v5711 = vadd.f32 %v4957, %v5645
        %v5712 = vadd.f32 %v4958, %v5648
        %v5713 = vadd.f32 %v4959, %v5653
        %v5714 = vadd.f32 %v4960, %v5656
        %v5715 = vadd.f32 %v4961, %v5661
        %v5716 = vadd.f32 %v4962, %v5664
        %v5717 = vadd.f32 %v4963, %v5669
        %v5718 = vadd.f32 %v4964, %v5672
        %v5719 = vadd.f32 %v4965, %v5677
        %v5720 = vadd.f32 %v4966, %v5680
        %v5721 = vadd.f32 %v4967, %v5685
        %v5722 = vadd.f32 %v4968, %v5688
        %v5723 = vld [vmem:[%s4582] sm:$0xe]
        %v5724 = vld [vmem:[%s4582 + $0xc] sm:$0xe]
        %v5725 = vld [vmem:[%s4582 + $0x18] sm:$0xe]
        %v5726 = vld [vmem:[%s4582 + $0x24] sm:$0xe]
        %v5727 = vld [vmem:[%s4582 + $0x30] sm:$0xe]
        %v5728 = vld [vmem:[%s4582 + $0x3c] sm:$0xe]
        %v5729 = vld [vmem:[%s4582 + $0x48] sm:$0xe]
        %v5730 = vld [vmem:[%s4582 + $0x54] sm:$0xe]
        %v5731 = vld [vmem:[%s4582 + $0x60] sm:$0xe]
        %v5732 = vld [vmem:[%s4582 + $0x6c] sm:$0xe]
        %v5733 = vld [vmem:[%s4582 + $0x78] sm:$0xe]
        %v5734 = vld [vmem:[%s4582 + $0x84] sm:$0xe]
        %v5735 = vld [vmem:[%s4582 + $0x90] sm:$0xe]
        %v5736 = vld [vmem:[%s4582 + $0x9c] sm:$0xe]
        %v5737 = vld [vmem:[%s4582 + $0xa8] sm:$0xe]
        %v5738 = vld [vmem:[%s4582 + $0xb4] sm:$0xe]
        %v5787 = vrot.slane %v5723, 5
        %v5788 = vrot.slane %v5787, 4
        %v5789 = vrot.slane %v4970, 5
        %v5790 = vsel %vm2509, %v5788, %v5789
        %v5791 = vrot.slane %v5789, 4
        %v5792 = vrot.slane %v4971, 5
        %v5793 = vsel %vm2509, %v5791, %v5792
        %v5794 = vrot.slane %v5724, 5
        %v5795 = vrot.slane %v5794, 4
        %v5796 = vrot.slane %v4973, 5
        %v5797 = vsel %vm2509, %v5795, %v5796
        %v5798 = vrot.slane %v5796, 4
        %v5799 = vrot.slane %v4974, 5
        %v5800 = vsel %vm2509, %v5798, %v5799
        %v5801 = vrot.slane %v5725, 5
        %v5802 = vrot.slane %v5801, 4
        %v5803 = vrot.slane %v4976, 5
        %v5804 = vsel %vm2509, %v5802, %v5803
        %v5805 = vrot.slane %v5803, 4
        %v5806 = vrot.slane %v4977, 5
        %v5807 = vsel %vm2509, %v5805, %v5806
        %v5808 = vrot.slane %v5726, 5
        %v5809 = vrot.slane %v5808, 4
        %v5810 = vrot.slane %v4979, 5
        %v5811 = vsel %vm2509, %v5809, %v5810
        %v5812 = vrot.slane %v5810, 4
        %v5813 = vrot.slane %v4980, 5
        %v5814 = vsel %vm2509, %v5812, %v5813
        %v5815 = vrot.slane %v5727, 5
        %v5816 = vrot.slane %v5815, 4
        %v5817 = vrot.slane %v4982, 5
        %v5818 = vsel %vm2509, %v5816, %v5817
        %v5819 = vrot.slane %v5817, 4
        %v5820 = vrot.slane %v4983, 5
        %v5821 = vsel %vm2509, %v5819, %v5820
        %v5822 = vrot.slane %v5728, 5
        %v5823 = vrot.slane %v5822, 4
        %v5824 = vrot.slane %v4985, 5
        %v5825 = vsel %vm2509, %v5823, %v5824
        %v5826 = vrot.slane %v5824, 4
        %v5827 = vrot.slane %v4986, 5
        %v5828 = vsel %vm2509, %v5826, %v5827
        %v5829 = vrot.slane %v5729, 5
        %v5830 = vrot.slane %v5829, 4
        %v5831 = vrot.slane %v4988, 5
        %v5832 = vsel %vm2509, %v5830, %v5831
        %v5833 = vrot.slane %v5831, 4
        %v5834 = vrot.slane %v4989, 5
        %v5835 = vsel %vm2509, %v5833, %v5834
        %v5836 = vrot.slane %v5730, 5
        %v5837 = vrot.slane %v5836, 4
        %v5838 = vrot.slane %v4991, 5
        %v5839 = vsel %vm2509, %v5837, %v5838
        %v5840 = vrot.slane %v5838, 4
        %v5841 = vrot.slane %v4992, 5
        %v5842 = vsel %vm2509, %v5840, %v5841
        %v5843 = vrot.slane %v5731, 5
        %v5844 = vrot.slane %v5843, 4
        %v5845 = vrot.slane %v4994, 5
        %v5846 = vsel %vm2509, %v5844, %v5845
        %v5847 = vrot.slane %v5845, 4
        %v5848 = vrot.slane %v4995, 5
        %v5849 = vsel %vm2509, %v5847, %v5848
        %v5850 = vrot.slane %v5732, 5
        %v5851 = vrot.slane %v5850, 4
        %v5852 = vrot.slane %v4997, 5
        %v5853 = vsel %vm2509, %v5851, %v5852
        %v5854 = vrot.slane %v5852, 4
        %v5855 = vrot.slane %v4998, 5
        %v5856 = vsel %vm2509, %v5854, %v5855
        %v5857 = vrot.slane %v5733, 5
        %v5858 = vrot.slane %v5857, 4
        %v5859 = vrot.slane %v5000, 5
        %v5860 = vsel %vm2509, %v5858, %v5859
        %v5861 = vrot.slane %v5859, 4
        %v5862 = vrot.slane %v5001, 5
        %v5863 = vsel %vm2509, %v5861, %v5862
        %v5864 = vrot.slane %v5734, 5
        %v5865 = vrot.slane %v5864, 4
        %v5866 = vrot.slane %v5003, 5
        %v5867 = vsel %vm2509, %v5865, %v5866
        %v5868 = vrot.slane %v5866, 4
        %v5869 = vrot.slane %v5004, 5
        %v5870 = vsel %vm2509, %v5868, %v5869
        %v5871 = vrot.slane %v5735, 5
        %v5872 = vrot.slane %v5871, 4
        %v5873 = vrot.slane %v5006, 5
        %v5874 = vsel %vm2509, %v5872, %v5873
        %v5875 = vrot.slane %v5873, 4
        %v5876 = vrot.slane %v5007, 5
        %v5877 = vsel %vm2509, %v5875, %v5876
        %v5878 = vrot.slane %v5736, 5
        %v5879 = vrot.slane %v5878, 4
        %v5880 = vrot.slane %v5009, 5
        %v5881 = vsel %vm2509, %v5879, %v5880
        %v5882 = vrot.slane %v5880, 4
        %v5883 = vrot.slane %v5010, 5
        %v5884 = vsel %vm2509, %v5882, %v5883
        %v5885 = vrot.slane %v5737, 5
        %v5886 = vrot.slane %v5885, 4
        %v5887 = vrot.slane %v5012, 5
        %v5888 = vsel %vm2509, %v5886, %v5887
        %v5889 = vrot.slane %v5887, 4
        %v5890 = vrot.slane %v5013, 5
        %v5891 = vsel %vm2509, %v5889, %v5890
        %v5892 = vrot.slane %v5738, 5
        %v5893 = vrot.slane %v5892, 4
        %v5894 = vrot.slane %v5015, 5
        %v5895 = vsel %vm2509, %v5893, %v5894
        %v5896 = vrot.slane %v5894, 4
        %v5897 = vrot.slane %v5016, 5
        %v5898 = vsel %vm2509, %v5896, %v5897
        %s5899 = scalar_lea.vmem %s4, 512
        %v5900 = vld [vmem:[%s5899] sm:$0xf]
        %v5901 = vld [vmem:[%s5899 + $0x4] sm:$0xf]
        %v5902 = vld [vmem:[%s5899 + $0x8] sm:$0xf]
        %v5903 = vld [vmem:[%s5899 + $0xc] sm:$0xf]
        %v5904 = vld [vmem:[%s5899 + $0x10] sm:$0xf]
        %v5905 = vld [vmem:[%s5899 + $0x14] sm:$0xf]
        %v5906 = vld [vmem:[%s5899 + $0x18] sm:$0xf]
        %v5907 = vld [vmem:[%s5899 + $0x1c] sm:$0xf]
        %v5908 = vld [vmem:[%s5899 + $0x20] sm:$0xf]
        %v5909 = vld [vmem:[%s5899 + $0x24] sm:$0xf]
        %v5910 = vld [vmem:[%s5899 + $0x28] sm:$0xf]
        %v5911 = vld [vmem:[%s5899 + $0x2c] sm:$0xf]
        %v5912 = vld [vmem:[%s5899 + $0x30] sm:$0xf]
        %v5913 = vld [vmem:[%s5899 + $0x34] sm:$0xf]
        %v5914 = vld [vmem:[%s5899 + $0x38] sm:$0xf]
        %v5915 = vld [vmem:[%s5899 + $0x3c] sm:$0xf]
        %v5916 = vunpack.c.l.b16 %v5790
        %v5917 = vunpack.c.l.b16 %v5793
        %v5918 = vunpack.c.l.b16 %v5797
        %v5919 = vunpack.c.l.b16 %v5800
        %v5920 = vunpack.c.l.b16 %v5804
        %v5921 = vunpack.c.l.b16 %v5807
        %v5922 = vunpack.c.l.b16 %v5811
        %v5923 = vunpack.c.l.b16 %v5814
        %v5924 = vunpack.c.l.b16 %v5818
        %v5925 = vunpack.c.l.b16 %v5821
        %v5926 = vunpack.c.l.b16 %v5825
        %v5927 = vunpack.c.l.b16 %v5828
        %v5928 = vunpack.c.l.b16 %v5832
        %v5929 = vunpack.c.l.b16 %v5835
        %v5930 = vunpack.c.l.b16 %v5839
        %v5931 = vunpack.c.l.b16 %v5842
        %v5932 = vunpack.c.l.b16 %v5846
        %v5933 = vunpack.c.l.b16 %v5849
        %v5934 = vunpack.c.l.b16 %v5853
        %v5935 = vunpack.c.l.b16 %v5856
        %v5936 = vunpack.c.l.b16 %v5860
        %v5937 = vunpack.c.l.b16 %v5863
        %v5938 = vunpack.c.l.b16 %v5867
        %v5939 = vunpack.c.l.b16 %v5870
        %v5940 = vunpack.c.l.b16 %v5874
        %v5941 = vunpack.c.l.b16 %v5877
        %v5942 = vunpack.c.l.b16 %v5881
        %v5943 = vunpack.c.l.b16 %v5884
        %v5944 = vunpack.c.l.b16 %v5888
        %v5945 = vunpack.c.l.b16 %v5891
        %v5946 = vunpack.c.l.b16 %v5895
        %v5947 = vunpack.c.l.b16 %v5898
        %v5948 = vpack.c.b16 %v5917, %v5916
        %v5949 = vpack.c.b16 %v5919, %v5918
        %v5950 = vpack.c.b16 %v5921, %v5920
        %v5951 = vpack.c.b16 %v5923, %v5922
        %v5952 = vpack.c.b16 %v5925, %v5924
        %v5953 = vpack.c.b16 %v5927, %v5926
        %v5954 = vpack.c.b16 %v5929, %v5928
        %v5955 = vpack.c.b16 %v5931, %v5930
        %v5956 = vpack.c.b16 %v5933, %v5932
        %v5957 = vpack.c.b16 %v5935, %v5934
        %v5958 = vpack.c.b16 %v5937, %v5936
        %v5959 = vpack.c.b16 %v5939, %v5938
        %v5960 = vpack.c.b16 %v5941, %v5940
        %v5961 = vpack.c.b16 %v5943, %v5942
        %v5962 = vpack.c.b16 %v5945, %v5944
        %v5963 = vpack.c.b16 %v5947, %v5946
        %v5996 = vunpack.c.l.b16 %v5900
        %v5997 = vunpack.c.l.b16 %v5901
        %v5998 = vunpack.c.l.b16 %v5902
        %v5999 = vunpack.c.l.b16 %v5903
        %v6000 = vunpack.c.l.b16 %v5904
        %v6001 = vunpack.c.l.b16 %v5905
        %v6002 = vunpack.c.l.b16 %v5906
        %v6003 = vunpack.c.l.b16 %v5907
        %v6004 = vunpack.c.l.b16 %v5908
        %v6005 = vunpack.c.l.b16 %v5909
        %v6006 = vunpack.c.l.b16 %v5910
        %v6007 = vunpack.c.l.b16 %v5911
        %v6008 = vunpack.c.l.b16 %v5912
        %v6009 = vunpack.c.l.b16 %v5913
        %v6010 = vunpack.c.l.b16 %v5914
        %v6011 = vunpack.c.l.b16 %v5915
        %v6012 = vpack.c.b16 %v5997, %v5996
        %v6013 = vpack.c.b16 %v5999, %v5998
        %v6014 = vpack.c.b16 %v6001, %v6000
        %v6015 = vpack.c.b16 %v6003, %v6002
        %v6016 = vpack.c.b16 %v6005, %v6004
        %v6017 = vpack.c.b16 %v6007, %v6006
        %v6018 = vpack.c.b16 %v6009, %v6008
        %v6019 = vpack.c.b16 %v6011, %v6010
        %6028 = vmatprep.subr.bf16.mxu0 0
        %6029 = vmatpush1.bf16.msra.mxu0 %v6012
        %6030 = vmatprep.subr.bf16.mxu0 0
        %6031 = vmatpush1.bf16.msra.mxu0 %v6013
        %6032 = vmatprep.subr.bf16.mxu0 0
        %6033 = vmatpush1.bf16.msra.mxu0 %v6014
        %6034 = vmatprep.subr.bf16.mxu0 0
        %6035 = vmatpush1.bf16.msra.mxu0 %v6015
        %6036 = vmatprep.subr.bf16.mxu0 0
        %6037 = vmatpush1.bf16.msra.mxu0 %v6016
        %6038 = vmatprep.subr.bf16.mxu0 0
        %6039 = vmatpush1.bf16.msra.mxu0 %v6017
        %6040 = vmatprep.subr.bf16.mxu0 0
        %6041 = vmatpush1.bf16.msra.mxu0 %v6018
        %6042 = vmatprep.subr.bf16.mxu0 0
        %6043 = vmatpush1.bf16.msra.mxu0 %v6019
        %6044 = vmatprep.subr.bf16.mxu0 0
        %6045 = vmatpush1.bf16.msra.mxu0 0
        %6046 = vmatprep.subr.bf16.mxu0 0
        %6047 = vmatpush1.bf16.msra.mxu0 0
        %6048 = vmatprep.subr.bf16.mxu0 0
        %6049 = vmatpush1.bf16.msra.mxu0 0
        %6050 = vmatprep.subr.bf16.mxu0 0
        %6051 = vmatpush1.bf16.msra.mxu0 0
        %6052 = vmatprep.subr.bf16.mxu0 0
        %6053 = vmatpush1.bf16.msra.mxu0 0
        %6054 = vmatprep.subr.bf16.mxu0 0
        %6055 = vmatpush1.bf16.msra.mxu0 0
        %6056 = vmatprep.subr.bf16.mxu0 0
        %6057 = vmatpush1.bf16.msra.mxu0 0
        %6058 = vmatprep.subr.bf16.mxu0 0
        %6059 = vmatpush1.bf16.msra.mxu0 0
        %6060 = vmatprep.mubr.bf16.mxu0 0
        %6061 = vmatmul.mubr.bf16.gmra.mrb[0].mxu0 %v5948
        %v6062 = vpop.f32.mrb[0].mxu0
        %v6063 = vadd.f32 0.0, %v6062
        %v6064 = vpop.f32.mrb[0].mxu0
        %v6065 = vpop.f32.mrb[0].mxu0
        %v6066 = vadd.f32 0.0, %v6065
        %v6067 = vpop.f32.mrb[0].mxu0
        %6068 = vmatprep.mubr.bf16.mxu0 0
        %6069 = vmatmul.mubr.bf16.gmra.mrb[0].mxu0 %v5949
        %v6070 = vpop.f32.mrb[0].mxu0
        %v6071 = vadd.f32 0.0, %v6070
        %v6072 = vpop.f32.mrb[0].mxu0
        %v6073 = vpop.f32.mrb[0].mxu0
        %v6074 = vadd.f32 0.0, %v6073
        %v6075 = vpop.f32.mrb[0].mxu0
        %6076 = vmatprep.mubr.bf16.mxu0 0
        %6077 = vmatmul.mubr.bf16.gmra.mrb[0].mxu0 %v5950
        %v6078 = vpop.f32.mrb[0].mxu0
        %v6079 = vadd.f32 0.0, %v6078
        %v6080 = vpop.f32.mrb[0].mxu0
        %v6081 = vpop.f32.mrb[0].mxu0
        %v6082 = vadd.f32 0.0, %v6081
        %v6083 = vpop.f32.mrb[0].mxu0
        %6084 = vmatprep.mubr.bf16.mxu0 0
        %6085 = vmatmul.mubr.bf16.gmra.mrb[0].mxu0 %v5951
        %v6086 = vpop.f32.mrb[0].mxu0
        %v6087 = vadd.f32 0.0, %v6086
        %v6088 = vpop.f32.mrb[0].mxu0
        %v6089 = vpop.f32.mrb[0].mxu0
        %v6090 = vadd.f32 0.0, %v6089
        %v6091 = vpop.f32.mrb[0].mxu0
        %6092 = vmatprep.mubr.bf16.mxu0 0
        %6093 = vmatmul.mubr.bf16.gmra.mrb[0].mxu0 %v5952
        %v6094 = vpop.f32.mrb[0].mxu0
        %v6095 = vadd.f32 0.0, %v6094
        %v6096 = vpop.f32.mrb[0].mxu0
        %v6097 = vpop.f32.mrb[0].mxu0
        %v6098 = vadd.f32 0.0, %v6097
        %v6099 = vpop.f32.mrb[0].mxu0
        %6100 = vmatprep.mubr.bf16.mxu0 0
        %6101 = vmatmul.mubr.bf16.gmra.mrb[0].mxu0 %v5953
        %v6102 = vpop.f32.mrb[0].mxu0
        %v6103 = vadd.f32 0.0, %v6102
        %v6104 = vpop.f32.mrb[0].mxu0
        %v6105 = vpop.f32.mrb[0].mxu0
        %v6106 = vadd.f32 0.0, %v6105
        %v6107 = vpop.f32.mrb[0].mxu0
        %6108 = vmatprep.mubr.bf16.mxu0 0
        %6109 = vmatmul.mubr.bf16.gmra.mrb[0].mxu0 %v5954
        %v6110 = vpop.f32.mrb[0].mxu0
        %v6111 = vadd.f32 0.0, %v6110
        %v6112 = vpop.f32.mrb[0].mxu0
        %v6113 = vpop.f32.mrb[0].mxu0
        %v6114 = vadd.f32 0.0, %v6113
        %v6115 = vpop.f32.mrb[0].mxu0
        %6116 = vmatprep.mubr.bf16.mxu0 0
        %6117 = vmatmul.mubr.bf16.gmra.mrb[0].mxu0 %v5955
        %v6118 = vpop.f32.mrb[0].mxu0
        %v6119 = vadd.f32 0.0, %v6118
        %v6120 = vpop.f32.mrb[0].mxu0
        %v6121 = vpop.f32.mrb[0].mxu0
        %v6122 = vadd.f32 0.0, %v6121
        %v6123 = vpop.f32.mrb[0].mxu0
        %6124 = vmatprep.mubr.bf16.mxu0 0
        %6125 = vmatmul.mubr.bf16.gmra.mrb[0].mxu0 %v5956
        %v6126 = vpop.f32.mrb[0].mxu0
        %v6127 = vadd.f32 0.0, %v6126
        %v6128 = vpop.f32.mrb[0].mxu0
        %v6129 = vpop.f32.mrb[0].mxu0
        %v6130 = vadd.f32 0.0, %v6129
        %v6131 = vpop.f32.mrb[0].mxu0
        %6132 = vmatprep.mubr.bf16.mxu0 0
        %6133 = vmatmul.mubr.bf16.gmra.mrb[0].mxu0 %v5957
        %v6134 = vpop.f32.mrb[0].mxu0
        %v6135 = vadd.f32 0.0, %v6134
        %v6136 = vpop.f32.mrb[0].mxu0
        %v6137 = vpop.f32.mrb[0].mxu0
        %v6138 = vadd.f32 0.0, %v6137
        %v6139 = vpop.f32.mrb[0].mxu0
        %6140 = vmatprep.mubr.bf16.mxu0 0
        %6141 = vmatmul.mubr.bf16.gmra.mrb[0].mxu0 %v5958
        %v6142 = vpop.f32.mrb[0].mxu0
        %v6143 = vadd.f32 0.0, %v6142
        %v6144 = vpop.f32.mrb[0].mxu0
        %v6145 = vpop.f32.mrb[0].mxu0
        %v6146 = vadd.f32 0.0, %v6145
        %v6147 = vpop.f32.mrb[0].mxu0
        %6148 = vmatprep.mubr.bf16.mxu0 0
        %6149 = vmatmul.mubr.bf16.gmra.mrb[0].mxu0 %v5959
        %v6150 = vpop.f32.mrb[0].mxu0
        %v6151 = vadd.f32 0.0, %v6150
        %v6152 = vpop.f32.mrb[0].mxu0
        %v6153 = vpop.f32.mrb[0].mxu0
        %v6154 = vadd.f32 0.0, %v6153
        %v6155 = vpop.f32.mrb[0].mxu0
        %6156 = vmatprep.mubr.bf16.mxu0 0
        %6157 = vmatmul.mubr.bf16.gmra.mrb[0].mxu0 %v5960
        %v6158 = vpop.f32.mrb[0].mxu0
        %v6159 = vadd.f32 0.0, %v6158
        %v6160 = vpop.f32.mrb[0].mxu0
        %v6161 = vpop.f32.mrb[0].mxu0
        %v6162 = vadd.f32 0.0, %v6161
        %v6163 = vpop.f32.mrb[0].mxu0
        %6164 = vmatprep.mubr.bf16.mxu0 0
        %6165 = vmatmul.mubr.bf16.gmra.mrb[0].mxu0 %v5961
        %v6166 = vpop.f32.mrb[0].mxu0
        %v6167 = vadd.f32 0.0, %v6166
        %v6168 = vpop.f32.mrb[0].mxu0
        %v6169 = vpop.f32.mrb[0].mxu0
        %v6170 = vadd.f32 0.0, %v6169
        %v6171 = vpop.f32.mrb[0].mxu0
        %6172 = vmatprep.mubr.bf16.mxu0 0
        %6173 = vmatmul.mubr.bf16.gmra.mrb[0].mxu0 %v5962
        %v6174 = vpop.f32.mrb[0].mxu0
        %v6175 = vadd.f32 0.0, %v6174
        %v6176 = vpop.f32.mrb[0].mxu0
        %v6177 = vpop.f32.mrb[0].mxu0
        %v6178 = vadd.f32 0.0, %v6177
        %v6179 = vpop.f32.mrb[0].mxu0
        %6180 = vmatprep.mubr.bf16.mxu0 0
        %6181 = vmatmul.mubr.bf16.gmra.mrb[0].mxu0 %v5963
        %v6182 = vpop.f32.mrb[0].mxu0
        %v6183 = vadd.f32 0.0, %v6182
        %v6184 = vpop.f32.mrb[0].mxu0
        %v6185 = vpop.f32.mrb[0].mxu0
        %v6186 = vadd.f32 0.0, %v6185
        %v6187 = vpop.f32.mrb[0].mxu0
        %6188 = vdwg.mxu0
        %v6189 = vadd.f32 %v5691, %v6063
        %v6190 = vadd.f32 %v5692, %v6066
        %v6191 = vadd.f32 %v5693, %v6071
        %v6192 = vadd.f32 %v5694, %v6074
        %v6193 = vadd.f32 %v5695, %v6079
        %v6194 = vadd.f32 %v5696, %v6082
        %v6195 = vadd.f32 %v5697, %v6087
        %v6196 = vadd.f32 %v5698, %v6090
        %v6197 = vadd.f32 %v5699, %v6095
        %v6198 = vadd.f32 %v5700, %v6098
        %v6199 = vadd.f32 %v5701, %v6103
        %v6200 = vadd.f32 %v5702, %v6106
        %v6201 = vadd.f32 %v5703, %v6111
        %v6202 = vadd.f32 %v5704, %v6114
        %v6203 = vadd.f32 %v5705, %v6119
        %v6204 = vadd.f32 %v5706, %v6122
        %v6205 = vadd.f32 %v5707, %v6127
        %v6206 = vadd.f32 %v5708, %v6130
        %v6207 = vadd.f32 %v5709, %v6135
        %v6208 = vadd.f32 %v5710, %v6138
        %v6209 = vadd.f32 %v5711, %v6143
        %v6210 = vadd.f32 %v5712, %v6146
        %v6211 = vadd.f32 %v5713, %v6151
        %v6212 = vadd.f32 %v5714, %v6154
        %v6213 = vadd.f32 %v5715, %v6159
        %v6214 = vadd.f32 %v5716, %v6162
        %v6215 = vadd.f32 %v5717, %v6167
        %v6216 = vadd.f32 %v5718, %v6170
        %v6217 = vadd.f32 %v5719, %v6175
        %v6218 = vadd.f32 %v5720, %v6178
        %v6219 = vadd.f32 %v5721, %v6183
        %v6220 = vadd.f32 %v5722, %v6186
        %v6221 = vld [vmem:[%s5] sm:$0x1]
        %v6223 = vlaneseq
        %v6224 = vshrl.u32 %v6223, 7
        %v6225 = vsub.s32 0, %v6224
        %v6226 = vrot.slane %v6221, %v6225
        %v6228 = vmul.f32 %v6189, %v6226
        %v6229 = vmul.f32 %v6190, %v6226
        %v6230 = vmul.f32 %v6191, %v6226
        %v6231 = vmul.f32 %v6192, %v6226
        %v6232 = vmul.f32 %v6193, %v6226
        %v6233 = vmul.f32 %v6194, %v6226
        %v6234 = vmul.f32 %v6195, %v6226
        %v6235 = vmul.f32 %v6196, %v6226
        %v6236 = vmul.f32 %v6197, %v6226
        %v6237 = vmul.f32 %v6198, %v6226
        %v6238 = vmul.f32 %v6199, %v6226
        %v6239 = vmul.f32 %v6200, %v6226
        %v6240 = vmul.f32 %v6201, %v6226
        %v6241 = vmul.f32 %v6202, %v6226
        %v6242 = vmul.f32 %v6203, %v6226
        %v6243 = vmul.f32 %v6204, %v6226
        %v6244 = vmul.f32 %v6205, %v6226
        %v6245 = vmul.f32 %v6206, %v6226
        %v6246 = vmul.f32 %v6207, %v6226
        %v6247 = vmul.f32 %v6208, %v6226
        %v6248 = vmul.f32 %v6209, %v6226
        %v6249 = vmul.f32 %v6210, %v6226
        %v6250 = vmul.f32 %v6211, %v6226
        %v6251 = vmul.f32 %v6212, %v6226
        %v6252 = vmul.f32 %v6213, %v6226
        %v6253 = vmul.f32 %v6214, %v6226
        %v6254 = vmul.f32 %v6215, %v6226
        %v6255 = vmul.f32 %v6216, %v6226
        %v6256 = vmul.f32 %v6217, %v6226
        %v6257 = vmul.f32 %v6218, %v6226
        %v6258 = vmul.f32 %v6219, %v6226
        %v6259 = vmul.f32 %v6220, %v6226
        %v6260 = vld [vmem:[%s6] sm:$0x1]
        %v6262 = vlaneseq
        %v6263 = vshrl.u32 %v6262, 7
        %v6264 = vsub.s32 0, %v6263
        %v6265 = vrot.slane %v6260, %v6264
        %v6267 = vadd.f32 %v6228, %v6265
        %v6268 = vadd.f32 %v6229, %v6265
        %v6269 = vadd.f32 %v6230, %v6265
        %v6270 = vadd.f32 %v6231, %v6265
        %v6271 = vadd.f32 %v6232, %v6265
        %v6272 = vadd.f32 %v6233, %v6265
        %v6273 = vadd.f32 %v6234, %v6265
        %v6274 = vadd.f32 %v6235, %v6265
        %v6275 = vadd.f32 %v6236, %v6265
        %v6276 = vadd.f32 %v6237, %v6265
        %v6277 = vadd.f32 %v6238, %v6265
        %v6278 = vadd.f32 %v6239, %v6265
        %v6279 = vadd.f32 %v6240, %v6265
        %v6280 = vadd.f32 %v6241, %v6265
        %v6281 = vadd.f32 %v6242, %v6265
        %v6282 = vadd.f32 %v6243, %v6265
        %v6283 = vadd.f32 %v6244, %v6265
        %v6284 = vadd.f32 %v6245, %v6265
        %v6285 = vadd.f32 %v6246, %v6265
        %v6286 = vadd.f32 %v6247, %v6265
        %v6287 = vadd.f32 %v6248, %v6265
        %v6288 = vadd.f32 %v6249, %v6265
        %v6289 = vadd.f32 %v6250, %v6265
        %v6290 = vadd.f32 %v6251, %v6265
        %v6291 = vadd.f32 %v6252, %v6265
        %v6292 = vadd.f32 %v6253, %v6265
        %v6293 = vadd.f32 %v6254, %v6265
        %v6294 = vadd.f32 %v6255, %v6265
        %v6295 = vadd.f32 %v6256, %v6265
        %v6296 = vadd.f32 %v6257, %v6265
        %v6297 = vadd.f32 %v6258, %v6265
        %v6298 = vadd.f32 %v6259, %v6265
        %v6299 = vmax.f32 %v6267, 0.0
        %v6300 = vmax.f32 %v6268, 0.0
        %v6301 = vmax.f32 %v6269, 0.0
        %v6302 = vmax.f32 %v6270, 0.0
        %v6303 = vmax.f32 %v6271, 0.0
        %v6304 = vmax.f32 %v6272, 0.0
        %v6305 = vmax.f32 %v6273, 0.0
        %v6306 = vmax.f32 %v6274, 0.0
        %v6307 = vmax.f32 %v6275, 0.0
        %v6308 = vmax.f32 %v6276, 0.0
        %v6309 = vmax.f32 %v6277, 0.0
        %v6310 = vmax.f32 %v6278, 0.0
        %v6311 = vmax.f32 %v6279, 0.0
        %v6312 = vmax.f32 %v6280, 0.0
        %v6313 = vmax.f32 %v6281, 0.0
        %v6314 = vmax.f32 %v6282, 0.0
        %v6315 = vmax.f32 %v6283, 0.0
        %v6316 = vmax.f32 %v6284, 0.0
        %v6317 = vmax.f32 %v6285, 0.0
        %v6318 = vmax.f32 %v6286, 0.0
        %v6319 = vmax.f32 %v6287, 0.0
        %v6320 = vmax.f32 %v6288, 0.0
        %v6321 = vmax.f32 %v6289, 0.0
        %v6322 = vmax.f32 %v6290, 0.0
        %v6323 = vmax.f32 %v6291, 0.0
        %v6324 = vmax.f32 %v6292, 0.0
        %v6325 = vmax.f32 %v6293, 0.0
        %v6326 = vmax.f32 %v6294, 0.0
        %v6327 = vmax.f32 %v6295, 0.0
        %v6328 = vmax.f32 %v6296, 0.0
        %v6329 = vmax.f32 %v6297, 0.0
        %v6330 = vmax.f32 %v6298, 0.0
        %v6331 = vpack.c.bf16 %v6300, %v6299
        %v6332 = vpack.c.bf16 %v6302, %v6301
        %v6333 = vpack.c.bf16 %v6304, %v6303
        %v6334 = vpack.c.bf16 %v6306, %v6305
        %v6335 = vpack.c.bf16 %v6308, %v6307
        %v6336 = vpack.c.bf16 %v6310, %v6309
        %v6337 = vpack.c.bf16 %v6312, %v6311
        %v6338 = vpack.c.bf16 %v6314, %v6313
        %v6339 = vpack.c.bf16 %v6316, %v6315
        %v6340 = vpack.c.bf16 %v6318, %v6317
        %v6341 = vpack.c.bf16 %v6320, %v6319
        %v6342 = vpack.c.bf16 %v6322, %v6321
        %v6343 = vpack.c.bf16 %v6324, %v6323
        %v6344 = vpack.c.bf16 %v6326, %v6325
        %v6345 = vpack.c.bf16 %v6328, %v6327
        %v6346 = vpack.c.bf16 %v6330, %v6329
        %v6347 = vld [vmem:[%s7] sm:$0xf]
        %v6348 = vld [vmem:[%s7 + $0x4] sm:$0xf]
        %v6349 = vld [vmem:[%s7 + $0x8] sm:$0xf]
        %v6350 = vld [vmem:[%s7 + $0xc] sm:$0xf]
        %v6351 = vld [vmem:[%s7 + $0x10] sm:$0xf]
        %v6352 = vld [vmem:[%s7 + $0x14] sm:$0xf]
        %v6353 = vld [vmem:[%s7 + $0x18] sm:$0xf]
        %v6354 = vld [vmem:[%s7 + $0x1c] sm:$0xf]
        %v6355 = vld [vmem:[%s7 + $0x20] sm:$0xf]
        %v6356 = vld [vmem:[%s7 + $0x24] sm:$0xf]
        %v6357 = vld [vmem:[%s7 + $0x28] sm:$0xf]
        %v6358 = vld [vmem:[%s7 + $0x2c] sm:$0xf]
        %v6359 = vld [vmem:[%s7 + $0x30] sm:$0xf]
        %v6360 = vld [vmem:[%s7 + $0x34] sm:$0xf]
        %v6361 = vld [vmem:[%s7 + $0x38] sm:$0xf]
        %v6362 = vld [vmem:[%s7 + $0x3c] sm:$0xf]
        %v6379 = vunpack.c.l.b16 %v6347
        %v6380 = vunpack.c.l.b16 %v6348
        %v6381 = vunpack.c.l.b16 %v6349
        %v6382 = vunpack.c.l.b16 %v6350
        %v6383 = vunpack.c.l.b16 %v6351
        %v6384 = vunpack.c.l.b16 %v6352
        %v6385 = vunpack.c.l.b16 %v6353
        %v6386 = vunpack.c.l.b16 %v6354
        %v6387 = vunpack.c.l.b16 %v6355
        %v6388 = vunpack.c.l.b16 %v6356
        %v6389 = vunpack.c.l.b16 %v6357
        %v6390 = vunpack.c.l.b16 %v6358
        %v6391 = vunpack.c.l.b16 %v6359
        %v6392 = vunpack.c.l.b16 %v6360
        %v6393 = vunpack.c.l.b16 %v6361
        %v6394 = vunpack.c.l.b16 %v6362
        %v6395 = vpack.c.b16 %v6380, %v6379
        %v6396 = vpack.c.b16 %v6382, %v6381
        %v6397 = vpack.c.b16 %v6384, %v6383
        %v6398 = vpack.c.b16 %v6386, %v6385
        %v6399 = vpack.c.b16 %v6388, %v6387
        %v6400 = vpack.c.b16 %v6390, %v6389
        %v6401 = vpack.c.b16 %v6392, %v6391
        %v6402 = vpack.c.b16 %v6394, %v6393
        %6411 = vmatprep.subr.bf16.mxu0 0
        %6412 = vmatpush1.bf16.msra.mxu0 %v6395
        %6413 = vmatprep.subr.bf16.mxu0 0
        %6414 = vmatpush1.bf16.msra.mxu0 %v6396
        %6415 = vmatprep.subr.bf16.mxu0 0
        %6416 = vmatpush1.bf16.msra.mxu0 %v6397
        %6417 = vmatprep.subr.bf16.mxu0 0
        %6418 = vmatpush1.bf16.msra.mxu0 %v6398
        %6419 = vmatprep.subr.bf16.mxu0 0
        %6420 = vmatpush1.bf16.msra.mxu0 %v6399
        %6421 = vmatprep.subr.bf16.mxu0 0
        %6422 = vmatpush1.bf16.msra.mxu0 %v6400
        %6423 = vmatprep.subr.bf16.mxu0 0
        %6424 = vmatpush1.bf16.msra.mxu0 %v6401
        %6425 = vmatprep.subr.bf16.mxu0 0
        %6426 = vmatpush1.bf16.msra.mxu0 %v6402
        %6427 = vmatprep.subr.bf16.mxu0 0
        %6428 = vmatpush1.bf16.msra.mxu0 0
        %6429 = vmatprep.subr.bf16.mxu0 0
        %6430 = vmatpush1.bf16.msra.mxu0 0
        %6431 = vmatprep.subr.bf16.mxu0 0
        %6432 = vmatpush1.bf16.msra.mxu0 0
        %6433 = vmatprep.subr.bf16.mxu0 0
        %6434 = vmatpush1.bf16.msra.mxu0 0
        %6435 = vmatprep.subr.bf16.mxu0 0
        %6436 = vmatpush1.bf16.msra.mxu0 0
        %6437 = vmatprep.subr.bf16.mxu0 0
        %6438 = vmatpush1.bf16.msra.mxu0 0
        %6439 = vmatprep.subr.bf16.mxu0 0
        %6440 = vmatpush1.bf16.msra.mxu0 0
        %6441 = vmatprep.subr.bf16.mxu0 0
        %6442 = vmatpush1.bf16.msra.mxu0 0
        %6443 = vmatprep.mubr.bf16.mxu0 0
        %6444 = vmatmul.mubr.bf16.gmra.mrb[0].mxu0 %v6331
        %v6445 = vpop.f32.mrb[0].mxu0
        %v6446 = vadd.f32 0.0, %v6445
        %v6447 = vpop.f32.mrb[0].mxu0
        %v6448 = vpop.f32.mrb[0].mxu0
        %v6449 = vadd.f32 0.0, %v6448
        %v6450 = vpop.f32.mrb[0].mxu0
        %6451 = vmatprep.mubr.bf16.mxu0 0
        %6452 = vmatmul.mubr.bf16.gmra.mrb[0].mxu0 %v6332
        %v6453 = vpop.f32.mrb[0].mxu0
        %v6454 = vadd.f32 0.0, %v6453
        %v6455 = vpop.f32.mrb[0].mxu0
        %v6456 = vpop.f32.mrb[0].mxu0
        %v6457 = vadd.f32 0.0, %v6456
        %v6458 = vpop.f32.mrb[0].mxu0
        %6459 = vmatprep.mubr.bf16.mxu0 0
        %6460 = vmatmul.mubr.bf16.gmra.mrb[0].mxu0 %v6333
        %v6461 = vpop.f32.mrb[0].mxu0
        %v6462 = vadd.f32 0.0, %v6461
        %v6463 = vpop.f32.mrb[0].mxu0
        %v6464 = vpop.f32.mrb[0].mxu0
        %v6465 = vadd.f32 0.0, %v6464
        %v6466 = vpop.f32.mrb[0].mxu0
        %6467 = vmatprep.mubr.bf16.mxu0 0
        %6468 = vmatmul.mubr.bf16.gmra.mrb[0].mxu0 %v6334
        %v6469 = vpop.f32.mrb[0].mxu0
        %v6470 = vadd.f32 0.0, %v6469
        %v6471 = vpop.f32.mrb[0].mxu0
        %v6472 = vpop.f32.mrb[0].mxu0
        %v6473 = vadd.f32 0.0, %v6472
        %v6474 = vpop.f32.mrb[0].mxu0
        %6475 = vmatprep.mubr.bf16.mxu0 0
        %6476 = vmatmul.mubr.bf16.gmra.mrb[0].mxu0 %v6335
        %v6477 = vpop.f32.mrb[0].mxu0
        %v6478 = vadd.f32 0.0, %v6477
        %v6479 = vpop.f32.mrb[0].mxu0
        %v6480 = vpop.f32.mrb[0].mxu0
        %v6481 = vadd.f32 0.0, %v6480
        %v6482 = vpop.f32.mrb[0].mxu0
        %6483 = vmatprep.mubr.bf16.mxu0 0
        %6484 = vmatmul.mubr.bf16.gmra.mrb[0].mxu0 %v6336
        %v6485 = vpop.f32.mrb[0].mxu0
        %v6486 = vadd.f32 0.0, %v6485
        %v6487 = vpop.f32.mrb[0].mxu0
        %v6488 = vpop.f32.mrb[0].mxu0
        %v6489 = vadd.f32 0.0, %v6488
        %v6490 = vpop.f32.mrb[0].mxu0
        %6491 = vmatprep.mubr.bf16.mxu0 0
        %6492 = vmatmul.mubr.bf16.gmra.mrb[0].mxu0 %v6337
        %v6493 = vpop.f32.mrb[0].mxu0
        %v6494 = vadd.f32 0.0, %v6493
        %v6495 = vpop.f32.mrb[0].mxu0
        %v6496 = vpop.f32.mrb[0].mxu0
        %v6497 = vadd.f32 0.0, %v6496
        %v6498 = vpop.f32.mrb[0].mxu0
        %6499 = vmatprep.mubr.bf16.mxu0 0
        %6500 = vmatmul.mubr.bf16.gmra.mrb[0].mxu0 %v6338
        %v6501 = vpop.f32.mrb[0].mxu0
        %v6502 = vadd.f32 0.0, %v6501
        %v6503 = vpop.f32.mrb[0].mxu0
        %v6504 = vpop.f32.mrb[0].mxu0
        %v6505 = vadd.f32 0.0, %v6504
        %v6506 = vpop.f32.mrb[0].mxu0
        %6507 = vmatprep.mubr.bf16.mxu0 0
        %6508 = vmatmul.mubr.bf16.gmra.mrb[0].mxu0 %v6339
        %v6509 = vpop.f32.mrb[0].mxu0
        %v6510 = vadd.f32 0.0, %v6509
        %v6511 = vpop.f32.mrb[0].mxu0
        %v6512 = vpop.f32.mrb[0].mxu0
        %v6513 = vadd.f32 0.0, %v6512
        %v6514 = vpop.f32.mrb[0].mxu0
        %6515 = vmatprep.mubr.bf16.mxu0 0
        %6516 = vmatmul.mubr.bf16.gmra.mrb[0].mxu0 %v6340
        %v6517 = vpop.f32.mrb[0].mxu0
        %v6518 = vadd.f32 0.0, %v6517
        %v6519 = vpop.f32.mrb[0].mxu0
        %v6520 = vpop.f32.mrb[0].mxu0
        %v6521 = vadd.f32 0.0, %v6520
        %v6522 = vpop.f32.mrb[0].mxu0
        %6523 = vmatprep.mubr.bf16.mxu0 0
        %6524 = vmatmul.mubr.bf16.gmra.mrb[0].mxu0 %v6341
        %v6525 = vpop.f32.mrb[0].mxu0
        %v6526 = vadd.f32 0.0, %v6525
        %v6527 = vpop.f32.mrb[0].mxu0
        %v6528 = vpop.f32.mrb[0].mxu0
        %v6529 = vadd.f32 0.0, %v6528
        %v6530 = vpop.f32.mrb[0].mxu0
        %6531 = vmatprep.mubr.bf16.mxu0 0
        %6532 = vmatmul.mubr.bf16.gmra.mrb[0].mxu0 %v6342
        %v6533 = vpop.f32.mrb[0].mxu0
        %v6534 = vadd.f32 0.0, %v6533
        %v6535 = vpop.f32.mrb[0].mxu0
        %v6536 = vpop.f32.mrb[0].mxu0
        %v6537 = vadd.f32 0.0, %v6536
        %v6538 = vpop.f32.mrb[0].mxu0
        %6539 = vmatprep.mubr.bf16.mxu0 0
        %6540 = vmatmul.mubr.bf16.gmra.mrb[0].mxu0 %v6343
        %v6541 = vpop.f32.mrb[0].mxu0
        %v6542 = vadd.f32 0.0, %v6541
        %v6543 = vpop.f32.mrb[0].mxu0
        %v6544 = vpop.f32.mrb[0].mxu0
        %v6545 = vadd.f32 0.0, %v6544
        %v6546 = vpop.f32.mrb[0].mxu0
        %6547 = vmatprep.mubr.bf16.mxu0 0
        %6548 = vmatmul.mubr.bf16.gmra.mrb[0].mxu0 %v6344
        %v6549 = vpop.f32.mrb[0].mxu0
        %v6550 = vadd.f32 0.0, %v6549
        %v6551 = vpop.f32.mrb[0].mxu0
        %v6552 = vpop.f32.mrb[0].mxu0
        %v6553 = vadd.f32 0.0, %v6552
        %v6554 = vpop.f32.mrb[0].mxu0
        %6555 = vmatprep.mubr.bf16.mxu0 0
        %6556 = vmatmul.mubr.bf16.gmra.mrb[0].mxu0 %v6345
        %v6557 = vpop.f32.mrb[0].mxu0
        %v6558 = vadd.f32 0.0, %v6557
        %v6559 = vpop.f32.mrb[0].mxu0
        %v6560 = vpop.f32.mrb[0].mxu0
        %v6561 = vadd.f32 0.0, %v6560
        %v6562 = vpop.f32.mrb[0].mxu0
        %6563 = vmatprep.mubr.bf16.mxu0 0
        %6564 = vmatmul.mubr.bf16.gmra.mrb[0].mxu0 %v6346
        %v6565 = vpop.f32.mrb[0].mxu0
        %v6566 = vadd.f32 0.0, %v6565
        %v6567 = vpop.f32.mrb[0].mxu0
        %v6568 = vpop.f32.mrb[0].mxu0
        %v6569 = vadd.f32 0.0, %v6568
        %v6570 = vpop.f32.mrb[0].mxu0
        %6571 = vdwg.mxu0
        %v6572 = vld [vmem:[%s8] sm:$0x1]
        %v6574 = vlaneseq
        %v6575 = vshrl.u32 %v6574, 7
        %v6576 = vsub.s32 0, %v6575
        %v6577 = vrot.slane %v6572, %v6576
        %v6579 = vmul.f32 %v6446, %v6577
        %v6580 = vmul.f32 %v6449, %v6577
        %v6581 = vmul.f32 %v6454, %v6577
        %v6582 = vmul.f32 %v6457, %v6577
        %v6583 = vmul.f32 %v6462, %v6577
        %v6584 = vmul.f32 %v6465, %v6577
        %v6585 = vmul.f32 %v6470, %v6577
        %v6586 = vmul.f32 %v6473, %v6577
        %v6587 = vmul.f32 %v6478, %v6577
        %v6588 = vmul.f32 %v6481, %v6577
        %v6589 = vmul.f32 %v6486, %v6577
        %v6590 = vmul.f32 %v6489, %v6577
        %v6591 = vmul.f32 %v6494, %v6577
        %v6592 = vmul.f32 %v6497, %v6577
        %v6593 = vmul.f32 %v6502, %v6577
        %v6594 = vmul.f32 %v6505, %v6577
        %v6595 = vmul.f32 %v6510, %v6577
        %v6596 = vmul.f32 %v6513, %v6577
        %v6597 = vmul.f32 %v6518, %v6577
        %v6598 = vmul.f32 %v6521, %v6577
        %v6599 = vmul.f32 %v6526, %v6577
        %v6600 = vmul.f32 %v6529, %v6577
        %v6601 = vmul.f32 %v6534, %v6577
        %v6602 = vmul.f32 %v6537, %v6577
        %v6603 = vmul.f32 %v6542, %v6577
        %v6604 = vmul.f32 %v6545, %v6577
        %v6605 = vmul.f32 %v6550, %v6577
        %v6606 = vmul.f32 %v6553, %v6577
        %v6607 = vmul.f32 %v6558, %v6577
        %v6608 = vmul.f32 %v6561, %v6577
        %v6609 = vmul.f32 %v6566, %v6577
        %v6610 = vmul.f32 %v6569, %v6577
        %v6611 = vld [vmem:[%s9] sm:$0x1]
        %v6613 = vlaneseq
        %v6614 = vshrl.u32 %v6613, 7
        %v6615 = vsub.s32 0, %v6614
        %v6616 = vrot.slane %v6611, %v6615
        %v6618 = vadd.f32 %v6579, %v6616
        %v6619 = vadd.f32 %v6580, %v6616
        %v6620 = vadd.f32 %v6581, %v6616
        %v6621 = vadd.f32 %v6582, %v6616
        %v6622 = vadd.f32 %v6583, %v6616
        %v6623 = vadd.f32 %v6584, %v6616
        %v6624 = vadd.f32 %v6585, %v6616
        %v6625 = vadd.f32 %v6586, %v6616
        %v6626 = vadd.f32 %v6587, %v6616
        %v6627 = vadd.f32 %v6588, %v6616
        %v6628 = vadd.f32 %v6589, %v6616
        %v6629 = vadd.f32 %v6590, %v6616
        %v6630 = vadd.f32 %v6591, %v6616
        %v6631 = vadd.f32 %v6592, %v6616
        %v6632 = vadd.f32 %v6593, %v6616
        %v6633 = vadd.f32 %v6594, %v6616
        %v6634 = vadd.f32 %v6595, %v6616
        %v6635 = vadd.f32 %v6596, %v6616
        %v6636 = vadd.f32 %v6597, %v6616
        %v6637 = vadd.f32 %v6598, %v6616
        %v6638 = vadd.f32 %v6599, %v6616
        %v6639 = vadd.f32 %v6600, %v6616
        %v6640 = vadd.f32 %v6601, %v6616
        %v6641 = vadd.f32 %v6602, %v6616
        %v6642 = vadd.f32 %v6603, %v6616
        %v6643 = vadd.f32 %v6604, %v6616
        %v6644 = vadd.f32 %v6605, %v6616
        %v6645 = vadd.f32 %v6606, %v6616
        %v6646 = vadd.f32 %v6607, %v6616
        %v6647 = vadd.f32 %v6608, %v6616
        %v6648 = vadd.f32 %v6609, %v6616
        %v6649 = vadd.f32 %v6610, %v6616
        %v6650 = vunpack.c.l.bf16 %v359
        %v6651 = vunpack.c.l.bf16 %v360
        %v6652 = vunpack.c.l.bf16 %v361
        %v6653 = vunpack.c.l.bf16 %v362
        %v6654 = vunpack.c.l.bf16 %v363
        %v6655 = vunpack.c.l.bf16 %v364
        %v6656 = vunpack.c.l.bf16 %v365
        %v6657 = vunpack.c.l.bf16 %v366
        %v6658 = vunpack.c.l.bf16 %v367
        %v6659 = vunpack.c.l.bf16 %v368
        %v6660 = vunpack.c.l.bf16 %v369
        %v6661 = vunpack.c.l.bf16 %v370
        %v6662 = vunpack.c.l.bf16 %v371
        %v6663 = vunpack.c.l.bf16 %v372
        %v6664 = vunpack.c.l.bf16 %v373
        %v6665 = vunpack.c.l.bf16 %v374
        %v6666 = vunpack.c.l.bf16 %v375
        %v6667 = vunpack.c.l.bf16 %v376
        %v6668 = vunpack.c.l.bf16 %v377
        %v6669 = vunpack.c.l.bf16 %v378
        %v6670 = vunpack.c.l.bf16 %v379
        %v6671 = vunpack.c.l.bf16 %v380
        %v6672 = vunpack.c.l.bf16 %v381
        %v6673 = vunpack.c.l.bf16 %v382
        %v6674 = vunpack.c.l.bf16 %v383
        %v6675 = vunpack.c.l.bf16 %v384
        %v6676 = vunpack.c.l.bf16 %v385
        %v6677 = vunpack.c.l.bf16 %v386
        %v6678 = vunpack.c.l.bf16 %v387
        %v6679 = vunpack.c.l.bf16 %v388
        %v6680 = vunpack.c.l.bf16 %v389
        %v6681 = vunpack.c.l.bf16 %v390
        %v6682 = vadd.f32 %v6618, %v6650
        %v6683 = vadd.f32 %v6619, %v6651
        %v6684 = vadd.f32 %v6620, %v6652
        %v6685 = vadd.f32 %v6621, %v6653
        %v6686 = vadd.f32 %v6622, %v6654
        %v6687 = vadd.f32 %v6623, %v6655
        %v6688 = vadd.f32 %v6624, %v6656
        %v6689 = vadd.f32 %v6625, %v6657
        %v6690 = vadd.f32 %v6626, %v6658
        %v6691 = vadd.f32 %v6627, %v6659
        %v6692 = vadd.f32 %v6628, %v6660
        %v6693 = vadd.f32 %v6629, %v6661
        %v6694 = vadd.f32 %v6630, %v6662
        %v6695 = vadd.f32 %v6631, %v6663
        %v6696 = vadd.f32 %v6632, %v6664
        %v6697 = vadd.f32 %v6633, %v6665
        %v6698 = vadd.f32 %v6634, %v6666
        %v6699 = vadd.f32 %v6635, %v6667
        %v6700 = vadd.f32 %v6636, %v6668
        %v6701 = vadd.f32 %v6637, %v6669
        %v6702 = vadd.f32 %v6638, %v6670
        %v6703 = vadd.f32 %v6639, %v6671
        %v6704 = vadd.f32 %v6640, %v6672
        %v6705 = vadd.f32 %v6641, %v6673
        %v6706 = vadd.f32 %v6642, %v6674
        %v6707 = vadd.f32 %v6643, %v6675
        %v6708 = vadd.f32 %v6644, %v6676
        %v6709 = vadd.f32 %v6645, %v6677
        %v6710 = vadd.f32 %v6646, %v6678
        %v6711 = vadd.f32 %v6647, %v6679
        %v6712 = vadd.f32 %v6648, %v6680
        %v6713 = vadd.f32 %v6649, %v6681
        %v6714 = vmax.f32 %v6682, 0.0
        %v6715 = vmax.f32 %v6683, 0.0
        %v6716 = vmax.f32 %v6684, 0.0
        %v6717 = vmax.f32 %v6685, 0.0
        %v6718 = vmax.f32 %v6686, 0.0
        %v6719 = vmax.f32 %v6687, 0.0
        %v6720 = vmax.f32 %v6688, 0.0
        %v6721 = vmax.f32 %v6689, 0.0
        %v6722 = vmax.f32 %v6690, 0.0
        %v6723 = vmax.f32 %v6691, 0.0
        %v6724 = vmax.f32 %v6692, 0.0
        %v6725 = vmax.f32 %v6693, 0.0
        %v6726 = vmax.f32 %v6694, 0.0
        %v6727 = vmax.f32 %v6695, 0.0
        %v6728 = vmax.f32 %v6696, 0.0
        %v6729 = vmax.f32 %v6697, 0.0
        %v6730 = vmax.f32 %v6698, 0.0
        %v6731 = vmax.f32 %v6699, 0.0
        %v6732 = vmax.f32 %v6700, 0.0
        %v6733 = vmax.f32 %v6701, 0.0
        %v6734 = vmax.f32 %v6702, 0.0
        %v6735 = vmax.f32 %v6703, 0.0
        %v6736 = vmax.f32 %v6704, 0.0
        %v6737 = vmax.f32 %v6705, 0.0
        %v6738 = vmax.f32 %v6706, 0.0
        %v6739 = vmax.f32 %v6707, 0.0
        %v6740 = vmax.f32 %v6708, 0.0
        %v6741 = vmax.f32 %v6709, 0.0
        %v6742 = vmax.f32 %v6710, 0.0
        %v6743 = vmax.f32 %v6711, 0.0
        %v6744 = vmax.f32 %v6712, 0.0
        %v6745 = vmax.f32 %v6713, 0.0
        %v6746 = vpack.c.bf16 %v6715, %v6714
        %v6747 = vpack.c.bf16 %v6717, %v6716
        %v6748 = vpack.c.bf16 %v6719, %v6718
        %v6749 = vpack.c.bf16 %v6721, %v6720
        %v6750 = vpack.c.bf16 %v6723, %v6722
        %v6751 = vpack.c.bf16 %v6725, %v6724
        %v6752 = vpack.c.bf16 %v6727, %v6726
        %v6753 = vpack.c.bf16 %v6729, %v6728
        %v6754 = vpack.c.bf16 %v6731, %v6730
        %v6755 = vpack.c.bf16 %v6733, %v6732
        %v6756 = vpack.c.bf16 %v6735, %v6734
        %v6757 = vpack.c.bf16 %v6737, %v6736
        %v6758 = vpack.c.bf16 %v6739, %v6738
        %v6759 = vpack.c.bf16 %v6741, %v6740
        %v6760 = vpack.c.bf16 %v6743, %v6742
        %v6761 = vpack.c.bf16 %v6745, %v6744
        %v6778 = vunpack.c.l.b16 %v6746
        %v6779 = vunpack.c.h.b16 %v6746
        %v6780 = vunpack.c.l.b16 %v6747
        %v6781 = vunpack.c.h.b16 %v6747
        %v6782 = vunpack.c.l.b16 %v6748
        %v6783 = vunpack.c.h.b16 %v6748
        %v6784 = vunpack.c.l.b16 %v6749
        %v6785 = vunpack.c.h.b16 %v6749
        %v6786 = vunpack.c.l.b16 %v6750
        %v6787 = vunpack.c.h.b16 %v6750
        %v6788 = vunpack.c.l.b16 %v6751
        %v6789 = vunpack.c.h.b16 %v6751
        %v6790 = vunpack.c.l.b16 %v6752
        %v6791 = vunpack.c.h.b16 %v6752
        %v6792 = vunpack.c.l.b16 %v6753
        %v6793 = vunpack.c.h.b16 %v6753
        %v6794 = vunpack.c.l.b16 %v6754
        %v6795 = vunpack.c.h.b16 %v6754
        %v6796 = vunpack.c.l.b16 %v6755
        %v6797 = vunpack.c.h.b16 %v6755
        %v6798 = vunpack.c.l.b16 %v6756
        %v6799 = vunpack.c.h.b16 %v6756
        %v6800 = vunpack.c.l.b16 %v6757
        %v6801 = vunpack.c.h.b16 %v6757
        %v6802 = vunpack.c.l.b16 %v6758
        %v6803 = vunpack.c.h.b16 %v6758
        %v6804 = vunpack.c.l.b16 %v6759
        %v6805 = vunpack.c.h.b16 %v6759
        %v6806 = vunpack.c.l.b16 %v6760
        %v6807 = vunpack.c.h.b16 %v6760
        %v6808 = vunpack.c.l.b16 %v6761
        %v6809 = vunpack.c.h.b16 %v6761
        %v6810 = vpack.c.b16 %v6778, %v6778
        %v6811 = vpack.c.b16 %v6779, %v6779
        %v6812 = vpack.c.b16 %v6780, %v6780
        %v6813 = vpack.c.b16 %v6781, %v6781
        %v6814 = vpack.c.b16 %v6782, %v6782
        %v6815 = vpack.c.b16 %v6783, %v6783
        %v6816 = vpack.c.b16 %v6784, %v6784
        %v6817 = vpack.c.b16 %v6785, %v6785
        %v6818 = vpack.c.b16 %v6786, %v6786
        %v6819 = vpack.c.b16 %v6787, %v6787
        %v6820 = vpack.c.b16 %v6788, %v6788
        %v6821 = vpack.c.b16 %v6789, %v6789
        %v6822 = vpack.c.b16 %v6790, %v6790
        %v6823 = vpack.c.b16 %v6791, %v6791
        %v6824 = vpack.c.b16 %v6792, %v6792
        %v6825 = vpack.c.b16 %v6793, %v6793
        %v6826 = vpack.c.b16 %v6794, %v6794
        %v6827 = vpack.c.b16 %v6795, %v6795
        %v6828 = vpack.c.b16 %v6796, %v6796
        %v6829 = vpack.c.b16 %v6797, %v6797
        %v6830 = vpack.c.b16 %v6798, %v6798
        %v6831 = vpack.c.b16 %v6799, %v6799
        %v6832 = vpack.c.b16 %v6800, %v6800
        %v6833 = vpack.c.b16 %v6801, %v6801
        %v6834 = vpack.c.b16 %v6802, %v6802
        %v6835 = vpack.c.b16 %v6803, %v6803
        %v6836 = vpack.c.b16 %v6804, %v6804
        %v6837 = vpack.c.b16 %v6805, %v6805
        %v6838 = vpack.c.b16 %v6806, %v6806
        %v6839 = vpack.c.b16 %v6807, %v6807
        %v6840 = vpack.c.b16 %v6808, %v6808
        %v6841 = vpack.c.b16 %v6809, %v6809
        %6874 = vst [vmem:[%s352] sm:$0xf] %v6810
        %6875 = vst [vmem:[%s352 + $0x4] sm:$0xf] %v6811
        %6876 = vst [vmem:[%s352 + $0x8] sm:$0xf] %v6812
        %6877 = vst [vmem:[%s352 + $0xc] sm:$0xf] %v6813
        %6878 = vst [vmem:[%s352 + $0x10] sm:$0xf] %v6814
        %6879 = vst [vmem:[%s352 + $0x14] sm:$0xf] %v6815
        %6880 = vst [vmem:[%s352 + $0x18] sm:$0xf] %v6816
        %6881 = vst [vmem:[%s352 + $0x1c] sm:$0xf] %v6817
        %6882 = vst [vmem:[%s352 + $0x20] sm:$0xf] %v6818
        %6883 = vst [vmem:[%s352 + $0x24] sm:$0xf] %v6819
        %6884 = vst [vmem:[%s352 + $0x28] sm:$0xf] %v6820
        %6885 = vst [vmem:[%s352 + $0x2c] sm:$0xf] %v6821
        %6886 = vst [vmem:[%s352 + $0x30] sm:$0xf] %v6822
        %6887 = vst [vmem:[%s352 + $0x34] sm:$0xf] %v6823
        %6888 = vst [vmem:[%s352 + $0x38] sm:$0xf] %v6824
        %6889 = vst [vmem:[%s352 + $0x3c] sm:$0xf] %v6825
        %6890 = vst [vmem:[%s352 + $0x40] sm:$0xf] %v6826
        %6891 = vst [vmem:[%s352 + $0x44] sm:$0xf] %v6827
        %6892 = vst [vmem:[%s352 + $0x48] sm:$0xf] %v6828
        %6893 = vst [vmem:[%s352 + $0x4c] sm:$0xf] %v6829
        %6894 = vst [vmem:[%s352 + $0x50] sm:$0xf] %v6830
        %6895 = vst [vmem:[%s352 + $0x54] sm:$0xf] %v6831
        %6896 = vst [vmem:[%s352 + $0x58] sm:$0xf] %v6832
        %6897 = vst [vmem:[%s352 + $0x5c] sm:$0xf] %v6833
        %6898 = vst [vmem:[%s352 + $0x60] sm:$0xf] %v6834
        %6899 = vst [vmem:[%s352 + $0x64] sm:$0xf] %v6835
        %6900 = vst [vmem:[%s352 + $0x68] sm:$0xf] %v6836
        %6901 = vst [vmem:[%s352 + $0x6c] sm:$0xf] %v6837
        %6902 = vst [vmem:[%s352 + $0x70] sm:$0xf] %v6838
        %6903 = vst [vmem:[%s352 + $0x74] sm:$0xf] %v6839
        %6904 = vst [vmem:[%s352 + $0x78] sm:$0xf] %v6840
        %6905 = vst [vmem:[%s352 + $0x7c] sm:$0xf] %v6841
        %s6906 = sand.u32 %s247, 1
        %s6907 = scalar_lea.sflag [#allocation4], %s6906
        %s6908 = sand.u32 %s247, 1
        %s6909 = smul.addr %s6908, 128
        %s6910 = scalar_lea.vmem [#allocation3], %s6909
        // Predicated region
        $region61: #{bottleneck_forward_nhwc.1} parent=59 // pred_check
          %p6911 = pneg %p257
        $region62: #{bottleneck_forward_nhwc.1} parent=59 // pred_check_branch
          %6913 = sbr.rel (%p6911) target = $region64
        $region63: #{bottleneck_forward_nhwc.1} parent=59 // pred_region
          %s6915 = ssub.s32 2048, 2048
          %6916 = vsyncadd %s6907, %s6915
          %s6917 = smul.addr %s24, 32
          %s6918 = smul.addr %s6917, 64
          %s6919 = scalar_lea.hbm %s10, %s6918
          %s6920 = sshll.u32 %s6910, 4
          %s6921 = int_to_ptr.vmem [resolvable:$true] %s6920
          %6926 = dma.vmem_to_hbm [thread:$0]  %s6921, 2048, %s6919, %s6907, 64, 64, 4
        $region64: #{bottleneck_forward_nhwc.1} parent=59 // pred_fallthru
          _
      $region60: #{bottleneck_forward_nhwc.1} parent=5 // pred_fallthru
        _
      %p6927 = scmp.le.s32.totalorder 2, %s19
      // Predicated region
      $region65: #{bottleneck_forward_nhwc.1} parent=5 // pred_check
        %p6928 = pneg %p6927
      $region66: #{bottleneck_forward_nhwc.1} parent=5 // pred_check_branch
        %6930 = sbr.rel (%p6928) target = $region68
      $region67: #{bottleneck_forward_nhwc.1} parent=5 // pred_region
        %s6931 = ssub.s32 %s19, 2
        // Predicated region
        $region69: #{bottleneck_forward_nhwc.1} parent=67 // pred_check
          %p6932 = pneg %p263
        $region70: #{bottleneck_forward_nhwc.1} parent=67 // pred_check_branch
          %6934 = sbr.rel (%p6932) target = $region72
        $region71: #{bottleneck_forward_nhwc.1} parent=67 // pred_region
          %s6935 = sand.u32 %s248, 1
          %s6936 = scalar_lea.sflag [#allocation4], %s6935
          %s6937 = sand.u32 %s248, 1
          %s6938 = smul.addr %s6937, 128
          %s6939 = scalar_lea.vmem [#allocation3], %s6938
          %6940 = dma.done %s6936, 2048
        $region72: #{bottleneck_forward_nhwc.1} parent=67 // pred_fallthru
          _
      $region68: #{bottleneck_forward_nhwc.1} parent=5 // pred_fallthru
        _
    $region6: #{bottleneck_forward_nhwc.1} parent=1 // loop_footer
      %s23 = sadd.s32 1, %s19
    $region7: #{bottleneck_forward_nhwc.1} parent=1 // loop_footer_branch
      %18 = sbr.rel target = $region3
    $region8: #{bottleneck_forward_nhwc.1} parent=1 // loop_exit
      _
    %6941 = vsyncpa [#allocation4], 1
    %s6942 = scalar_lea.sflag [#allocation4], 1
    %6943 = vsyncpa %s6942, 1

</llo_original>
